<compile_context>
chip_gen: v7x
topology: tpu7x:2x2x1
jax: 0.10.0
libtpu: 0.0.40
codegen_flags: <defaults>
</compile_context>

<pallas_src>
import jax
import jax.numpy as jnp
from jax.experimental import pallas as pl
from jax.experimental.pallas import tpu as pltpu

NEG_SLOPE = 0.01            # F.leaky_relu default negative_slope
TEMPERATURE = 0.6           # torch_explain EntropyLinear default temperature
LANE = 128                  # TPU lane width: feature/class dims padded to this
TILE_M = 128                # A_hat row tile
TILE_K = 128                # A_hat col tile (raise toward 512 for large graphs -> ~85% HBM roofline)
BIG_NEG = -1e30             # safe "-inf" (avoids inf-inf NaNs in online reductions)
VMEM_LIMIT = 32 * 1024 * 1024   # fits default scoped-VMEM budgets on v5e/v6e/v7x


def _round_up(v, m):
    return ((v + m - 1) // m) * m


def _pad_to(x, shape):
    return jnp.pad(x, [(0, t - s) for s, t in zip(x.shape, shape)])


# ---------------------------------------------------------------------------
# Kernel 1: XW0 = X @ W0   (row-tiled, bf16 operands, fp32 accumulate)
# ---------------------------------------------------------------------------
def _xw_kernel(x_ref, w_ref, o_ref):
    o_ref[...] = jnp.dot(x_ref[...], w_ref[...],
                         preferred_element_type=jnp.float32).astype(o_ref.dtype)


def xw_op(x, w):
    npad, fpad = x.shape
    dpad = w.shape[1]
    return pl.pallas_call(
        _xw_kernel,
        out_shape=jax.ShapeDtypeStruct((npad, dpad), jnp.bfloat16),
        grid_spec=pltpu.PrefetchScalarGridSpec(
            num_scalar_prefetch=0,
            grid=(npad // TILE_M,),
            in_specs=[pl.BlockSpec((TILE_M, fpad), lambda i: (i, 0)),
                      pl.BlockSpec((fpad, dpad), lambda i: (0, 0))],
            out_specs=pl.BlockSpec((TILE_M, dpad), lambda i: (i, 0))),
        compiler_params=pltpu.CompilerParams(
            dimension_semantics=("parallel",),
            vmem_limit_bytes=VMEM_LIMIT),
    )(x, w)


# ---------------------------------------------------------------------------
# Kernel 2: one GCNConv layer, fused with next layer's feature transform
#   out = leaky_relu(A_hat @ XW + b) @ W_next
#   grid = (row tiles, col tiles); fp32 accumulator resident across K axis
# ---------------------------------------------------------------------------
def _agg_next_kernel(a_ref, xw_ref, b_ref, wn_ref, o_ref, acc_ref):
    k = pl.program_id(1)

    @pl.when(k == 0)
    def _init():
        acc_ref[...] = jnp.zeros_like(acc_ref)

    acc_ref[...] += jnp.dot(a_ref[...], xw_ref[...],
                            preferred_element_type=jnp.float32)

    @pl.when(k == pl.num_programs(1) - 1)
    def _fin():
        h = acc_ref[...] + b_ref[...]
        h = jnp.where(h >= 0, h, NEG_SLOPE * h)
        o_ref[...] = jnp.dot(h.astype(jnp.bfloat16), wn_ref[...],
                             preferred_element_type=jnp.float32
                             ).astype(o_ref.dtype)


def agg_next_op(a_hat, xw, b, w_next):
    npad = a_hat.shape[0]
    dpad = xw.shape[1]
    dnext = w_next.shape[1]
    return pl.pallas_call(
        _agg_next_kernel,
        out_shape=jax.ShapeDtypeStruct((npad, dnext), jnp.bfloat16),
        grid_spec=pltpu.PrefetchScalarGridSpec(
            num_scalar_prefetch=0,
            grid=(npad // TILE_M, npad // TILE_K),
            in_specs=[pl.BlockSpec((TILE_M, TILE_K), lambda i, k: (i, k)),
                      pl.BlockSpec((TILE_K, dpad), lambda i, k: (k, 0)),
                      pl.BlockSpec((1, dpad), lambda i, k: (0, 0)),
                      pl.BlockSpec((dpad, dnext), lambda i, k: (0, 0))],
            out_specs=pl.BlockSpec((TILE_M, dnext), lambda i, k: (i, 0)),
            scratch_shapes=[pltpu.VMEM((TILE_M, dpad), jnp.float32)]),
        compiler_params=pltpu.CompilerParams(
            dimension_semantics=("parallel", "arbitrary"),
            vmem_limit_bytes=VMEM_LIMIT),
    )(a_hat, xw, b, w_next)


# ---------------------------------------------------------------------------
# Kernel 3: last GCNConv layer fused with "concepts" epilogue
#   h = leaky_relu(A_hat @ XW + b);  concepts = softmax(h,-1)/max(softmax(h,-1),-1)
#   (softmax is masked to the real `dim` feature columns of the padded slab)
# ---------------------------------------------------------------------------
def _make_agg_concepts_kernel(dim):
    def kernel(a_ref, xw_ref, b_ref, o_ref, acc_ref):
        k = pl.program_id(1)

        @pl.when(k == 0)
        def _init():
            acc_ref[...] = jnp.zeros_like(acc_ref)

        acc_ref[...] += jnp.dot(a_ref[...], xw_ref[...],
                                preferred_element_type=jnp.float32)

        @pl.when(k == pl.num_programs(1) - 1)
        def _fin():
            h = acc_ref[...] + b_ref[...]
            h = jnp.where(h >= 0, h, NEG_SLOPE * h)
            col = jax.lax.broadcasted_iota(jnp.int32, h.shape, 1)
            valid = col < dim
            hm = jnp.where(valid, h, BIG_NEG)
            m = jnp.max(hm, axis=-1, keepdims=True)
            e = jnp.where(valid, jnp.exp(hm - m), 0.0)
            sm = e / jnp.sum(e, axis=-1, keepdims=True)
            o_ref[...] = sm / jnp.max(sm, axis=-1, keepdims=True)
    return kernel


def agg_concepts_op(a_hat, xw, b, dim):
    npad = a_hat.shape[0]
    dpad = xw.shape[1]
    return pl.pallas_call(
        _make_agg_concepts_kernel(dim),
        out_shape=jax.ShapeDtypeStruct((npad, dpad), jnp.float32),
        grid_spec=pltpu.PrefetchScalarGridSpec(
            num_scalar_prefetch=0,
            grid=(npad // TILE_M, npad // TILE_K),
            in_specs=[pl.BlockSpec((TILE_M, TILE_K), lambda i, k: (i, k)),
                      pl.BlockSpec((TILE_K, dpad), lambda i, k: (k, 0)),
                      pl.BlockSpec((1, dpad), lambda i, k: (0, 0))],
            out_specs=pl.BlockSpec((TILE_M, dpad), lambda i, k: (i, 0)),
            scratch_shapes=[pltpu.VMEM((TILE_M, dpad), jnp.float32)]),
        compiler_params=pltpu.CompilerParams(
            dimension_semantics=("parallel", "arbitrary"),
            vmem_limit_bytes=VMEM_LIMIT),
    )(a_hat, xw, b)


# ---------------------------------------------------------------------------
# Kernel 4 (lens pass 1): EntropyLinear logits + online node-axis (axis=0)
# max / sum-exp reduction.  eff_w (alpha-weighted weights) computed once @ i==0.
# ---------------------------------------------------------------------------
def _make_lens_logits_kernel(dim, n_real):
    def kernel(c_ref, w_ref, b_ref, logits_ref, lse_ref, effw_ref, m_ref, l_ref):
        i = pl.program_id(0)
        tile_m = c_ref.shape[0]

        @pl.when(i == 0)
        def _init():
            w = w_ref[...]                                           # (CPAD, DPAD)
            col = jax.lax.broadcasted_iota(jnp.int32, w.shape, 1)
            valid = col < dim
            gamma = jnp.where(valid, jnp.abs(w) / TEMPERATURE, BIG_NEG)
            gm = jnp.max(gamma, axis=1, keepdims=True)
            ea = jnp.where(valid, jnp.exp(gamma - gm), 0.0)
            alpha = ea / jnp.sum(ea, axis=1, keepdims=True)
            alpha_norm = alpha / jnp.max(alpha, axis=1, keepdims=True)
            effw_ref[...] = alpha_norm * w
            m_ref[...] = jnp.full_like(m_ref, BIG_NEG)
            l_ref[...] = jnp.zeros_like(l_ref)

        # logits[n, c] = sum_d concepts[n, d] * eff_w[c, d] + b[c]
        logits = jax.lax.dot_general(
            c_ref[...], effw_ref[...], (((1,), (1,)), ((), ())),
            preferred_element_type=jnp.float32) + b_ref[...]
        # mask rows beyond the real node count so they don't pollute the
        # node-axis softmax
        row = i * tile_m + jax.lax.broadcasted_iota(jnp.int32, logits.shape, 0)
        logits = jnp.where(row < n_real, logits, BIG_NEG)
        logits_ref[...] = logits

        # online max / sum-exp over the node axis (per class column)
        tile_max = jnp.max(logits, axis=0, keepdims=True)
        m_new = jnp.maximum(m_ref[...], tile_max)
        l_ref[...] = (l_ref[...] * jnp.exp(m_ref[...] - m_new)
                      + jnp.sum(jnp.exp(logits - m_new), axis=0, keepdims=True))
        m_ref[...] = m_new

        @pl.when(i == pl.num_programs(0) - 1)
        def _fin():
            lse_ref[...] = m_ref[...] + jnp.log(l_ref[...])
    return kernel


def lens_logits_op(concepts, w, b, dim, n_real):
    npad, dpad = concepts.shape
    cpad = w.shape[0]
    return pl.pallas_call(
        _make_lens_logits_kernel(dim, n_real),
        out_shape=(jax.ShapeDtypeStruct((npad, cpad), jnp.float32),
                   jax.ShapeDtypeStruct((1, cpad), jnp.float32)),
        grid_spec=pltpu.PrefetchScalarGridSpec(
            num_scalar_prefetch=0,
            grid=(npad // TILE_M,),
            in_specs=[pl.BlockSpec((TILE_M, dpad), lambda i: (i, 0)),
                      pl.BlockSpec((cpad, dpad), lambda i: (0, 0)),
                      pl.BlockSpec((1, cpad), lambda i: (0, 0))],
            out_specs=(pl.BlockSpec((TILE_M, cpad), lambda i: (i, 0)),
                       pl.BlockSpec((1, cpad), lambda i: (0, 0))),
            scratch_shapes=[pltpu.VMEM((cpad, dpad), jnp.float32),
                            pltpu.VMEM((1, cpad), jnp.float32),
                            pltpu.VMEM((1, cpad), jnp.float32)]),
        compiler_params=pltpu.CompilerParams(
            dimension_semantics=("arbitrary",),      # sequential running reduction
            vmem_limit_bytes=VMEM_LIMIT),
    )(concepts, w, b)


# ---------------------------------------------------------------------------
# Kernel 5 (lens pass 2): log_probs = logits - logsumexp_over_nodes
# ---------------------------------------------------------------------------
def _lens_norm_kernel(logits_ref, lse_ref, o_ref):
    o_ref[...] = logits_ref[...] - lse_ref[...]


def lens_norm_op(logits, lse):
    npad, cpad = logits.shape
    return pl.pallas_call(
        _lens_norm_kernel,
        out_shape=jax.ShapeDtypeStruct((npad, cpad), jnp.float32),
        grid_spec=pltpu.PrefetchScalarGridSpec(
            num_scalar_prefetch=0,
            grid=(npad // TILE_M,),
            in_specs=[pl.BlockSpec((TILE_M, cpad), lambda i: (i, 0)),
                      pl.BlockSpec((1, cpad), lambda i: (0, 0))],
            out_specs=pl.BlockSpec((TILE_M, cpad), lambda i: (i, 0))),
        compiler_params=pltpu.CompilerParams(
            dimension_semantics=("parallel",),
            vmem_limit_bytes=VMEM_LIMIT),
    )(logits, lse)


# ---------------------------------------------------------------------------
# Glue (plain JAX): normalized adjacency, params, forward pass
# ---------------------------------------------------------------------------
def build_norm_adj(edge_index, num_nodes):
    # edge_index: (2, E) int32, row 0 = source, row 1 = target (PyG convention)
    src, dst = edge_index[0], edge_index[1]
    a = jnp.zeros((num_nodes, num_nodes), jnp.float32).at[dst, src].add(1.0)
    a = a + jnp.eye(num_nodes, dtype=jnp.float32)            # add self-loops
    deg = jnp.sum(a, axis=1)
    dinv = 1.0 / jnp.sqrt(deg)
    return a * dinv[:, None] * dinv[None, :]


def init_params(key, num_features, dim, num_classes):
    keys = jax.random.split(key, 6)

    def glorot(k, fan_in, fan_out):
        lim = jnp.sqrt(6.0 / (fan_in + fan_out))
        return jax.random.uniform(k, (fan_in, fan_out), jnp.float32, -lim, lim)

    conv_dims = [(num_features, dim), (dim, dim), (dim, dim), (dim, dim)]
    convs = [(glorot(k, fi, fo), jnp.zeros((1, fo), jnp.float32))
             for k, (fi, fo) in zip(keys[:4], conv_dims)]
    lens_w = jax.random.normal(keys[4], (num_classes, dim), jnp.float32) * 0.1
    lens_b = jax.random.normal(keys[5], (1, num_classes), jnp.float32) * 0.1
    return {"convs": convs, "lens_w": lens_w, "lens_b": lens_b}


def gcn_forward(params, x, edge_index):
    n, f = x.shape
    dim = params["convs"][0][0].shape[1]
    num_classes = params["lens_w"].shape[0]

    npad = _round_up(n, max(TILE_M, TILE_K))
    fpad = _round_up(f, LANE)
    dpad = _round_up(dim, LANE)
    cpad = _round_up(num_classes, LANE)

    # Dense symmetric-normalized adjacency, streamed to kernels in bf16.
    # TODO(synk): for truly sparse graphs, replace this dense O(N^2) A_hat with a
    # CSR/block-sparse gather driven by PrefetchScalarGridSpec (skip all-zero tiles).
    a_hat = _pad_to(build_norm_adj(edge_index, n), (npad, npad)).astype(jnp.bfloat16)

    xp = _pad_to(x, (npad, fpad)).astype(jnp.bfloat16)
    in_dims = [fpad, dpad, dpad, dpad]
    ws, bs = [], []
    for (w, b), ip in zip(params["convs"], in_dims):
        ws.append(_pad_to(w, (ip, dpad)).astype(jnp.bfloat16))
        bs.append(_pad_to(b, (1, dpad)).astype(jnp.float32))
    lw = _pad_to(params["lens_w"], (cpad, dpad)).astype(jnp.float32)
    lb = _pad_to(params["lens_b"], (1, cpad)).astype(jnp.float32)

    xw = xw_op(xp, ws[0])                                  # X @ W0
    for l in range(3):                                     # conv0..conv2 (+ next XW fused)
        xw = agg_next_op(a_hat, xw, bs[l], ws[l + 1])
    concepts_p = agg_concepts_op(a_hat, xw, bs[3], dim)    # conv3 + concepts epilogue
    logits, lse = lens_logits_op(concepts_p, lw, lb, dim, n)
    log_probs_p = lens_norm_op(logits, lse)

    return concepts_p[:n, :dim], log_probs_p[:n, :num_classes]


# Precision-matched plain-JAX reference (same bf16 rounding points as the kernels).
def reference_forward(params, x, edge_index):
    n = x.shape[0]
    rnd = lambda t: t.astype(jnp.bfloat16).astype(jnp.float32)
    a = rnd(build_norm_adj(edge_index, n))
    xw = rnd(rnd(x) @ rnd(params["convs"][0][0]))
    h = None
    for l in range(4):
        _, b = params["convs"][l]
        h = a @ xw + b
        h = jnp.where(h >= 0, h, NEG_SLOPE * h)
        if l < 3:
            xw = rnd(rnd(h) @ rnd(params["convs"][l + 1][0]))
    sm = jax.nn.softmax(h, axis=-1)
    concepts = sm / jnp.max(sm, axis=-1, keepdims=True)
    w, b = params["lens_w"], params["lens_b"]
    alpha = jax.nn.softmax(jnp.abs(w) / TEMPERATURE, axis=1)
    alpha_norm = alpha / jnp.max(alpha, axis=1, keepdims=True)
    logits = concepts @ (alpha_norm * w).T + b
    log_probs = jax.nn.log_softmax(logits, axis=0)
    return concepts, log_probs


if __name__ == "__main__":
    N, NUM_FEATURES, DIM, NUM_CLASSES = 200, 8, 32, 4

    key = jax.random.PRNGKey(0)
    k_x, k_p = jax.random.split(key)
    x = jax.random.normal(k_x, (N, NUM_FEATURES), jnp.float32)

    # simple undirected ring graph: edges i<->(i+1) mod N
    idx = jnp.arange(N, dtype=jnp.int32)
    nxt = (idx + 1) % N
    edge_index = jnp.stack([jnp.concatenate([idx, nxt]),
                            jnp.concatenate([nxt, idx])], axis=0)

    params = init_params(k_p, NUM_FEATURES, DIM, NUM_CLASSES)

    concepts, log_probs = jax.block_until_ready(
        jax.jit(gcn_forward)(params, x, edge_index))

    assert concepts.shape == (N, DIM)
    assert log_probs.shape == (N, NUM_CLASSES)
    assert bool(jnp.all(jnp.isfinite(concepts)))
    assert bool(jnp.all(jnp.isfinite(log_probs)))

    # node-axis softmax must normalize per class: logsumexp over nodes ~ 0
    m = jnp.max(log_probs, axis=0)
    lse_check = m + jnp.log(jnp.sum(jnp.exp(log_probs - m), axis=0))
    assert bool(jnp.all(jnp.abs(lse_check) < 1e-2))

    # compare against precision-matched plain-JAX reference
    ref_c, ref_lp = reference_forward(params, x, edge_index)
    assert bool(jnp.allclose(concepts, ref_c, atol=0.1, rtol=0.1))
    assert bool(jnp.allclose(log_probs, ref_lp, atol=0.1, rtol=0.1))

    print("KERNEL_OK")
</pallas_src>

<mosaic_0001>
module attributes {stable_mosaic.version = 11 : i64} {
  func.func private @main(%arg0: i32) attributes {dimension_semantics = [#tpu.dimension_semantics<core_parallel>], iteration_bounds = array<i64: 2>, tpu.core_type = #tpu.core_type<sc_scalar_subcore>, window_params = []} {
    return
  }
}

module attributes {stable_mosaic.version = 11 : i64} {
  func.func private @main(%arg0: i32) attributes {dimension_semantics = [#tpu.dimension_semantics<core_parallel>], iteration_bounds = array<i64: 2>, tpu.core_type = #tpu.core_type<sc_scalar_subcore>, window_params = []} {
    return
  }
}

module attributes {stable_mosaic.version = 11 : i64} {
  func.func @_xw_kernel(%arg0: i32, %arg1: memref<128x128xbf16, #tpu.memory_space<vmem>>, %arg2: memref<128x128xbf16, #tpu.memory_space<vmem>>, %arg3: memref<128x128xbf16, #tpu.memory_space<vmem>>) attributes {dimension_semantics = [#tpu.dimension_semantics<parallel>], iteration_bounds = array<i64: 2>, scalar_prefetch = 0 : i64, scratch_operands = 0 : i64, tpu.core_type = #tpu.core_type<tc>, window_params = [{transform_indices = @transform_0, window_bounds = array<i64: 128, 128>}, {pipeline_mode = #tpu.pipeline_mode<synchronous>, transform_indices = @transform_1, window_bounds = array<i64: 128, 128>}, {transform_indices = @transform_2, window_bounds = array<i64: 128, 128>}]} {
    %c0 = arith.constant 0 : index
    %c0_0 = arith.constant 0 : index
    %0 = vector.load %arg1[%c0, %c0_0] : memref<128x128xbf16, #tpu.memory_space<vmem>>, vector<128x128xbf16>
    %c0_1 = arith.constant 0 : index
    %c0_2 = arith.constant 0 : index
    %1 = vector.load %arg2[%c0_1, %c0_2] : memref<128x128xbf16, #tpu.memory_space<vmem>>, vector<128x128xbf16>
    %cst = arith.constant dense<0.000000e+00> : vector<128x128xf32>
    %2 = tpu.matmul %0, %1, %cst {dimension_numbers = #tpu.dot_dimension_numbers<[1], [0], [0], [1], [0, 0, 1, 1], [], []>} : vector<128x128xbf16>, vector<128x128xbf16>, vector<128x128xf32> -> vector<128x128xf32>
    %3 = arith.truncf %2 : vector<128x128xf32> to vector<128x128xbf16>
    %c0_3 = arith.constant 0 : index
    %c0_4 = arith.constant 0 : index
    %4 = vector.load %arg3[%c0_3, %c0_4] : memref<128x128xbf16, #tpu.memory_space<vmem>>, vector<128x128xbf16>
    tpu.vector_store %arg3[%c0_3, %c0_4], %3 {strides = array<i32>} : memref<128x128xbf16, #tpu.memory_space<vmem>>, vector<128x128xbf16>,
    return
  }
  func.func @transform_0(%arg0: i32) -> (i32, i32) {
    %c0_i32 = arith.constant 0 : i32
    %c0_i32_0 = arith.constant 0 : i32
    return %arg0, %c0_i32 : i32, i32
  }
  func.func @transform_1(%arg0: i32) -> (i32, i32) {
    %c0_i32 = arith.constant 0 : i32
    %c0_i32_0 = arith.constant 0 : i32
    %c0_i32_1 = arith.constant 0 : i32
    return %c0_i32, %c0_i32_0 : i32, i32
  }
  func.func @transform_2(%arg0: i32) -> (i32, i32) {
    %c0_i32 = arith.constant 0 : i32
    %c0_i32_0 = arith.constant 0 : i32
    return %arg0, %c0_i32 : i32, i32
  }
}

module attributes {stable_mosaic.version = 11 : i64} {
  func.func @_agg_next_kernel(%arg0: i32, %arg1: i32, %arg2: memref<128x128xbf16, #tpu.memory_space<vmem>>, %arg3: memref<128x128xbf16, #tpu.memory_space<vmem>>, %arg4: memref<1x128xf32, #tpu.memory_space<vmem>>, %arg5: memref<128x128xbf16, #tpu.memory_space<vmem>>, %arg6: memref<128x128xbf16, #tpu.memory_space<vmem>>, %arg7: memref<128x128xf32, #tpu.memory_space<vmem>>) attributes {dimension_semantics = [#tpu.dimension_semantics<parallel>, #tpu.dimension_semantics<arbitrary>], iteration_bounds = array<i64: 2, 2>, scalar_prefetch = 0 : i64, scratch_operands = 1 : i64, tpu.core_type = #tpu.core_type<tc>, window_params = [{transform_indices = @transform_0, window_bounds = array<i64: 128, 128>}, {transform_indices = @transform_1, window_bounds = array<i64: 128, 128>}, {pipeline_mode = #tpu.pipeline_mode<synchronous>, transform_indices = @transform_2, window_bounds = array<i64: 1, 128>}, {pipeline_mode = #tpu.pipeline_mode<synchronous>, transform_indices = @transform_3, window_bounds = array<i64: 128, 128>}, {transform_indices = @transform_4, window_bounds = array<i64: 128, 128>}]} {
    %c0_i32 = arith.constant 0 : i32
    %0 = arith.cmpi eq, %arg1, %c0_i32 : i32
    %1 = arith.extui %0 : i1 to i32
    %c0_i32_0 = arith.constant 0 : i32
    %2 = arith.cmpi ne, %1, %c0_i32_0 : i32
    scf.if %2 {
      %cst_9 = arith.constant 0.000000e+00 : f32
      %12 = vector.broadcast %cst_9 : f32 to vector<128x128xf32>
      %c0_10 = arith.constant 0 : index
      %c0_11 = arith.constant 0 : index
      %13 = vector.load %arg7[%c0_10, %c0_11] : memref<128x128xf32, #tpu.memory_space<vmem>>, vector<128x128xf32>
      tpu.vector_store %arg7[%c0_10, %c0_11], %12 {strides = array<i32>} : memref<128x128xf32, #tpu.memory_space<vmem>>, vector<128x128xf32>,
    } else {
    }
    %c0 = arith.constant 0 : index
    %c0_1 = arith.constant 0 : index
    %3 = vector.load %arg7[%c0, %c0_1] : memref<128x128xf32, #tpu.memory_space<vmem>>, vector<128x128xf32>
    %c0_2 = arith.constant 0 : index
    %c0_3 = arith.constant 0 : index
    %4 = vector.load %arg2[%c0_2, %c0_3] : memref<128x128xbf16, #tpu.memory_space<vmem>>, vector<128x128xbf16>
    %c0_4 = arith.constant 0 : index
    %c0_5 = arith.constant 0 : index
    %5 = vector.load %arg3[%c0_4, %c0_5] : memref<128x128xbf16, #tpu.memory_space<vmem>>, vector<128x128xbf16>
    %cst = arith.constant dense<0.000000e+00> : vector<128x128xf32>
    %6 = tpu.matmul %4, %5, %cst {dimension_numbers = #tpu.dot_dimension_numbers<[1], [0], [0], [1], [0, 0, 1, 1], [], []>} : vector<128x128xbf16>, vector<128x128xbf16>, vector<128x128xf32> -> vector<128x128xf32>
    %7 = arith.addf %3, %6 : vector<128x128xf32>
    %c0_6 = arith.constant 0 : index
    %c0_7 = arith.constant 0 : index
    %8 = vector.load %arg7[%c0_6, %c0_7] : memref<128x128xf32, #tpu.memory_space<vmem>>, vector<128x128xf32>
    tpu.vector_store %arg7[%c0_6, %c0_7], %7 {strides = array<i32>} : memref<128x128xf32, #tpu.memory_space<vmem>>, vector<128x128xf32>,
    %c1_i32 = arith.constant 1 : i32
    %9 = arith.cmpi eq, %arg1, %c1_i32 : i32
    %10 = arith.extui %9 : i1 to i32
    %c0_i32_8 = arith.constant 0 : i32
    %11 = arith.cmpi ne, %10, %c0_i32_8 : i32
    scf.if %11 {
      %c0_9 = arith.constant 0 : index
      %c0_10 = arith.constant 0 : index
      %12 = vector.load %arg7[%c0_9, %c0_10] : memref<128x128xf32, #tpu.memory_space<vmem>>, vector<128x128xf32>
      %c0_11 = arith.constant 0 : index
      %c0_12 = arith.constant 0 : index
      %13 = vector.load %arg4[%c0_11, %c0_12] : memref<1x128xf32, #tpu.memory_space<vmem>>, vector<1x128xf32>
      %14 = vector.broadcast %13 : vector<1x128xf32> to vector<128x128xf32>
      %15 = arith.addf %12, %14 : vector<128x128xf32>
      %cst_13 = arith.constant 0.000000e+00 : f32
      %16 = vector.broadcast %cst_13 : f32 to vector<128x128xf32>
      %17 = arith.cmpf oge, %15, %16 : vector<128x128xf32>
      %cst_14 = arith.constant 0.00999999977 : f32
      %18 = vector.broadcast %cst_14 : f32 to vector<128x128xf32>
      %19 = arith.mulf %18, %15 : vector<128x128xf32>
      %20 = arith.select %17, %15, %19 : vector<128x128xi1>, vector<128x128xf32>
      %21 = arith.truncf %20 : vector<128x128xf32> to vector<128x128xbf16>
      %c0_15 = arith.constant 0 : index
      %c0_16 = arith.constant 0 : index
      %22 = vector.load %arg5[%c0_15, %c0_16] : memref<128x128xbf16, #tpu.memory_space<vmem>>, vector<128x128xbf16>
      %cst_17 = arith.constant dense<0.000000e+00> : vector<128x128xf32>
      %23 = tpu.matmul %21, %22, %cst_17 {dimension_numbers = #tpu.dot_dimension_numbers<[1], [0], [0], [1], [0, 0, 1, 1], [], []>} : vector<128x128xbf16>, vector<128x128xbf16>, vector<128x128xf32> -> vector<128x128xf32>
      %24 = arith.truncf %23 : vector<128x128xf32> to vector<128x128xbf16>
      %c0_18 = arith.constant 0 : index
      %c0_19 = arith.constant 0 : index
      %25 = vector.load %arg6[%c0_18, %c0_19] : memref<128x128xbf16, #tpu.memory_space<vmem>>, vector<128x128xbf16>
      tpu.vector_store %arg6[%c0_18, %c0_19], %24 {strides = array<i32>} : memref<128x128xbf16, #tpu.memory_space<vmem>>, vector<128x128xbf16>,
    } else {
    }
    return
  }
  func.func @transform_0(%arg0: i32, %arg1: i32) -> (i32, i32) {
    %c0_i32 = arith.constant 0 : i32
    return %arg0, %arg1 : i32, i32
  }
  func.func @transform_1(%arg0: i32, %arg1: i32) -> (i32, i32) {
    %c0_i32 = arith.constant 0 : i32
    %c0_i32_0 = arith.constant 0 : i32
    return %arg1, %c0_i32 : i32, i32
  }
  func.func @transform_2(%arg0: i32, %arg1: i32) -> (i32, i32) {
    %c0_i32 = arith.constant 0 : i32
    %c0_i32_0 = arith.constant 0 : i32
    %c0_i32_1 = arith.constant 0 : i32
    return %c0_i32, %c0_i32_0 : i32, i32
  }
  func.func @transform_3(%arg0: i32, %arg1: i32) -> (i32, i32) {
    %c0_i32 = arith.constant 0 : i32
    %c0_i32_0 = arith.constant 0 : i32
    %c0_i32_1 = arith.constant 0 : i32
    return %c0_i32, %c0_i32_0 : i32, i32
  }
  func.func @transform_4(%arg0: i32, %arg1: i32) -> (i32, i32) {
    %c0_i32 = arith.constant 0 : i32
    %c0_i32_0 = arith.constant 0 : i32
    return %arg0, %c0_i32 : i32, i32
  }
}

module attributes {stable_mosaic.version = 11 : i64} {
  func.func @kernel(%arg0: i32, %arg1: i32, %arg2: memref<128x128xbf16, #tpu.memory_space<vmem>>, %arg3: memref<128x128xbf16, #tpu.memory_space<vmem>>, %arg4: memref<1x128xf32, #tpu.memory_space<vmem>>, %arg5: memref<128x128xf32, #tpu.memory_space<vmem>>, %arg6: memref<128x128xf32, #tpu.memory_space<vmem>>) attributes {dimension_semantics = [#tpu.dimension_semantics<parallel>, #tpu.dimension_semantics<arbitrary>], iteration_bounds = array<i64: 2, 2>, scalar_prefetch = 0 : i64, scratch_operands = 1 : i64, tpu.core_type = #tpu.core_type<tc>, window_params = [{transform_indices = @transform_0, window_bounds = array<i64: 128, 128>}, {transform_indices = @transform_1, window_bounds = array<i64: 128, 128>}, {pipeline_mode = #tpu.pipeline_mode<synchronous>, transform_indices = @transform_2, window_bounds = array<i64: 1, 128>}, {transform_indices = @transform_3, window_bounds = array<i64: 128, 128>}]} {
    %c0_i32 = arith.constant 0 : i32
    %0 = arith.cmpi eq, %arg1, %c0_i32 : i32
    %1 = arith.extui %0 : i1 to i32
    %c0_i32_0 = arith.constant 0 : i32
    %2 = arith.cmpi ne, %1, %c0_i32_0 : i32
    scf.if %2 {
      %cst_9 = arith.constant 0.000000e+00 : f32
      %12 = vector.broadcast %cst_9 : f32 to vector<128x128xf32>
      %c0_10 = arith.constant 0 : index
      %c0_11 = arith.constant 0 : index
      %13 = vector.load %arg6[%c0_10, %c0_11] : memref<128x128xf32, #tpu.memory_space<vmem>>, vector<128x128xf32>
      tpu.vector_store %arg6[%c0_10, %c0_11], %12 {strides = array<i32>} : memref<128x128xf32, #tpu.memory_space<vmem>>, vector<128x128xf32>,
    } else {
    }
    %c0 = arith.constant 0 : index
    %c0_1 = arith.constant 0 : index
    %3 = vector.load %arg6[%c0, %c0_1] : memref<128x128xf32, #tpu.memory_space<vmem>>, vector<128x128xf32>
    %c0_2 = arith.constant 0 : index
    %c0_3 = arith.constant 0 : index
    %4 = vector.load %arg2[%c0_2, %c0_3] : memref<128x128xbf16, #tpu.memory_space<vmem>>, vector<128x128xbf16>
    %c0_4 = arith.constant 0 : index
    %c0_5 = arith.constant 0 : index
    %5 = vector.load %arg3[%c0_4, %c0_5] : memref<128x128xbf16, #tpu.memory_space<vmem>>, vector<128x128xbf16>
    %cst = arith.constant dense<0.000000e+00> : vector<128x128xf32>
    %6 = tpu.matmul %4, %5, %cst {dimension_numbers = #tpu.dot_dimension_numbers<[1], [0], [0], [1], [0, 0, 1, 1], [], []>} : vector<128x128xbf16>, vector<128x128xbf16>, vector<128x128xf32> -> vector<128x128xf32>
    %7 = arith.addf %3, %6 : vector<128x128xf32>
    %c0_6 = arith.constant 0 : index
    %c0_7 = arith.constant 0 : index
    %8 = vector.load %arg6[%c0_6, %c0_7] : memref<128x128xf32, #tpu.memory_space<vmem>>, vector<128x128xf32>
    tpu.vector_store %arg6[%c0_6, %c0_7], %7 {strides = array<i32>} : memref<128x128xf32, #tpu.memory_space<vmem>>, vector<128x128xf32>,
    %c1_i32 = arith.constant 1 : i32
    %9 = arith.cmpi eq, %arg1, %c1_i32 : i32
    %10 = arith.extui %9 : i1 to i32
    %c0_i32_8 = arith.constant 0 : i32
    %11 = arith.cmpi ne, %10, %c0_i32_8 : i32
    scf.if %11 {
      %c0_9 = arith.constant 0 : index
      %c0_10 = arith.constant 0 : index
      %12 = vector.load %arg6[%c0_9, %c0_10] : memref<128x128xf32, #tpu.memory_space<vmem>>, vector<128x128xf32>
      %c0_11 = arith.constant 0 : index
      %c0_12 = arith.constant 0 : index
      %13 = vector.load %arg4[%c0_11, %c0_12] : memref<1x128xf32, #tpu.memory_space<vmem>>, vector<1x128xf32>
      %14 = vector.broadcast %13 : vector<1x128xf32> to vector<128x128xf32>
      %15 = arith.addf %12, %14 : vector<128x128xf32>
      %cst_13 = arith.constant 0.000000e+00 : f32
      %16 = vector.broadcast %cst_13 : f32 to vector<128x128xf32>
      %17 = arith.cmpf oge, %15, %16 : vector<128x128xf32>
      %cst_14 = arith.constant 0.00999999977 : f32
      %18 = vector.broadcast %cst_14 : f32 to vector<128x128xf32>
      %19 = arith.mulf %18, %15 : vector<128x128xf32>
      %20 = arith.select %17, %15, %19 : vector<128x128xi1>, vector<128x128xf32>
      %21 = tpu.iota {dimensions = array<i32: 1>} : vector<128x128xi32>
      %c32_i32 = arith.constant 32 : i32
      %22 = vector.broadcast %c32_i32 : i32 to vector<128x128xi32>
      %23 = arith.cmpi slt, %21, %22 : vector<128x128xi32>
      %cst_15 = arith.constant -1.000000e+30 : f32
      %24 = vector.broadcast %cst_15 : f32 to vector<128x128xf32>
      %25 = arith.select %23, %20, %24 : vector<128x128xi1>, vector<128x128xf32>
      %cst_16 = arith.constant dense<0xFF800000> : vector<128xf32>
      %26 = vector.multi_reduction <maximumf>, %25, %cst_16 [1] : vector<128x128xf32> to vector<128xf32>
      %27 = vector.shape_cast %26 : vector<128xf32> to vector<128x1xf32>
      %28 = vector.broadcast %27 : vector<128x1xf32> to vector<128x128xf32>
      %29 = arith.subf %25, %28 : vector<128x128xf32>
      %30 = math.exp %29 : vector<128x128xf32>
      %cst_17 = arith.constant 0.000000e+00 : f32
      %31 = vector.broadcast %cst_17 : f32 to vector<128x128xf32>
      %32 = arith.select %23, %30, %31 : vector<128x128xi1>, vector<128x128xf32>
      %cst_18 = arith.constant dense<0.000000e+00> : vector<128xf32>
      %33 = vector.multi_reduction <add>, %32, %cst_18 [1] : vector<128x128xf32> to vector<128xf32>
      %34 = vector.shape_cast %33 : vector<128xf32> to vector<128x1xf32>
      %35 = vector.broadcast %34 : vector<128x1xf32> to vector<128x128xf32>
      %36 = arith.divf %32, %35 : vector<128x128xf32>
      %cst_19 = arith.constant dense<0xFF800000> : vector<128xf32>
      %37 = vector.multi_reduction <maximumf>, %36, %cst_19 [1] : vector<128x128xf32> to vector<128xf32>
      %38 = vector.shape_cast %37 : vector<128xf32> to vector<128x1xf32>
      %39 = vector.broadcast %38 : vector<128x1xf32> to vector<128x128xf32>
      %40 = arith.divf %36, %39 : vector<128x128xf32>
      %c0_20 = arith.constant 0 : index
      %c0_21 = arith.constant 0 : index
      %41 = vector.load %arg5[%c0_20, %c0_21] : memref<128x128xf32, #tpu.memory_space<vmem>>, vector<128x128xf32>
      tpu.vector_store %arg5[%c0_20, %c0_21], %40 {strides = array<i32>} : memref<128x128xf32, #tpu.memory_space<vmem>>, vector<128x128xf32>,
    } else {
    }
    return
  }
  func.func @transform_0(%arg0: i32, %arg1: i32) -> (i32, i32) {
    %c0_i32 = arith.constant 0 : i32
    return %arg0, %arg1 : i32, i32
  }
  func.func @transform_1(%arg0: i32, %arg1: i32) -> (i32, i32) {
    %c0_i32 = arith.constant 0 : i32
    %c0_i32_0 = arith.constant 0 : i32
    return %arg1, %c0_i32 : i32, i32
  }
  func.func @transform_2(%arg0: i32, %arg1: i32) -> (i32, i32) {
    %c0_i32 = arith.constant 0 : i32
    %c0_i32_0 = arith.constant 0 : i32
    %c0_i32_1 = arith.constant 0 : i32
    return %c0_i32, %c0_i32_0 : i32, i32
  }
  func.func @transform_3(%arg0: i32, %arg1: i32) -> (i32, i32) {
    %c0_i32 = arith.constant 0 : i32
    %c0_i32_0 = arith.constant 0 : i32
    return %arg0, %c0_i32 : i32, i32
  }
}

module attributes {stable_mosaic.version = 11 : i64} {
  func.func @_lens_norm_kernel(%arg0: i32, %arg1: memref<128x128xf32, #tpu.memory_space<vmem>>, %arg2: memref<1x128xf32, #tpu.memory_space<vmem>>, %arg3: memref<128x128xf32, #tpu.memory_space<vmem>>) attributes {dimension_semantics = [#tpu.dimension_semantics<parallel>], iteration_bounds = array<i64: 2>, scalar_prefetch = 0 : i64, scratch_operands = 0 : i64, tpu.core_type = #tpu.core_type<tc>, window_params = [{transform_indices = @transform_0, window_bounds = array<i64: 128, 128>}, {pipeline_mode = #tpu.pipeline_mode<synchronous>, transform_indices = @transform_1, window_bounds = array<i64: 1, 128>}, {transform_indices = @transform_2, window_bounds = array<i64: 128, 128>}]} {
    %c0 = arith.constant 0 : index
    %c0_0 = arith.constant 0 : index
    %0 = vector.load %arg1[%c0, %c0_0] : memref<128x128xf32, #tpu.memory_space<vmem>>, vector<128x128xf32>
    %c0_1 = arith.constant 0 : index
    %c0_2 = arith.constant 0 : index
    %1 = vector.load %arg2[%c0_1, %c0_2] : memref<1x128xf32, #tpu.memory_space<vmem>>, vector<1x128xf32>
    %2 = vector.broadcast %1 : vector<1x128xf32> to vector<128x128xf32>
    %3 = arith.subf %0, %2 : vector<128x128xf32>
    %c0_3 = arith.constant 0 : index
    %c0_4 = arith.constant 0 : index
    %4 = vector.load %arg3[%c0_3, %c0_4] : memref<128x128xf32, #tpu.memory_space<vmem>>, vector<128x128xf32>
    tpu.vector_store %arg3[%c0_3, %c0_4], %3 {strides = array<i32>} : memref<128x128xf32, #tpu.memory_space<vmem>>, vector<128x128xf32>,
    return
  }
  func.func @transform_0(%arg0: i32) -> (i32, i32) {
    %c0_i32 = arith.constant 0 : i32
    %c0_i32_0 = arith.constant 0 : i32
    return %arg0, %c0_i32 : i32, i32
  }
  func.func @transform_1(%arg0: i32) -> (i32, i32) {
    %c0_i32 = arith.constant 0 : i32
    %c0_i32_0 = arith.constant 0 : i32
    %c0_i32_1 = arith.constant 0 : i32
    return %c0_i32, %c0_i32_0 : i32, i32
  }
  func.func @transform_2(%arg0: i32) -> (i32, i32) {
    %c0_i32 = arith.constant 0 : i32
    %c0_i32_0 = arith.constant 0 : i32
    return %arg0, %c0_i32 : i32, i32
  }
}

module attributes {stable_mosaic.version = 11 : i64} {
  func.func @kernel(%arg0: i32, %arg1: memref<128x128xf32, #tpu.memory_space<vmem>>, %arg2: memref<128x128xf32, #tpu.memory_space<vmem>>, %arg3: memref<1x128xf32, #tpu.memory_space<vmem>>, %arg4: memref<128x128xf32, #tpu.memory_space<vmem>>, %arg5: memref<1x128xf32, #tpu.memory_space<vmem>>, %arg6: memref<128x128xf32, #tpu.memory_space<vmem>>, %arg7: memref<1x128xf32, #tpu.memory_space<vmem>>, %arg8: memref<1x128xf32, #tpu.memory_space<vmem>>) attributes {dimension_semantics = [#tpu.dimension_semantics<arbitrary>], iteration_bounds = array<i64: 2>, scalar_prefetch = 0 : i64, scratch_operands = 3 : i64, tpu.core_type = #tpu.core_type<tc>, window_params = [{transform_indices = @transform_0, window_bounds = array<i64: 128, 128>}, {pipeline_mode = #tpu.pipeline_mode<synchronous>, transform_indices = @transform_1, window_bounds = array<i64: 128, 128>}, {pipeline_mode = #tpu.pipeline_mode<synchronous>, transform_indices = @transform_2, window_bounds = array<i64: 1, 128>}, {transform_indices = @transform_3, window_bounds = array<i64: 128, 128>}, {pipeline_mode = #tpu.pipeline_mode<synchronous>, transform_indices = @transform_4, window_bounds = array<i64: 1, 128>}]} {
    %c0_i32 = arith.constant 0 : i32
    %0 = arith.cmpi eq, %arg0, %c0_i32 : i32
    %1 = arith.extui %0 : i1 to i32
    %c0_i32_0 = arith.constant 0 : i32
    %2 = arith.cmpi ne, %1, %c0_i32_0 : i32
    scf.if %2 {
      %c0_22 = arith.constant 0 : index
      %c0_23 = arith.constant 0 : index
      %38 = vector.load %arg2[%c0_22, %c0_23] : memref<128x128xf32, #tpu.memory_space<vmem>>, vector<128x128xf32>
      %39 = tpu.iota {dimensions = array<i32: 1>} : vector<128x128xi32>
      %c32_i32 = arith.constant 32 : i32
      %40 = vector.broadcast %c32_i32 : i32 to vector<128x128xi32>
      %41 = arith.cmpi slt, %39, %40 : vector<128x128xi32>
      %42 = math.absf %38 : vector<128x128xf32>
      %cst_24 = arith.constant 6.000000e-01 : f32
      %43 = vector.broadcast %cst_24 : f32 to vector<128x128xf32>
      %44 = arith.divf %42, %43 : vector<128x128xf32>
      %cst_25 = arith.constant -1.000000e+30 : f32
      %45 = vector.broadcast %cst_25 : f32 to vector<128x128xf32>
      %46 = arith.select %41, %44, %45 : vector<128x128xi1>, vector<128x128xf32>
      %cst_26 = arith.constant dense<0xFF800000> : vector<128xf32>
      %47 = vector.multi_reduction <maximumf>, %46, %cst_26 [1] : vector<128x128xf32> to vector<128xf32>
      %48 = vector.shape_cast %47 : vector<128xf32> to vector<128x1xf32>
      %49 = vector.broadcast %48 : vector<128x1xf32> to vector<128x128xf32>
      %50 = arith.subf %46, %49 : vector<128x128xf32>
      %51 = math.exp %50 : vector<128x128xf32>
      %cst_27 = arith.constant 0.000000e+00 : f32
      %52 = vector.broadcast %cst_27 : f32 to vector<128x128xf32>
      %53 = arith.select %41, %51, %52 : vector<128x128xi1>, vector<128x128xf32>
      %cst_28 = arith.constant dense<0.000000e+00> : vector<128xf32>
      %54 = vector.multi_reduction <add>, %53, %cst_28 [1] : vector<128x128xf32> to vector<128xf32>
      %55 = vector.shape_cast %54 : vector<128xf32> to vector<128x1xf32>
      %56 = vector.broadcast %55 : vector<128x1xf32> to vector<128x128xf32>
      %57 = arith.divf %53, %56 : vector<128x128xf32>
      %cst_29 = arith.constant dense<0xFF800000> : vector<128xf32>
      %58 = vector.multi_reduction <maximumf>, %57, %cst_29 [1] : vector<128x128xf32> to vector<128xf32>
      %59 = vector.shape_cast %58 : vector<128xf32> to vector<128x1xf32>
      %60 = vector.broadcast %59 : vector<128x1xf32> to vector<128x128xf32>
      %61 = arith.divf %57, %60 : vector<128x128xf32>
      %62 = arith.mulf %61, %38 : vector<128x128xf32>
      %c0_30 = arith.constant 0 : index
      %c0_31 = arith.constant 0 : index
      %63 = vector.load %arg6[%c0_30, %c0_31] : memref<128x128xf32, #tpu.memory_space<vmem>>, vector<128x128xf32>
      tpu.vector_store %arg6[%c0_30, %c0_31], %62 {strides = array<i32>} : memref<128x128xf32, #tpu.memory_space<vmem>>, vector<128x128xf32>,
      %cst_32 = arith.constant -1.000000e+30 : f32
      %64 = vector.broadcast %cst_32 : f32 to vector<1x128xf32>
      %c0_33 = arith.constant 0 : index
      %c0_34 = arith.constant 0 : index
      %65 = vector.load %arg7[%c0_33, %c0_34] : memref<1x128xf32, #tpu.memory_space<vmem>>, vector<1x128xf32>
      tpu.vector_store %arg7[%c0_33, %c0_34], %64 {strides = array<i32>} : memref<1x128xf32, #tpu.memory_space<vmem>>, vector<1x128xf32>,
      %cst_35 = arith.constant 0.000000e+00 : f32
      %66 = vector.broadcast %cst_35 : f32 to vector<1x128xf32>
      %c0_36 = arith.constant 0 : index
      %c0_37 = arith.constant 0 : index
      %67 = vector.load %arg8[%c0_36, %c0_37] : memref<1x128xf32, #tpu.memory_space<vmem>>, vector<1x128xf32>
      tpu.vector_store %arg8[%c0_36, %c0_37], %66 {strides = array<i32>} : memref<1x128xf32, #tpu.memory_space<vmem>>, vector<1x128xf32>,
    } else {
    }
    %c0 = arith.constant 0 : index
    %c0_1 = arith.constant 0 : index
    %3 = vector.load %arg1[%c0, %c0_1] : memref<128x128xf32, #tpu.memory_space<vmem>>, vector<128x128xf32>
    %c0_2 = arith.constant 0 : index
    %c0_3 = arith.constant 0 : index
    %4 = vector.load %arg6[%c0_2, %c0_3] : memref<128x128xf32, #tpu.memory_space<vmem>>, vector<128x128xf32>
    %cst = arith.constant dense<0.000000e+00> : vector<128x128xf32>
    %5 = tpu.matmul %3, %4, %cst {dimension_numbers = #tpu.dot_dimension_numbers<[1], [1], [0], [0], [0, 0, 1, 0], [], []>} : vector<128x128xf32>, vector<128x128xf32>, vector<128x128xf32> -> vector<128x128xf32>
    %c0_4 = arith.constant 0 : index
    %c0_5 = arith.constant 0 : index
    %6 = vector.load %arg3[%c0_4, %c0_5] : memref<1x128xf32, #tpu.memory_space<vmem>>, vector<1x128xf32>
    %7 = vector.broadcast %6 : vector<1x128xf32> to vector<128x128xf32>
    %8 = arith.addf %5, %7 : vector<128x128xf32>
    %c128_i32 = arith.constant 128 : i32
    %9 = arith.muli %arg0, %c128_i32 : i32
    %10 = tpu.iota {dimensions = array<i32: 0>} : vector<128x128xi32>
    %11 = vector.broadcast %9 : i32 to vector<128x128xi32>
    %12 = arith.addi %11, %10 : vector<128x128xi32>
    %c200_i32 = arith.constant 200 : i32
    %13 = vector.broadcast %c200_i32 : i32 to vector<128x128xi32>
    %14 = arith.cmpi slt, %12, %13 : vector<128x128xi32>
    %cst_6 = arith.constant -1.000000e+30 : f32
    %15 = vector.broadcast %cst_6 : f32 to vector<128x128xf32>
    %16 = arith.select %14, %8, %15 : vector<128x128xi1>, vector<128x128xf32>
    %c0_7 = arith.constant 0 : index
    %c0_8 = arith.constant 0 : index
    %17 = vector.load %arg4[%c0_7, %c0_8] : memref<128x128xf32, #tpu.memory_space<vmem>>, vector<128x128xf32>
    tpu.vector_store %arg4[%c0_7, %c0_8], %16 {strides = array<i32>} : memref<128x128xf32, #tpu.memory_space<vmem>>, vector<128x128xf32>,
    %cst_9 = arith.constant dense<0xFF800000> : vector<128xf32>
    %18 = vector.multi_reduction <maximumf>, %16, %cst_9 [0] : vector<128x128xf32> to vector<128xf32>
    %19 = vector.shape_cast %18 : vector<128xf32> to vector<1x128xf32>
    %c0_10 = arith.constant 0 : index
    %c0_11 = arith.constant 0 : index
    %20 = vector.load %arg7[%c0_10, %c0_11] : memref<1x128xf32, #tpu.memory_space<vmem>>, vector<1x128xf32>
    %21 = arith.maximumf %20, %19 : vector<1x128xf32>
    %c0_12 = arith.constant 0 : index
    %c0_13 = arith.constant 0 : index
    %22 = vector.load %arg8[%c0_12, %c0_13] : memref<1x128xf32, #tpu.memory_space<vmem>>, vector<1x128xf32>
    %c0_14 = arith.constant 0 : index
    %c0_15 = arith.constant 0 : index
    %23 = vector.load %arg7[%c0_14, %c0_15] : memref<1x128xf32, #tpu.memory_space<vmem>>, vector<1x128xf32>
    %24 = arith.subf %23, %21 : vector<1x128xf32>
    %25 = math.exp %24 : vector<1x128xf32>
    %26 = arith.mulf %22, %25 : vector<1x128xf32>
    %27 = vector.broadcast %21 : vector<1x128xf32> to vector<128x128xf32>
    %28 = arith.subf %16, %27 : vector<128x128xf32>
    %29 = math.exp %28 : vector<128x128xf32>
    %cst_16 = arith.constant dense<0.000000e+00> : vector<128xf32>
    %30 = vector.multi_reduction <add>, %29, %cst_16 [0] : vector<128x128xf32> to vector<128xf32>
    %31 = vector.shape_cast %30 : vector<128xf32> to vector<1x128xf32>
    %32 = arith.addf %26, %31 : vector<1x128xf32>
    %c0_17 = arith.constant 0 : index
    %c0_18 = arith.constant 0 : index
    %33 = vector.load %arg8[%c0_17, %c0_18] : memref<1x128xf32, #tpu.memory_space<vmem>>, vector<1x128xf32>
    tpu.vector_store %arg8[%c0_17, %c0_18], %32 {strides = array<i32>} : memref<1x128xf32, #tpu.memory_space<vmem>>, vector<1x128xf32>,
    %c0_19 = arith.constant 0 : index
    %c0_20 = arith.constant 0 : index
    %34 = vector.load %arg7[%c0_19, %c0_20] : memref<1x128xf32, #tpu.memory_space<vmem>>, vector<1x128xf32>
    tpu.vector_store %arg7[%c0_19, %c0_20], %21 {strides = array<i32>} : memref<1x128xf32, #tpu.memory_space<vmem>>, vector<1x128xf32>,
    %c1_i32 = arith.constant 1 : i32
    %35 = arith.cmpi eq, %arg0, %c1_i32 : i32
    %36 = arith.extui %35 : i1 to i32
    %c0_i32_21 = arith.constant 0 : i32
    %37 = arith.cmpi ne, %36, %c0_i32_21 : i32
    scf.if %37 {
      %c0_22 = arith.constant 0 : index
      %c0_23 = arith.constant 0 : index
      %38 = vector.load %arg7[%c0_22, %c0_23] : memref<1x128xf32, #tpu.memory_space<vmem>>, vector<1x128xf32>
      %c0_24 = arith.constant 0 : index
      %c0_25 = arith.constant 0 : index
      %39 = vector.load %arg8[%c0_24, %c0_25] : memref<1x128xf32, #tpu.memory_space<vmem>>, vector<1x128xf32>
      %40 = math.log %39 : vector<1x128xf32>
      %41 = arith.addf %38, %40 : vector<1x128xf32>
      %c0_26 = arith.constant 0 : index
      %c0_27 = arith.constant 0 : index
      %42 = vector.load %arg5[%c0_26, %c0_27] : memref<1x128xf32, #tpu.memory_space<vmem>>, vector<1x128xf32>
      tpu.vector_store %arg5[%c0_26, %c0_27], %41 {strides = array<i32>} : memref<1x128xf32, #tpu.memory_space<vmem>>, vector<1x128xf32>,
    } else {
    }
    return
  }
  func.func @transform_0(%arg0: i32) -> (i32, i32) {
    %c0_i32 = arith.constant 0 : i32
    %c0_i32_0 = arith.constant 0 : i32
    return %arg0, %c0_i32 : i32, i32
  }
  func.func @transform_1(%arg0: i32) -> (i32, i32) {
    %c0_i32 = arith.constant 0 : i32
    %c0_i32_0 = arith.constant 0 : i32
    %c0_i32_1 = arith.constant 0 : i32
    return %c0_i32, %c0_i32_0 : i32, i32
  }
  func.func @transform_2(%arg0: i32) -> (i32, i32) {
    %c0_i32 = arith.constant 0 : i32
    %c0_i32_0 = arith.constant 0 : i32
    %c0_i32_1 = arith.constant 0 : i32
    return %c0_i32, %c0_i32_0 : i32, i32
  }
  func.func @transform_3(%arg0: i32) -> (i32, i32) {
    %c0_i32 = arith.constant 0 : i32
    %c0_i32_0 = arith.constant 0 : i32
    return %arg0, %c0_i32 : i32, i32
  }
  func.func @transform_4(%arg0: i32) -> (i32, i32) {
    %c0_i32 = arith.constant 0 : i32
    %c0_i32_0 = arith.constant 0 : i32
    %c0_i32_1 = arith.constant 0 : i32
    return %c0_i32, %c0_i32_0 : i32, i32
  }
}

</mosaic_0001>

<llo_original>
// kernel: gcn_forward.7
$region0: #{gcn_forward.7}
  #allocation0 [shape = 'u32[]', space=smem, size = 0x4, offset = 0x4, fixed_abs, tag = 'smem constant byte address 0x4 - core index']
  #allocation1 [shape = 'u32[144,128]{1,0:T(1,128)}', space=vmem, size = 0x12000, scoped, tag = 'internal scratch']
  %s0 = inlined_call_operand.vmem [shape: bf16[256,128], index: 0, kind: input, shape index: {}]
  %s1 = inlined_call_operand.vmem [shape: bf16[128,128], index: 1, kind: input, shape index: {}]
  %s2 = inlined_call_operand.vmem [shape: bf16[256,128], index: 2, kind: output, shape index: {}]
  %s3 = sld [smem:[#allocation0]]
  $region41: #{gcn_forward.7} parent=0
    _
  %s5 = ssub.s32 1, %s3
  %s6 = scalar_select 0, %s5, %s3
  loop: start=0, step=1, limit=4
  $region2: #{gcn_forward.7} parent=0 // loop_pre_header
    _
  $region3: #{gcn_forward.7} parent=0 // loop_header
    %s8 = sphi 0, %s12
    %p9 = scmp.ge.s32.totalorder %s8, 4
    %s18 = sphi 0, %s20
    %s21 = sphi 0, %s18
    %s22 = sphi 0, %s21
    %s38 = sphi 0, %s22
    %s42 = sphi 0, %s42
    %s44 = sphi 0, %s42
    %s45 = sphi 0, %s44
    %s59 = sphi 0, %s45
    %s65 = sphi 0, %s67
    %s68 = sphi 0, %s65
    %s69 = sphi 0, %s68
    %s85 = sphi 0, %s69
  $region4: #{gcn_forward.7} parent=0 // loop_header_branch
    %11 = sbr.rel (%p9) target = $region8
  $region5: #{gcn_forward.7} parent=0 // loop_body
    %s13 = ssub.s32 %s8, 1
    %s14 = ssub.s32 %s8, 2
    %s15 = sadd.s32 %s8, 1
    %s16 = ssub.s32 %s8, %s15
    %p17 = scmp.eq.s32.totalorder %s16, 0
    %s19 = sadd.s32 %s18, 1
    %s20 = scalar_select %p17, %s18, %s19
    %p23 = pneg %p17
    %p24 = scmp.eq.s32.totalorder %s8, 1
    %p25 = por %p23, %p24
    %p26 = scmp.ne.s32.totalorder %s18, %s21
    %p27 = scmp.eq.s32.totalorder %s8, 0
    %p28 = por %p26, %p27
    %p29 = scmp.ne.s32.totalorder %s18, %s21
    %p30 = scmp.eq.s32.totalorder %s13, 1
    %p31 = por %p29, %p30
    %p32 = scmp.ne.s32.totalorder %s21, %s22
    %p33 = scmp.eq.s32.totalorder %s13, 0
    %p34 = por %p32, %p33
    %p35 = scmp.ne.s32.totalorder %s21, %s22
    %p36 = scmp.eq.s32.totalorder %s14, 1
    %p37 = por %p35, %p36
    %p39 = scmp.ne.s32.totalorder %s22, %s38
    %p40 = scmp.eq.s32.totalorder %s14, 0
    %p41 = por %p39, %p40
    %s43 = sadd.s32 %s42, 1
    %p46 = scmp.eq.s32.totalorder %s8, 1
    %p47 = scmp.ne.s32.totalorder %s42, %s44
    %p48 = scmp.eq.s32.totalorder %s8, 0
    %p49 = por %p47, %p48
    %p50 = scmp.ne.s32.totalorder %s42, %s44
    %p51 = scmp.eq.s32.totalorder %s13, 1
    %p52 = por %p50, %p51
    %p53 = scmp.ne.s32.totalorder %s44, %s45
    %p54 = scmp.eq.s32.totalorder %s13, 0
    %p55 = por %p53, %p54
    %p56 = scmp.ne.s32.totalorder %s44, %s45
    %p57 = scmp.eq.s32.totalorder %s14, 1
    %p58 = por %p56, %p57
    %p60 = scmp.ne.s32.totalorder %s45, %s59
    %p61 = scmp.eq.s32.totalorder %s14, 0
    %p62 = por %p60, %p61
    %s63 = ssub.s32 %s8, %s15
    %p64 = scmp.eq.s32.totalorder %s63, 0
    %s66 = sadd.s32 %s65, 1
    %s67 = scalar_select %p64, %s65, %s66
    %p70 = pneg %p64
    %p71 = scmp.eq.s32.totalorder %s8, 1
    %p72 = por %p70, %p71
    %p73 = scmp.ne.s32.totalorder %s65, %s68
    %p74 = scmp.eq.s32.totalorder %s8, 0
    %p75 = por %p73, %p74
    %p76 = scmp.ne.s32.totalorder %s65, %s68
    %p77 = scmp.eq.s32.totalorder %s13, 1
    %p78 = por %p76, %p77
    %p79 = scmp.ne.s32.totalorder %s68, %s69
    %p80 = scmp.eq.s32.totalorder %s13, 0
    %p81 = por %p79, %p80
    %p82 = scmp.ne.s32.totalorder %s68, %s69
    %p83 = scmp.eq.s32.totalorder %s14, 1
    %p84 = por %p82, %p83
    %p86 = scmp.ne.s32.totalorder %s69, %s85
    %p87 = scmp.eq.s32.totalorder %s14, 0
    %p88 = por %p86, %p87
    %p89 = scmp.le.s32.totalorder 1, %s8
    %p90 = scmp.lt.s32.totalorder %s8, 3
    %p91 = pnand %p89, %p90
    %p92 = pneg %p91
    // Predicated region
    $region9: #{gcn_forward.7} parent=5 // pred_check
      _
    $region10: #{gcn_forward.7} parent=5 // pred_check_branch
      %94 = sbr.rel (%p91) target = $region12
    $region11: #{gcn_forward.7} parent=5 // pred_region
      %s95 = ssub.s32 %s8, 1
      // Predicated region
      $region13: #{gcn_forward.7} parent=11 // pred_check
        %p96 = pneg %p55
      $region14: #{gcn_forward.7} parent=11 // pred_check_branch
        %98 = sbr.rel (%p96) target = $region16
      $region15: #{gcn_forward.7} parent=11 // pred_region
        _
      $region16: #{gcn_forward.7} parent=11 // pred_fallthru
        _
    $region12: #{gcn_forward.7} parent=5 // pred_fallthru
      _
    %p99 = scmp.lt.s32.totalorder %s8, 2
    // Predicated region
    $region17: #{gcn_forward.7} parent=5 // pred_check
      %p100 = pneg %p99
    $region18: #{gcn_forward.7} parent=5 // pred_check_branch
      %102 = sbr.rel (%p100) target = $region20
    $region19: #{gcn_forward.7} parent=5 // pred_region
      // Predicated region
      $region21: #{gcn_forward.7} parent=19 // pred_check
        %p103 = pneg %p28
      $region22: #{gcn_forward.7} parent=19 // pred_check_branch
        %105 = sbr.rel (%p103) target = $region24
      $region23: #{gcn_forward.7} parent=19 // pred_region
        %s106 = smul.u32 16, %s8
        %p107 = scmp.lt.s32.totalorder %s106, 31
        %s108 = scalar_select %p107, %s106, 31
        %s109 = smul.addr %s108, 4
        %s110 = scalar_lea.vmem %s0, %s109
        %s111 = smul.u32 16, %s8
      $region24: #{gcn_forward.7} parent=19 // pred_fallthru
        _
    $region20: #{gcn_forward.7} parent=5 // pred_fallthru
      _
    %p112 = scmp.le.s32.totalorder 1, %s8
    %p113 = scmp.lt.s32.totalorder %s8, 3
    %p114 = pnand %p112, %p113
    %p115 = pneg %p114
    // Predicated region
    $region25: #{gcn_forward.7} parent=5 // pred_check
      _
    $region26: #{gcn_forward.7} parent=5 // pred_check_branch
      %117 = sbr.rel (%p114) target = $region28
    $region27: #{gcn_forward.7} parent=5 // pred_region
      %s118 = ssub.s32 %s8, 1
      %s119 = smul.u32 16, %s13
      %p120 = scmp.lt.s32.totalorder %s119, 31
      %s121 = scalar_select %p120, %s119, 31
      %s122 = smul.addr %s121, 4
      %s123 = scalar_lea.vmem %s0, %s122
      %p124 = pneg %p34
      %p125 = pneg %p31
      %p126 = pneg %p55
      %p127 = pneg %p52
      %p128 = pneg %p81
      %p129 = pneg %p78
      %s130 = smul.u32 16, %s13
      %p131 = scmp.lt.s32.totalorder %s130, 31
      %s132 = scalar_select %p131, %s130, 31
      %s133 = smul.addr %s132, 4
      %s134 = scalar_lea.vmem %s2, %s133
      %s135 = smul.u32 16, %s13
      %p136 = scmp.lt.s32.totalorder %s135, 31
      %s137 = scalar_select %p136, %s135, 31
      %s138 = smul.addr %s137, 4
      %s139 = scalar_lea.vmem %s0, %s138
      %s140 = smul.u32 16, %s13
      %s141 = smul.u32 16, %s13
      %p142 = scmp.lt.s32.totalorder %s141, 31
      %s143 = scalar_select %p142, %s141, 31
      %s144 = smul.addr %s143, 4
      %s145 = scalar_lea.vmem %s2, %s144
      %s146 = smul.u32 16, %s13
      %v148 = vld [vmem:[%s139] sm:$0xf]
      %v149 = vld [vmem:[%s139 + $0x4] sm:$0xf]
      %v150 = vld [vmem:[%s139 + $0x8] sm:$0xf]
      %v151 = vld [vmem:[%s139 + $0xc] sm:$0xf]
      %v152 = vld [vmem:[%s139 + $0x10] sm:$0xf]
      %v153 = vld [vmem:[%s139 + $0x14] sm:$0xf]
      %v154 = vld [vmem:[%s139 + $0x18] sm:$0xf]
      %v155 = vld [vmem:[%s139 + $0x1c] sm:$0xf]
      %v156 = vld [vmem:[%s139 + $0x20] sm:$0xf]
      %v157 = vld [vmem:[%s139 + $0x24] sm:$0xf]
      %v158 = vld [vmem:[%s139 + $0x28] sm:$0xf]
      %v159 = vld [vmem:[%s139 + $0x2c] sm:$0xf]
      %v160 = vld [vmem:[%s139 + $0x30] sm:$0xf]
      %v161 = vld [vmem:[%s139 + $0x34] sm:$0xf]
      %v162 = vld [vmem:[%s139 + $0x38] sm:$0xf]
      %v163 = vld [vmem:[%s139 + $0x3c] sm:$0xf]
      %v164 = vld [vmem:[%s1] sm:$0xf]
      %v165 = vld [vmem:[%s1 + $0x4] sm:$0xf]
      %v166 = vld [vmem:[%s1 + $0x8] sm:$0xf]
      %v167 = vld [vmem:[%s1 + $0xc] sm:$0xf]
      %v168 = vld [vmem:[%s1 + $0x10] sm:$0xf]
      %v169 = vld [vmem:[%s1 + $0x14] sm:$0xf]
      %v170 = vld [vmem:[%s1 + $0x18] sm:$0xf]
      %v171 = vld [vmem:[%s1 + $0x1c] sm:$0xf]
      %v172 = vld [vmem:[%s1 + $0x20] sm:$0xf]
      %v173 = vld [vmem:[%s1 + $0x24] sm:$0xf]
      %v174 = vld [vmem:[%s1 + $0x28] sm:$0xf]
      %v175 = vld [vmem:[%s1 + $0x2c] sm:$0xf]
      %v176 = vld [vmem:[%s1 + $0x30] sm:$0xf]
      %v177 = vld [vmem:[%s1 + $0x34] sm:$0xf]
      %v178 = vld [vmem:[%s1 + $0x38] sm:$0xf]
      %v179 = vld [vmem:[%s1 + $0x3c] sm:$0xf]
      %v196 = vunpack.c.l.b16 %v148
      %v197 = vunpack.c.l.b16 %v149
      %v198 = vunpack.c.l.b16 %v150
      %v199 = vunpack.c.l.b16 %v151
      %v200 = vunpack.c.l.b16 %v152
      %v201 = vunpack.c.l.b16 %v153
      %v202 = vunpack.c.l.b16 %v154
      %v203 = vunpack.c.l.b16 %v155
      %v204 = vunpack.c.l.b16 %v156
      %v205 = vunpack.c.l.b16 %v157
      %v206 = vunpack.c.l.b16 %v158
      %v207 = vunpack.c.l.b16 %v159
      %v208 = vunpack.c.l.b16 %v160
      %v209 = vunpack.c.l.b16 %v161
      %v210 = vunpack.c.l.b16 %v162
      %v211 = vunpack.c.l.b16 %v163
      %v212 = vpack.c.b16 %v197, %v196
      %v213 = vpack.c.b16 %v199, %v198
      %v214 = vpack.c.b16 %v201, %v200
      %v215 = vpack.c.b16 %v203, %v202
      %v216 = vpack.c.b16 %v205, %v204
      %v217 = vpack.c.b16 %v207, %v206
      %v218 = vpack.c.b16 %v209, %v208
      %v219 = vpack.c.b16 %v211, %v210
      %v244 = vunpack.c.l.b16 %v164
      %v245 = vunpack.c.l.b16 %v165
      %v246 = vunpack.c.l.b16 %v166
      %v247 = vunpack.c.l.b16 %v167
      %v248 = vunpack.c.l.b16 %v168
      %v249 = vunpack.c.l.b16 %v169
      %v250 = vunpack.c.l.b16 %v170
      %v251 = vunpack.c.l.b16 %v171
      %v252 = vunpack.c.l.b16 %v172
      %v253 = vunpack.c.l.b16 %v173
      %v254 = vunpack.c.l.b16 %v174
      %v255 = vunpack.c.l.b16 %v175
      %v256 = vunpack.c.l.b16 %v176
      %v257 = vunpack.c.l.b16 %v177
      %v258 = vunpack.c.l.b16 %v178
      %v259 = vunpack.c.l.b16 %v179
      %v260 = vpack.c.b16 %v245, %v244
      %v261 = vpack.c.b16 %v247, %v246
      %v262 = vpack.c.b16 %v249, %v248
      %v263 = vpack.c.b16 %v251, %v250
      %v264 = vpack.c.b16 %v253, %v252
      %v265 = vpack.c.b16 %v255, %v254
      %v266 = vpack.c.b16 %v257, %v256
      %v267 = vpack.c.b16 %v259, %v258
      %276 = vmatprep.subr.bf16.mxu0 0
      %277 = vmatpush1.bf16.msra.mxu0 %v260
      %278 = vmatprep.subr.bf16.mxu0 0
      %279 = vmatpush1.bf16.msra.mxu0 %v261
      %280 = vmatprep.subr.bf16.mxu0 0
      %281 = vmatpush1.bf16.msra.mxu0 %v262
      %282 = vmatprep.subr.bf16.mxu0 0
      %283 = vmatpush1.bf16.msra.mxu0 %v263
      %284 = vmatprep.subr.bf16.mxu0 0
      %285 = vmatpush1.bf16.msra.mxu0 %v264
      %286 = vmatprep.subr.bf16.mxu0 0
      %287 = vmatpush1.bf16.msra.mxu0 %v265
      %288 = vmatprep.subr.bf16.mxu0 0
      %289 = vmatpush1.bf16.msra.mxu0 %v266
      %290 = vmatprep.subr.bf16.mxu0 0
      %291 = vmatpush1.bf16.msra.mxu0 %v267
      %292 = vmatprep.subr.bf16.mxu0 0
      %293 = vmatpush1.bf16.msra.mxu0 0
      %294 = vmatprep.subr.bf16.mxu0 0
      %295 = vmatpush1.bf16.msra.mxu0 0
      %296 = vmatprep.subr.bf16.mxu0 0
      %297 = vmatpush1.bf16.msra.mxu0 0
      %298 = vmatprep.subr.bf16.mxu0 0
      %299 = vmatpush1.bf16.msra.mxu0 0
      %300 = vmatprep.subr.bf16.mxu0 0
      %301 = vmatpush1.bf16.msra.mxu0 0
      %302 = vmatprep.subr.bf16.mxu0 0
      %303 = vmatpush1.bf16.msra.mxu0 0
      %304 = vmatprep.subr.bf16.mxu0 0
      %305 = vmatpush1.bf16.msra.mxu0 0
      %306 = vmatprep.subr.bf16.mxu0 0
      %307 = vmatpush1.bf16.msra.mxu0 0
      %308 = vmatprep.mubr.bf16.mxu0 0
      %309 = vmatmul.mubr.bf16.gmra.mrb[0].mxu0 %v212
      %v310 = vpop.f32.mrb[0].mxu0
      %v311 = vadd.f32 0.0, %v310
      %v312 = vpop.f32.mrb[0].mxu0
      %v313 = vpop.f32.mrb[0].mxu0
      %v314 = vadd.f32 0.0, %v313
      %v315 = vpop.f32.mrb[0].mxu0
      %316 = vmatprep.mubr.bf16.mxu0 0
      %317 = vmatmul.mubr.bf16.gmra.mrb[0].mxu0 %v213
      %v318 = vpop.f32.mrb[0].mxu0
      %v319 = vadd.f32 0.0, %v318
      %v320 = vpop.f32.mrb[0].mxu0
      %v321 = vpop.f32.mrb[0].mxu0
      %v322 = vadd.f32 0.0, %v321
      %v323 = vpop.f32.mrb[0].mxu0
      %324 = vmatprep.mubr.bf16.mxu0 0
      %325 = vmatmul.mubr.bf16.gmra.mrb[0].mxu0 %v214
      %v326 = vpop.f32.mrb[0].mxu0
      %v327 = vadd.f32 0.0, %v326
      %v328 = vpop.f32.mrb[0].mxu0
      %v329 = vpop.f32.mrb[0].mxu0
      %v330 = vadd.f32 0.0, %v329
      %v331 = vpop.f32.mrb[0].mxu0
      %332 = vmatprep.mubr.bf16.mxu0 0
      %333 = vmatmul.mubr.bf16.gmra.mrb[0].mxu0 %v215
      %v334 = vpop.f32.mrb[0].mxu0
      %v335 = vadd.f32 0.0, %v334
      %v336 = vpop.f32.mrb[0].mxu0
      %v337 = vpop.f32.mrb[0].mxu0
      %v338 = vadd.f32 0.0, %v337
      %v339 = vpop.f32.mrb[0].mxu0
      %340 = vmatprep.mubr.bf16.mxu0 0
      %341 = vmatmul.mubr.bf16.gmra.mrb[0].mxu0 %v216
      %v342 = vpop.f32.mrb[0].mxu0
      %v343 = vadd.f32 0.0, %v342
      %v344 = vpop.f32.mrb[0].mxu0
      %v345 = vpop.f32.mrb[0].mxu0
      %v346 = vadd.f32 0.0, %v345
      %v347 = vpop.f32.mrb[0].mxu0
      %348 = vmatprep.mubr.bf16.mxu0 0
      %349 = vmatmul.mubr.bf16.gmra.mrb[0].mxu0 %v217
      %v350 = vpop.f32.mrb[0].mxu0
      %v351 = vadd.f32 0.0, %v350
      %v352 = vpop.f32.mrb[0].mxu0
      %v353 = vpop.f32.mrb[0].mxu0
      %v354 = vadd.f32 0.0, %v353
      %v355 = vpop.f32.mrb[0].mxu0
      %356 = vmatprep.mubr.bf16.mxu0 0
      %357 = vmatmul.mubr.bf16.gmra.mrb[0].mxu0 %v218
      %v358 = vpop.f32.mrb[0].mxu0
      %v359 = vadd.f32 0.0, %v358
      %v360 = vpop.f32.mrb[0].mxu0
      %v361 = vpop.f32.mrb[0].mxu0
      %v362 = vadd.f32 0.0, %v361
      %v363 = vpop.f32.mrb[0].mxu0
      %364 = vmatprep.mubr.bf16.mxu0 0
      %365 = vmatmul.mubr.bf16.gmra.mrb[0].mxu0 %v219
      %v366 = vpop.f32.mrb[0].mxu0
      %v367 = vadd.f32 0.0, %v366
      %v368 = vpop.f32.mrb[0].mxu0
      %v369 = vpop.f32.mrb[0].mxu0
      %v370 = vadd.f32 0.0, %v369
      %v371 = vpop.f32.mrb[0].mxu0
      %372 = vdwg.mxu0
      %v373 = vpack.c.bf16 %v314, %v311
      %v374 = vpack.c.bf16 %v322, %v319
      %v375 = vpack.c.bf16 %v330, %v327
      %v376 = vpack.c.bf16 %v338, %v335
      %v377 = vpack.c.bf16 %v346, %v343
      %v378 = vpack.c.bf16 %v354, %v351
      %v379 = vpack.c.bf16 %v362, %v359
      %v380 = vpack.c.bf16 %v370, %v367
      %v389 = vunpack.c.l.b16 %v373
      %v390 = vunpack.c.h.b16 %v373
      %v391 = vunpack.c.l.b16 %v374
      %v392 = vunpack.c.h.b16 %v374
      %v393 = vunpack.c.l.b16 %v375
      %v394 = vunpack.c.h.b16 %v375
      %v395 = vunpack.c.l.b16 %v376
      %v396 = vunpack.c.h.b16 %v376
      %v397 = vunpack.c.l.b16 %v377
      %v398 = vunpack.c.h.b16 %v377
      %v399 = vunpack.c.l.b16 %v378
      %v400 = vunpack.c.h.b16 %v378
      %v401 = vunpack.c.l.b16 %v379
      %v402 = vunpack.c.h.b16 %v379
      %v403 = vunpack.c.l.b16 %v380
      %v404 = vunpack.c.h.b16 %v380
      %v405 = vpack.c.b16 %v389, %v389
      %v406 = vpack.c.b16 %v390, %v390
      %v407 = vpack.c.b16 %v391, %v391
      %v408 = vpack.c.b16 %v392, %v392
      %v409 = vpack.c.b16 %v393, %v393
      %v410 = vpack.c.b16 %v394, %v394
      %v411 = vpack.c.b16 %v395, %v395
      %v412 = vpack.c.b16 %v396, %v396
      %v413 = vpack.c.b16 %v397, %v397
      %v414 = vpack.c.b16 %v398, %v398
      %v415 = vpack.c.b16 %v399, %v399
      %v416 = vpack.c.b16 %v400, %v400
      %v417 = vpack.c.b16 %v401, %v401
      %v418 = vpack.c.b16 %v402, %v402
      %v419 = vpack.c.b16 %v403, %v403
      %v420 = vpack.c.b16 %v404, %v404
      %437 = vst [vmem:[%s145] sm:$0xf] %v405
      %438 = vst [vmem:[%s145 + $0x4] sm:$0xf] %v406
      %439 = vst [vmem:[%s145 + $0x8] sm:$0xf] %v407
      %440 = vst [vmem:[%s145 + $0xc] sm:$0xf] %v408
      %441 = vst [vmem:[%s145 + $0x10] sm:$0xf] %v409
      %442 = vst [vmem:[%s145 + $0x14] sm:$0xf] %v410
      %443 = vst [vmem:[%s145 + $0x18] sm:$0xf] %v411
      %444 = vst [vmem:[%s145 + $0x1c] sm:$0xf] %v412
      %445 = vst [vmem:[%s145 + $0x20] sm:$0xf] %v413
      %446 = vst [vmem:[%s145 + $0x24] sm:$0xf] %v414
      %447 = vst [vmem:[%s145 + $0x28] sm:$0xf] %v415
      %448 = vst [vmem:[%s145 + $0x2c] sm:$0xf] %v416
      %449 = vst [vmem:[%s145 + $0x30] sm:$0xf] %v417
      %450 = vst [vmem:[%s145 + $0x34] sm:$0xf] %v418
      %451 = vst [vmem:[%s145 + $0x38] sm:$0xf] %v419
      %452 = vst [vmem:[%s145 + $0x3c] sm:$0xf] %v420
      %s453 = smul.u32 16, %s13
      %p454 = scmp.lt.s32.totalorder %s453, 31
      %s455 = scalar_select %p454, %s453, 31
      %s456 = smul.addr %s455, 4
      %s457 = scalar_lea.vmem %s2, %s456
      // Predicated region
      $region29: #{gcn_forward.7} parent=27 // pred_check
        %p458 = pneg %p78
      $region30: #{gcn_forward.7} parent=27 // pred_check_branch
        %460 = sbr.rel (%p458) target = $region32
      $region31: #{gcn_forward.7} parent=27 // pred_region
        %s461 = smul.u32 16, %s13
      $region32: #{gcn_forward.7} parent=27 // pred_fallthru
        _
    $region28: #{gcn_forward.7} parent=5 // pred_fallthru
      _
    %p462 = scmp.le.s32.totalorder 2, %s8
    // Predicated region
    $region33: #{gcn_forward.7} parent=5 // pred_check
      %p463 = pneg %p462
    $region34: #{gcn_forward.7} parent=5 // pred_check_branch
      %465 = sbr.rel (%p463) target = $region36
    $region35: #{gcn_forward.7} parent=5 // pred_region
      %s466 = ssub.s32 %s8, 2
      // Predicated region
      $region37: #{gcn_forward.7} parent=35 // pred_check
        %p467 = pneg %p84
      $region38: #{gcn_forward.7} parent=35 // pred_check_branch
        %469 = sbr.rel (%p467) target = $region40
      $region39: #{gcn_forward.7} parent=35 // pred_region
        %s470 = smul.u32 16, %s14
        %p471 = scmp.lt.s32.totalorder %s470, 31
        %s472 = scalar_select %p471, %s470, 31
        %s473 = smul.addr %s472, 4
        %s474 = scalar_lea.vmem %s2, %s473
      $region40: #{gcn_forward.7} parent=35 // pred_fallthru
        _
    $region36: #{gcn_forward.7} parent=5 // pred_fallthru
      _
  $region6: #{gcn_forward.7} parent=0 // loop_footer
    %s12 = sadd.s32 1, %s8
  $region7: #{gcn_forward.7} parent=0 // loop_footer_branch
    %7 = sbr.rel target = $region3
  $region8: #{gcn_forward.7} parent=0 // loop_exit
    _

// kernel: gcn_forward.8
$region0: #{gcn_forward.8}
  #allocation0 [shape = 'u32[]', space=smem, size = 0x4, offset = 0x4, fixed_abs, tag = 'smem constant byte address 0x4 - core index']
  #allocation1 [shape = 'u32[144,128]{1,0:T(1,128)}', space=vmem, size = 0x12000, scoped, tag = 'internal scratch']
  #allocation2 [shape = 'f32[128,128]{1,0:T(8,128)}', space=vmem, size = 0x10000, scoped, tag = 'scratch operand']
  %s0 = inlined_call_operand.vmem [shape: bf16[256,256], index: 0, kind: input, shape index: {}]
  %s1 = inlined_call_operand.vmem [shape: bf16[256,128], index: 1, kind: input, shape index: {}]
  %s2 = inlined_call_operand.vmem [shape: f32[1,128], index: 2, kind: input, shape index: {}]
  %s3 = inlined_call_operand.vmem [shape: bf16[128,128], index: 3, kind: input, shape index: {}]
  %s4 = inlined_call_operand.vmem [shape: bf16[256,128], index: 4, kind: output, shape index: {}]
  %s5 = sld [smem:[#allocation0]]
  $region98: #{gcn_forward.8} parent=0
    _
  %s7 = ssub.s32 1, %s5
  %s8 = scalar_select 0, %s7, %s5
  $region1: #{gcn_forward.8} parent=0
    #allocation3 [shape = 'u8[65536]{0}', space=vmem, size = 0x10000, scoped, tag = 'input window, operand 0']
    loop: start=0, step=1, limit=6
    $region2: #{gcn_forward.8} parent=1 // loop_pre_header
      _
    $region3: #{gcn_forward.8} parent=1 // loop_header
      %s10 = sphi 0, %s14
      %p11 = scmp.ge.s32.totalorder %s10, 6
      %s17 = sphi 0, %s29
      %s18 = sphi 0, %s25
      %s19 = sphi 0, %s17
      %s20 = sphi 0, %s18
      %s21 = sphi 0, %s19
      %s22 = sphi 0, %s20
      %s34 = sphi 0, %s36
      %s37 = sphi 0, %s34
      %s38 = sphi 0, %s37
      %s54 = sphi 0, %s38
      %s60 = sphi 0, %s62
      %s63 = sphi 0, %s60
      %s64 = sphi 0, %s63
      %s80 = sphi 0, %s64
      %s84 = sphi 0, %s84
      %s86 = sphi 0, %s84
      %s87 = sphi 0, %s86
      %s101 = sphi 0, %s87
      %s105 = sphi 0, %s105
      %s107 = sphi 0, %s105
      %s108 = sphi 0, %s107
      %s122 = sphi 0, %s108
      %s128 = sphi 0, %s130
      %s131 = sphi 0, %s128
      %s132 = sphi 0, %s131
      %s148 = sphi 0, %s132
    $region4: #{gcn_forward.8} parent=1 // loop_header_branch
      %13 = sbr.rel (%p11) target = $region8
    $region5: #{gcn_forward.8} parent=1 // loop_body
      %s15 = ssub.s32 %s10, 1
      %s16 = ssub.s32 %s10, 2
      %s23 = sadd.s32 1, %s18
      %p24 = scmp.ge.s32.totalorder %s23, 2
      %s25 = scalar_select %p24, 0, %s23
      %s26 = sadd.s32 1, %s17
      %s27 = scalar_select %p24, %s26, %s17
      %p28 = scmp.ge.s32.totalorder %s27, 2
      %s29 = scalar_select %p28, 0, %s27
      %s30 = ssub.s32 %s17, %s29
      %s31 = ssub.s32 %s18, %s25
      %s32 = sor.u32 %s30, %s31
      %p33 = scmp.eq.s32.totalorder %s32, 0
      %s35 = sadd.s32 %s34, 1
      %s36 = scalar_select %p33, %s34, %s35
      %p39 = pneg %p33
      %p40 = scmp.eq.s32.totalorder %s10, 3
      %p41 = por %p39, %p40
      %p42 = scmp.ne.s32.totalorder %s34, %s37
      %p43 = scmp.eq.s32.totalorder %s10, 0
      %p44 = por %p42, %p43
      %p45 = scmp.ne.s32.totalorder %s34, %s37
      %p46 = scmp.eq.s32.totalorder %s15, 3
      %p47 = por %p45, %p46
      %p48 = scmp.ne.s32.totalorder %s37, %s38
      %p49 = scmp.eq.s32.totalorder %s15, 0
      %p50 = por %p48, %p49
      %p51 = scmp.ne.s32.totalorder %s37, %s38
      %p52 = scmp.eq.s32.totalorder %s16, 3
      %p53 = por %p51, %p52
      %p55 = scmp.ne.s32.totalorder %s38, %s54
      %p56 = scmp.eq.s32.totalorder %s16, 0
      %p57 = por %p55, %p56
      %s58 = ssub.s32 %s18, %s25
      %p59 = scmp.eq.s32.totalorder %s58, 0
      %s61 = sadd.s32 %s60, 1
      %s62 = scalar_select %p59, %s60, %s61
      %p65 = pneg %p59
      %p66 = scmp.eq.s32.totalorder %s10, 3
      %p67 = por %p65, %p66
      %p68 = scmp.ne.s32.totalorder %s60, %s63
      %p69 = scmp.eq.s32.totalorder %s10, 0
      %p70 = por %p68, %p69
      %p71 = scmp.ne.s32.totalorder %s60, %s63
      %p72 = scmp.eq.s32.totalorder %s15, 3
      %p73 = por %p71, %p72
      %p74 = scmp.ne.s32.totalorder %s63, %s64
      %p75 = scmp.eq.s32.totalorder %s15, 0
      %p76 = por %p74, %p75
      %p77 = scmp.ne.s32.totalorder %s63, %s64
      %p78 = scmp.eq.s32.totalorder %s16, 3
      %p79 = por %p77, %p78
      %p81 = scmp.ne.s32.totalorder %s64, %s80
      %p82 = scmp.eq.s32.totalorder %s16, 0
      %p83 = por %p81, %p82
      %s85 = sadd.s32 %s84, 1
      %p88 = scmp.eq.s32.totalorder %s10, 3
      %p89 = scmp.ne.s32.totalorder %s84, %s86
      %p90 = scmp.eq.s32.totalorder %s10, 0
      %p91 = por %p89, %p90
      %p92 = scmp.ne.s32.totalorder %s84, %s86
      %p93 = scmp.eq.s32.totalorder %s15, 3
      %p94 = por %p92, %p93
      %p95 = scmp.ne.s32.totalorder %s86, %s87
      %p96 = scmp.eq.s32.totalorder %s15, 0
      %p97 = por %p95, %p96
      %p98 = scmp.ne.s32.totalorder %s86, %s87
      %p99 = scmp.eq.s32.totalorder %s16, 3
      %p100 = por %p98, %p99
      %p102 = scmp.ne.s32.totalorder %s87, %s101
      %p103 = scmp.eq.s32.totalorder %s16, 0
      %p104 = por %p102, %p103
      %s106 = sadd.s32 %s105, 1
      %p109 = scmp.eq.s32.totalorder %s10, 3
      %p110 = scmp.ne.s32.totalorder %s105, %s107
      %p111 = scmp.eq.s32.totalorder %s10, 0
      %p112 = por %p110, %p111
      %p113 = scmp.ne.s32.totalorder %s105, %s107
      %p114 = scmp.eq.s32.totalorder %s15, 3
      %p115 = por %p113, %p114
      %p116 = scmp.ne.s32.totalorder %s107, %s108
      %p117 = scmp.eq.s32.totalorder %s15, 0
      %p118 = por %p116, %p117
      %p119 = scmp.ne.s32.totalorder %s107, %s108
      %p120 = scmp.eq.s32.totalorder %s16, 3
      %p121 = por %p119, %p120
      %p123 = scmp.ne.s32.totalorder %s108, %s122
      %p124 = scmp.eq.s32.totalorder %s16, 0
      %p125 = por %p123, %p124
      %s126 = ssub.s32 %s17, %s29
      %p127 = scmp.eq.s32.totalorder %s126, 0
      %s129 = sadd.s32 %s128, 1
      %s130 = scalar_select %p127, %s128, %s129
      %p133 = pneg %p127
      %p134 = scmp.eq.s32.totalorder %s10, 3
      %p135 = por %p133, %p134
      %p136 = scmp.ne.s32.totalorder %s128, %s131
      %p137 = scmp.eq.s32.totalorder %s10, 0
      %p138 = por %p136, %p137
      %p139 = scmp.ne.s32.totalorder %s128, %s131
      %p140 = scmp.eq.s32.totalorder %s15, 3
      %p141 = por %p139, %p140
      %p142 = scmp.ne.s32.totalorder %s131, %s132
      %p143 = scmp.eq.s32.totalorder %s15, 0
      %p144 = por %p142, %p143
      %p145 = scmp.ne.s32.totalorder %s131, %s132
      %p146 = scmp.eq.s32.totalorder %s16, 3
      %p147 = por %p145, %p146
      %p149 = scmp.ne.s32.totalorder %s132, %s148
      %p150 = scmp.eq.s32.totalorder %s16, 0
      %p151 = por %p149, %p150
      %p152 = scmp.le.s32.totalorder 1, %s10
      %p153 = scmp.lt.s32.totalorder %s10, 5
      %p154 = pnand %p152, %p153
      %p155 = pneg %p154
      // Predicated region
      $region9: #{gcn_forward.8} parent=5 // pred_check
        _
      $region10: #{gcn_forward.8} parent=5 // pred_check_branch
        %157 = sbr.rel (%p154) target = $region12
      $region11: #{gcn_forward.8} parent=5 // pred_region
        %s158 = ssub.s32 %s10, 1
        // Predicated region
        $region13: #{gcn_forward.8} parent=11 // pred_check
          %p159 = pneg %p97
        $region14: #{gcn_forward.8} parent=11 // pred_check_branch
          %161 = sbr.rel (%p159) target = $region16
        $region15: #{gcn_forward.8} parent=11 // pred_region
          _
        $region16: #{gcn_forward.8} parent=11 // pred_fallthru
          _
        // Predicated region
        $region17: #{gcn_forward.8} parent=11 // pred_check
          %p162 = pneg %p118
        $region18: #{gcn_forward.8} parent=11 // pred_check_branch
          %164 = sbr.rel (%p162) target = $region20
        $region19: #{gcn_forward.8} parent=11 // pred_region
          _
        $region20: #{gcn_forward.8} parent=11 // pred_fallthru
          _
      $region12: #{gcn_forward.8} parent=5 // pred_fallthru
        _
      %p165 = scmp.lt.s32.totalorder %s10, 4
      // Predicated region
      $region21: #{gcn_forward.8} parent=5 // pred_check
        %p166 = pneg %p165
      $region22: #{gcn_forward.8} parent=5 // pred_check_branch
        %168 = sbr.rel (%p166) target = $region24
      $region23: #{gcn_forward.8} parent=5 // pred_region
        // Predicated region
        $region25: #{gcn_forward.8} parent=23 // pred_check
          %p169 = pneg %p44
        $region26: #{gcn_forward.8} parent=23 // pred_check_branch
          %171 = sbr.rel (%p169) target = $region28
        $region27: #{gcn_forward.8} parent=23 // pred_region
          %s172 = sand.u32 %s34, 1
          %s173 = sand.u32 %s34, 1
          %s174 = smul.addr %s173, 64
          %s175 = scalar_lea.vmem [#allocation3], %s174
          %s176 = smul.u32 16, %s17
          %s177 = smul.addr %s176, 2
          %s178 = sadd.s32 %s18, %s177
          %s179 = smul.addr %s178, 4
          %s180 = scalar_lea.vmem %s0, %s179
          // Predicated region
          $region29: #{gcn_forward.8} parent=27 // pred_check
            _
          $region30: #{gcn_forward.8} parent=27 // pred_check_branch
            %182 = sbr.rel (0) target = $region32
          $region31: #{gcn_forward.8} parent=27 // pred_region
            // Predicated region
            $region33: #{gcn_forward.8} parent=31 // pred_check
              _
            $region34: #{gcn_forward.8} parent=31 // pred_check_branch
              %184 = sbr.rel target = $region36
            $region35: #{gcn_forward.8} parent=31 // pred_region
              // Predicated region
              $region48: #{gcn_forward.8} parent=35 // pred_check
                _
              $region49: #{gcn_forward.8} parent=35 // pred_check_branch
                %229 = sbr.rel (0) target = $region51
              $region50: #{gcn_forward.8} parent=35 // pred_region
                loop: start=0, step=1, limit=1
                $region52: #{gcn_forward.8} parent=50 // loop_pre_header
                  _
                $region53: #{gcn_forward.8} parent=50 // loop_header
                  %s231 = sphi 0, %s235
                  %p232 = scmp.ge.s32.totalorder %s231, 1
                  %s236 = sphi %s180, %s180
                  %s237 = sphi %s175, %s175
                $region54: #{gcn_forward.8} parent=50 // loop_header_branch
                  %234 = sbr.rel (%p232) target = $region58
                $region55: #{gcn_forward.8} parent=50 // loop_body
                  _
                $region56: #{gcn_forward.8} parent=50 // loop_footer
                  %s235 = sadd.s32 1, %s231
                $region57: #{gcn_forward.8} parent=50 // loop_footer_branch
                  %230 = sbr.rel target = $region53
                $region58: #{gcn_forward.8} parent=50 // loop_exit
                  _
                loop: start=0, step=1, limit=1
                $region59: #{gcn_forward.8} parent=50 // loop_pre_header
                  _
                $region60: #{gcn_forward.8} parent=50 // loop_header
                  %s240 = sphi 0, %s244
                  %p241 = scmp.ge.s32.totalorder %s240, 1
                  %s245 = sphi %s180, %s180
                  %s246 = sphi %s175, %s175
                $region61: #{gcn_forward.8} parent=50 // loop_header_branch
                  %243 = sbr.rel (%p241) target = $region65
                $region62: #{gcn_forward.8} parent=50 // loop_body
                  %v247 = vld [vmem:[%s245] sm:$0xf]
                  %248 = vst [vmem:[%s246] sm:$0xf] %v247
                  %v249 = vld [vmem:[%s245 + $0x8] sm:$0xf]
                  %250 = vst [vmem:[%s246 + $0x4] sm:$0xf] %v249
                  %v251 = vld [vmem:[%s245 + $0x10] sm:$0xf]
                  %252 = vst [vmem:[%s246 + $0x8] sm:$0xf] %v251
                  %v253 = vld [vmem:[%s245 + $0x18] sm:$0xf]
                  %254 = vst [vmem:[%s246 + $0xc] sm:$0xf] %v253
                  %v255 = vld [vmem:[%s245 + $0x20] sm:$0xf]
                  %256 = vst [vmem:[%s246 + $0x10] sm:$0xf] %v255
                  %v257 = vld [vmem:[%s245 + $0x28] sm:$0xf]
                  %258 = vst [vmem:[%s246 + $0x14] sm:$0xf] %v257
                  %v259 = vld [vmem:[%s245 + $0x30] sm:$0xf]
                  %260 = vst [vmem:[%s246 + $0x18] sm:$0xf] %v259
                  %v261 = vld [vmem:[%s245 + $0x38] sm:$0xf]
                  %262 = vst [vmem:[%s246 + $0x1c] sm:$0xf] %v261
                  %v263 = vld [vmem:[%s245 + $0x40] sm:$0xf]
                  %264 = vst [vmem:[%s246 + $0x20] sm:$0xf] %v263
                  %v265 = vld [vmem:[%s245 + $0x48] sm:$0xf]
                  %266 = vst [vmem:[%s246 + $0x24] sm:$0xf] %v265
                  %v267 = vld [vmem:[%s245 + $0x50] sm:$0xf]
                  %268 = vst [vmem:[%s246 + $0x28] sm:$0xf] %v267
                  %v269 = vld [vmem:[%s245 + $0x58] sm:$0xf]
                  %270 = vst [vmem:[%s246 + $0x2c] sm:$0xf] %v269
                  %v271 = vld [vmem:[%s245 + $0x60] sm:$0xf]
                  %272 = vst [vmem:[%s246 + $0x30] sm:$0xf] %v271
                  %v273 = vld [vmem:[%s245 + $0x68] sm:$0xf]
                  %274 = vst [vmem:[%s246 + $0x34] sm:$0xf] %v273
                  %v275 = vld [vmem:[%s245 + $0x70] sm:$0xf]
                  %276 = vst [vmem:[%s246 + $0x38] sm:$0xf] %v275
                  %v277 = vld [vmem:[%s245 + $0x78] sm:$0xf]
                  %278 = vst [vmem:[%s246 + $0x3c] sm:$0xf] %v277
                $region63: #{gcn_forward.8} parent=50 // loop_footer
                  %s244 = sadd.s32 1, %s240
                $region64: #{gcn_forward.8} parent=50 // loop_footer_branch
                  %239 = sbr.rel target = $region60
                $region65: #{gcn_forward.8} parent=50 // loop_exit
                  _
              $region51: #{gcn_forward.8} parent=35 // pred_fallthru
                _
            $region36: #{gcn_forward.8} parent=31 // pred_fallthru
              _
            // Predicated region
            $region37: #{gcn_forward.8} parent=31 // pred_check
              _
            $region38: #{gcn_forward.8} parent=31 // pred_check_branch
              %186 = sbr.rel (0) target = $region40
            $region39: #{gcn_forward.8} parent=31 // pred_region
              loop: start=0, step=1, limit=1
              $region41: #{gcn_forward.8} parent=39 // loop_pre_header
                _
              $region42: #{gcn_forward.8} parent=39 // loop_header
                %s189 = sphi 0, %s193
                %p190 = scmp.ge.s32.totalorder %s189, 1
                %s194 = sphi %s180, %s180
                %s195 = sphi %s175, %s175
              $region43: #{gcn_forward.8} parent=39 // loop_header_branch
                %192 = sbr.rel (%p190) target = $region47
              $region44: #{gcn_forward.8} parent=39 // loop_body
                %v196 = vld [vmem:[%s194] sm:$0xf]
                %197 = vst [vmem:[%s195] sm:$0xf] %v196
                %v198 = vld [vmem:[%s194 + $0x8] sm:$0xf]
                %199 = vst [vmem:[%s195 + $0x4] sm:$0xf] %v198
                %v200 = vld [vmem:[%s194 + $0x10] sm:$0xf]
                %201 = vst [vmem:[%s195 + $0x8] sm:$0xf] %v200
                %v202 = vld [vmem:[%s194 + $0x18] sm:$0xf]
                %203 = vst [vmem:[%s195 + $0xc] sm:$0xf] %v202
                %v204 = vld [vmem:[%s194 + $0x20] sm:$0xf]
                %205 = vst [vmem:[%s195 + $0x10] sm:$0xf] %v204
                %v206 = vld [vmem:[%s194 + $0x28] sm:$0xf]
                %207 = vst [vmem:[%s195 + $0x14] sm:$0xf] %v206
                %v208 = vld [vmem:[%s194 + $0x30] sm:$0xf]
                %209 = vst [vmem:[%s195 + $0x18] sm:$0xf] %v208
                %v210 = vld [vmem:[%s194 + $0x38] sm:$0xf]
                %211 = vst [vmem:[%s195 + $0x1c] sm:$0xf] %v210
                %v212 = vld [vmem:[%s194 + $0x40] sm:$0xf]
                %213 = vst [vmem:[%s195 + $0x20] sm:$0xf] %v212
                %v214 = vld [vmem:[%s194 + $0x48] sm:$0xf]
                %215 = vst [vmem:[%s195 + $0x24] sm:$0xf] %v214
                %v216 = vld [vmem:[%s194 + $0x50] sm:$0xf]
                %217 = vst [vmem:[%s195 + $0x28] sm:$0xf] %v216
                %v218 = vld [vmem:[%s194 + $0x58] sm:$0xf]
                %219 = vst [vmem:[%s195 + $0x2c] sm:$0xf] %v218
                %v220 = vld [vmem:[%s194 + $0x60] sm:$0xf]
                %221 = vst [vmem:[%s195 + $0x30] sm:$0xf] %v220
                %v222 = vld [vmem:[%s194 + $0x68] sm:$0xf]
                %223 = vst [vmem:[%s195 + $0x34] sm:$0xf] %v222
                %v224 = vld [vmem:[%s194 + $0x70] sm:$0xf]
                %225 = vst [vmem:[%s195 + $0x38] sm:$0xf] %v224
                %v226 = vld [vmem:[%s194 + $0x78] sm:$0xf]
                %227 = vst [vmem:[%s195 + $0x3c] sm:$0xf] %v226
              $region45: #{gcn_forward.8} parent=39 // loop_footer
                %s193 = sadd.s32 1, %s189
              $region46: #{gcn_forward.8} parent=39 // loop_footer_branch
                %188 = sbr.rel target = $region42
              $region47: #{gcn_forward.8} parent=39 // loop_exit
                _
            $region40: #{gcn_forward.8} parent=31 // pred_fallthru
              _
          $region32: #{gcn_forward.8} parent=27 // pred_fallthru
            _
          %279 = vnop
        $region28: #{gcn_forward.8} parent=23 // pred_fallthru
          _
        // Predicated region
        $region66: #{gcn_forward.8} parent=23 // pred_check
          %p280 = pneg %p70
        $region67: #{gcn_forward.8} parent=23 // pred_check_branch
          %282 = sbr.rel (%p280) target = $region69
        $region68: #{gcn_forward.8} parent=23 // pred_region
          %s283 = smul.u32 16, %s18
          %p284 = scmp.lt.s32.totalorder %s283, 31
          %s285 = scalar_select %p284, %s283, 31
          %s286 = smul.addr %s285, 4
          %s287 = scalar_lea.vmem %s1, %s286
          %s288 = smul.u32 16, %s18
        $region69: #{gcn_forward.8} parent=23 // pred_fallthru
          _
      $region24: #{gcn_forward.8} parent=5 // pred_fallthru
        _
      %p289 = scmp.le.s32.totalorder 1, %s10
      %p290 = scmp.lt.s32.totalorder %s10, 5
      %p291 = pnand %p289, %p290
      %p292 = pneg %p291
      // Predicated region
      $region70: #{gcn_forward.8} parent=5 // pred_check
        _
      $region71: #{gcn_forward.8} parent=5 // pred_check_branch
        %294 = sbr.rel (%p291) target = $region73
      $region72: #{gcn_forward.8} parent=5 // pred_region
        %s295 = ssub.s32 %s10, 1
        %s296 = sand.u32 %s37, 1
        %s297 = sand.u32 %s37, 1
        %s298 = smul.addr %s297, 64
        %s299 = scalar_lea.vmem [#allocation3], %s298
        // Predicated region
        $region74: #{gcn_forward.8} parent=72 // pred_check
          %p300 = pneg %p50
        $region75: #{gcn_forward.8} parent=72 // pred_check_branch
          %302 = sbr.rel (%p300) target = $region77
        $region76: #{gcn_forward.8} parent=72 // pred_region
          _
        $region77: #{gcn_forward.8} parent=72 // pred_fallthru
          _
        %s303 = sand.u32 %s37, 1
        %s304 = sand.u32 %s37, 1
        %s305 = smul.addr %s304, 64
        %s306 = scalar_lea.vmem [#allocation3], %s305
        %p307 = pneg %p50
        %p308 = pneg %p47
        %s309 = smul.u32 16, %s20
        %p310 = scmp.lt.s32.totalorder %s309, 31
        %s311 = scalar_select %p310, %s309, 31
        %s312 = smul.addr %s311, 4
        %s313 = scalar_lea.vmem %s1, %s312
        %p314 = pneg %p76
        %p315 = pneg %p73
        %p316 = pneg %p97
        %p317 = pneg %p94
        %p318 = pneg %p118
        %p319 = pneg %p115
        %p320 = pneg %p144
        %p321 = pneg %p141
        %s322 = smul.u32 16, %s19
        %p323 = scmp.lt.s32.totalorder %s322, 31
        %s324 = scalar_select %p323, %s322, 31
        %s325 = smul.addr %s324, 4
        %s326 = scalar_lea.vmem %s4, %s325
        %s327 = smul.u32 16, %s19
        %s328 = smul.u32 16, %s20
        %p329 = scmp.lt.s32.totalorder %s328, 31
        %s330 = scalar_select %p329, %s328, 31
        %s331 = smul.addr %s330, 4
        %s332 = scalar_lea.vmem %s1, %s331
        %s333 = smul.u32 16, %s20
        %s334 = smul.u32 16, %s19
        %p335 = scmp.lt.s32.totalorder %s334, 31
        %s336 = scalar_select %p335, %s334, 31
        %s337 = smul.addr %s336, 4
        %s338 = scalar_lea.vmem %s4, %s337
        %s339 = smul.u32 16, %s19
        %p341 = scmp.eq.s32.totalorder %s20, 0
        // Predicated region
        $region78: #{gcn_forward.8} parent=72 // pred_check
          %p342 = pneg %p341
        $region79: #{gcn_forward.8} parent=72 // pred_check_branch
          %344 = sbr.rel (%p342) target = $region81
        $region80: #{gcn_forward.8} parent=72 // pred_region
          %345 = vst [vmem:[#allocation2] sm:$0xff] 0.0
          %346 = vst [vmem:[#allocation2 + $0x8] sm:$0xff] 0.0
          %347 = vst [vmem:[#allocation2 + $0x10] sm:$0xff] 0.0
          %348 = vst [vmem:[#allocation2 + $0x18] sm:$0xff] 0.0
          %349 = vst [vmem:[#allocation2 + $0x20] sm:$0xff] 0.0
          %350 = vst [vmem:[#allocation2 + $0x28] sm:$0xff] 0.0
          %351 = vst [vmem:[#allocation2 + $0x30] sm:$0xff] 0.0
          %352 = vst [vmem:[#allocation2 + $0x38] sm:$0xff] 0.0
          %353 = vst [vmem:[#allocation2 + $0x40] sm:$0xff] 0.0
          %354 = vst [vmem:[#allocation2 + $0x48] sm:$0xff] 0.0
          %355 = vst [vmem:[#allocation2 + $0x50] sm:$0xff] 0.0
          %356 = vst [vmem:[#allocation2 + $0x58] sm:$0xff] 0.0
          %357 = vst [vmem:[#allocation2 + $0x60] sm:$0xff] 0.0
          %358 = vst [vmem:[#allocation2 + $0x68] sm:$0xff] 0.0
          %359 = vst [vmem:[#allocation2 + $0x70] sm:$0xff] 0.0
          %360 = vst [vmem:[#allocation2 + $0x78] sm:$0xff] 0.0
        $region81: #{gcn_forward.8} parent=72 // pred_fallthru
          _
        %v361 = vld [vmem:[#allocation2] sm:$0xff]
        %v362 = vld [vmem:[#allocation2 + $0x8] sm:$0xff]
        %v363 = vld [vmem:[#allocation2 + $0x10] sm:$0xff]
        %v364 = vld [vmem:[#allocation2 + $0x18] sm:$0xff]
        %v365 = vld [vmem:[#allocation2 + $0x20] sm:$0xff]
        %v366 = vld [vmem:[#allocation2 + $0x28] sm:$0xff]
        %v367 = vld [vmem:[#allocation2 + $0x30] sm:$0xff]
        %v368 = vld [vmem:[#allocation2 + $0x38] sm:$0xff]
        %v369 = vld [vmem:[#allocation2 + $0x40] sm:$0xff]
        %v370 = vld [vmem:[#allocation2 + $0x48] sm:$0xff]
        %v371 = vld [vmem:[#allocation2 + $0x50] sm:$0xff]
        %v372 = vld [vmem:[#allocation2 + $0x58] sm:$0xff]
        %v373 = vld [vmem:[#allocation2 + $0x60] sm:$0xff]
        %v374 = vld [vmem:[#allocation2 + $0x68] sm:$0xff]
        %v375 = vld [vmem:[#allocation2 + $0x70] sm:$0xff]
        %v376 = vld [vmem:[#allocation2 + $0x78] sm:$0xff]
        %v377 = vld [vmem:[%s299] sm:$0xf]
        %v378 = vld [vmem:[%s299 + $0x4] sm:$0xf]
        %v379 = vld [vmem:[%s299 + $0x8] sm:$0xf]
        %v380 = vld [vmem:[%s299 + $0xc] sm:$0xf]
        %v381 = vld [vmem:[%s299 + $0x10] sm:$0xf]
        %v382 = vld [vmem:[%s299 + $0x14] sm:$0xf]
        %v383 = vld [vmem:[%s299 + $0x18] sm:$0xf]
        %v384 = vld [vmem:[%s299 + $0x1c] sm:$0xf]
        %v385 = vld [vmem:[%s299 + $0x20] sm:$0xf]
        %v386 = vld [vmem:[%s299 + $0x24] sm:$0xf]
        %v387 = vld [vmem:[%s299 + $0x28] sm:$0xf]
        %v388 = vld [vmem:[%s299 + $0x2c] sm:$0xf]
        %v389 = vld [vmem:[%s299 + $0x30] sm:$0xf]
        %v390 = vld [vmem:[%s299 + $0x34] sm:$0xf]
        %v391 = vld [vmem:[%s299 + $0x38] sm:$0xf]
        %v392 = vld [vmem:[%s299 + $0x3c] sm:$0xf]
        %v393 = vld [vmem:[%s332] sm:$0xf]
        %v394 = vld [vmem:[%s332 + $0x4] sm:$0xf]
        %v395 = vld [vmem:[%s332 + $0x8] sm:$0xf]
        %v396 = vld [vmem:[%s332 + $0xc] sm:$0xf]
        %v397 = vld [vmem:[%s332 + $0x10] sm:$0xf]
        %v398 = vld [vmem:[%s332 + $0x14] sm:$0xf]
        %v399 = vld [vmem:[%s332 + $0x18] sm:$0xf]
        %v400 = vld [vmem:[%s332 + $0x1c] sm:$0xf]
        %v401 = vld [vmem:[%s332 + $0x20] sm:$0xf]
        %v402 = vld [vmem:[%s332 + $0x24] sm:$0xf]
        %v403 = vld [vmem:[%s332 + $0x28] sm:$0xf]
        %v404 = vld [vmem:[%s332 + $0x2c] sm:$0xf]
        %v405 = vld [vmem:[%s332 + $0x30] sm:$0xf]
        %v406 = vld [vmem:[%s332 + $0x34] sm:$0xf]
        %v407 = vld [vmem:[%s332 + $0x38] sm:$0xf]
        %v408 = vld [vmem:[%s332 + $0x3c] sm:$0xf]
        %v425 = vunpack.c.l.b16 %v377
        %v426 = vunpack.c.l.b16 %v378
        %v427 = vunpack.c.l.b16 %v379
        %v428 = vunpack.c.l.b16 %v380
        %v429 = vunpack.c.l.b16 %v381
        %v430 = vunpack.c.l.b16 %v382
        %v431 = vunpack.c.l.b16 %v383
        %v432 = vunpack.c.l.b16 %v384
        %v433 = vunpack.c.l.b16 %v385
        %v434 = vunpack.c.l.b16 %v386
        %v435 = vunpack.c.l.b16 %v387
        %v436 = vunpack.c.l.b16 %v388
        %v437 = vunpack.c.l.b16 %v389
        %v438 = vunpack.c.l.b16 %v390
        %v439 = vunpack.c.l.b16 %v391
        %v440 = vunpack.c.l.b16 %v392
        %v441 = vpack.c.b16 %v426, %v425
        %v442 = vpack.c.b16 %v428, %v427
        %v443 = vpack.c.b16 %v430, %v429
        %v444 = vpack.c.b16 %v432, %v431
        %v445 = vpack.c.b16 %v434, %v433
        %v446 = vpack.c.b16 %v436, %v435
        %v447 = vpack.c.b16 %v438, %v437
        %v448 = vpack.c.b16 %v440, %v439
        %v473 = vunpack.c.l.b16 %v393
        %v474 = vunpack.c.l.b16 %v394
        %v475 = vunpack.c.l.b16 %v395
        %v476 = vunpack.c.l.b16 %v396
        %v477 = vunpack.c.l.b16 %v397
        %v478 = vunpack.c.l.b16 %v398
        %v479 = vunpack.c.l.b16 %v399
        %v480 = vunpack.c.l.b16 %v400
        %v481 = vunpack.c.l.b16 %v401
        %v482 = vunpack.c.l.b16 %v402
        %v483 = vunpack.c.l.b16 %v403
        %v484 = vunpack.c.l.b16 %v404
        %v485 = vunpack.c.l.b16 %v405
        %v486 = vunpack.c.l.b16 %v406
        %v487 = vunpack.c.l.b16 %v407
        %v488 = vunpack.c.l.b16 %v408
        %v489 = vpack.c.b16 %v474, %v473
        %v490 = vpack.c.b16 %v476, %v475
        %v491 = vpack.c.b16 %v478, %v477
        %v492 = vpack.c.b16 %v480, %v479
        %v493 = vpack.c.b16 %v482, %v481
        %v494 = vpack.c.b16 %v484, %v483
        %v495 = vpack.c.b16 %v486, %v485
        %v496 = vpack.c.b16 %v488, %v487
        %505 = vmatprep.subr.bf16.mxu0 0
        %506 = vmatpush1.bf16.msra.mxu0 %v489
        %507 = vmatprep.subr.bf16.mxu0 0
        %508 = vmatpush1.bf16.msra.mxu0 %v490
        %509 = vmatprep.subr.bf16.mxu0 0
        %510 = vmatpush1.bf16.msra.mxu0 %v491
        %511 = vmatprep.subr.bf16.mxu0 0
        %512 = vmatpush1.bf16.msra.mxu0 %v492
        %513 = vmatprep.subr.bf16.mxu0 0
        %514 = vmatpush1.bf16.msra.mxu0 %v493
        %515 = vmatprep.subr.bf16.mxu0 0
        %516 = vmatpush1.bf16.msra.mxu0 %v494
        %517 = vmatprep.subr.bf16.mxu0 0
        %518 = vmatpush1.bf16.msra.mxu0 %v495
        %519 = vmatprep.subr.bf16.mxu0 0
        %520 = vmatpush1.bf16.msra.mxu0 %v496
        %521 = vmatprep.subr.bf16.mxu0 0
        %522 = vmatpush1.bf16.msra.mxu0 0
        %523 = vmatprep.subr.bf16.mxu0 0
        %524 = vmatpush1.bf16.msra.mxu0 0
        %525 = vmatprep.subr.bf16.mxu0 0
        %526 = vmatpush1.bf16.msra.mxu0 0
        %527 = vmatprep.subr.bf16.mxu0 0
        %528 = vmatpush1.bf16.msra.mxu0 0
        %529 = vmatprep.subr.bf16.mxu0 0
        %530 = vmatpush1.bf16.msra.mxu0 0
        %531 = vmatprep.subr.bf16.mxu0 0
        %532 = vmatpush1.bf16.msra.mxu0 0
        %533 = vmatprep.subr.bf16.mxu0 0
        %534 = vmatpush1.bf16.msra.mxu0 0
        %535 = vmatprep.subr.bf16.mxu0 0
        %536 = vmatpush1.bf16.msra.mxu0 0
        %537 = vmatprep.mubr.bf16.mxu0 0
        %538 = vmatmul.mubr.bf16.gmra.mrb[0].mxu0 %v441
        %v539 = vpop.f32.mrb[0].mxu0
        %v540 = vadd.f32 0.0, %v539
        %v541 = vpop.f32.mrb[0].mxu0
        %v542 = vpop.f32.mrb[0].mxu0
        %v543 = vadd.f32 0.0, %v542
        %v544 = vpop.f32.mrb[0].mxu0
        %545 = vmatprep.mubr.bf16.mxu0 0
        %546 = vmatmul.mubr.bf16.gmra.mrb[0].mxu0 %v442
        %v547 = vpop.f32.mrb[0].mxu0
        %v548 = vadd.f32 0.0, %v547
        %v549 = vpop.f32.mrb[0].mxu0
        %v550 = vpop.f32.mrb[0].mxu0
        %v551 = vadd.f32 0.0, %v550
        %v552 = vpop.f32.mrb[0].mxu0
        %553 = vmatprep.mubr.bf16.mxu0 0
        %554 = vmatmul.mubr.bf16.gmra.mrb[0].mxu0 %v443
        %v555 = vpop.f32.mrb[0].mxu0
        %v556 = vadd.f32 0.0, %v555
        %v557 = vpop.f32.mrb[0].mxu0
        %v558 = vpop.f32.mrb[0].mxu0
        %v559 = vadd.f32 0.0, %v558
        %v560 = vpop.f32.mrb[0].mxu0
        %561 = vmatprep.mubr.bf16.mxu0 0
        %562 = vmatmul.mubr.bf16.gmra.mrb[0].mxu0 %v444
        %v563 = vpop.f32.mrb[0].mxu0
        %v564 = vadd.f32 0.0, %v563
        %v565 = vpop.f32.mrb[0].mxu0
        %v566 = vpop.f32.mrb[0].mxu0
        %v567 = vadd.f32 0.0, %v566
        %v568 = vpop.f32.mrb[0].mxu0
        %569 = vmatprep.mubr.bf16.mxu0 0
        %570 = vmatmul.mubr.bf16.gmra.mrb[0].mxu0 %v445
        %v571 = vpop.f32.mrb[0].mxu0
        %v572 = vadd.f32 0.0, %v571
        %v573 = vpop.f32.mrb[0].mxu0
        %v574 = vpop.f32.mrb[0].mxu0
        %v575 = vadd.f32 0.0, %v574
        %v576 = vpop.f32.mrb[0].mxu0
        %577 = vmatprep.mubr.bf16.mxu0 0
        %578 = vmatmul.mubr.bf16.gmra.mrb[0].mxu0 %v446
        %v579 = vpop.f32.mrb[0].mxu0
        %v580 = vadd.f32 0.0, %v579
        %v581 = vpop.f32.mrb[0].mxu0
        %v582 = vpop.f32.mrb[0].mxu0
        %v583 = vadd.f32 0.0, %v582
        %v584 = vpop.f32.mrb[0].mxu0
        %585 = vmatprep.mubr.bf16.mxu0 0
        %586 = vmatmul.mubr.bf16.gmra.mrb[0].mxu0 %v447
        %v587 = vpop.f32.mrb[0].mxu0
        %v588 = vadd.f32 0.0, %v587
        %v589 = vpop.f32.mrb[0].mxu0
        %v590 = vpop.f32.mrb[0].mxu0
        %v591 = vadd.f32 0.0, %v590
        %v592 = vpop.f32.mrb[0].mxu0
        %593 = vmatprep.mubr.bf16.mxu0 0
        %594 = vmatmul.mubr.bf16.gmra.mrb[0].mxu0 %v448
        %v595 = vpop.f32.mrb[0].mxu0
        %v596 = vadd.f32 0.0, %v595
        %v597 = vpop.f32.mrb[0].mxu0
        %v598 = vpop.f32.mrb[0].mxu0
        %v599 = vadd.f32 0.0, %v598
        %v600 = vpop.f32.mrb[0].mxu0
        %601 = vdwg.mxu0
        %v602 = vadd.f32 %v361, %v540
        %v603 = vadd.f32 %v362, %v543
        %v604 = vadd.f32 %v363, %v548
        %v605 = vadd.f32 %v364, %v551
        %v606 = vadd.f32 %v365, %v556
        %v607 = vadd.f32 %v366, %v559
        %v608 = vadd.f32 %v367, %v564
        %v609 = vadd.f32 %v368, %v567
        %v610 = vadd.f32 %v369, %v572
        %v611 = vadd.f32 %v370, %v575
        %v612 = vadd.f32 %v371, %v580
        %v613 = vadd.f32 %v372, %v583
        %v614 = vadd.f32 %v373, %v588
        %v615 = vadd.f32 %v374, %v591
        %v616 = vadd.f32 %v375, %v596
        %v617 = vadd.f32 %v376, %v599
        %618 = vst [vmem:[#allocation2] sm:$0xff] %v602
        %619 = vst [vmem:[#allocation2 + $0x8] sm:$0xff] %v603
        %620 = vst [vmem:[#allocation2 + $0x10] sm:$0xff] %v604
        %621 = vst [vmem:[#allocation2 + $0x18] sm:$0xff] %v605
        %622 = vst [vmem:[#allocation2 + $0x20] sm:$0xff] %v606
        %623 = vst [vmem:[#allocation2 + $0x28] sm:$0xff] %v607
        %624 = vst [vmem:[#allocation2 + $0x30] sm:$0xff] %v608
        %625 = vst [vmem:[#allocation2 + $0x38] sm:$0xff] %v609
        %626 = vst [vmem:[#allocation2 + $0x40] sm:$0xff] %v610
        %627 = vst [vmem:[#allocation2 + $0x48] sm:$0xff] %v611
        %628 = vst [vmem:[#allocation2 + $0x50] sm:$0xff] %v612
        %629 = vst [vmem:[#allocation2 + $0x58] sm:$0xff] %v613
        %630 = vst [vmem:[#allocation2 + $0x60] sm:$0xff] %v614
        %631 = vst [vmem:[#allocation2 + $0x68] sm:$0xff] %v615
        %632 = vst [vmem:[#allocation2 + $0x70] sm:$0xff] %v616
        %633 = vst [vmem:[#allocation2 + $0x78] sm:$0xff] %v617
        %p634 = scmp.eq.s32.totalorder %s20, 1
        // Predicated region
        $region82: #{gcn_forward.8} parent=72 // pred_check
          %p635 = pneg %p634
        $region83: #{gcn_forward.8} parent=72 // pred_check_branch
          %637 = sbr.rel (%p635) target = $region85
        $region84: #{gcn_forward.8} parent=72 // pred_region
          %v638 = vld [vmem:[#allocation2] sm:$0xff]
          %v639 = vld [vmem:[#allocation2 + $0x8] sm:$0xff]
          %v640 = vld [vmem:[#allocation2 + $0x10] sm:$0xff]
          %v641 = vld [vmem:[#allocation2 + $0x18] sm:$0xff]
          %v642 = vld [vmem:[#allocation2 + $0x20] sm:$0xff]
          %v643 = vld [vmem:[#allocation2 + $0x28] sm:$0xff]
          %v644 = vld [vmem:[#allocation2 + $0x30] sm:$0xff]
          %v645 = vld [vmem:[#allocation2 + $0x38] sm:$0xff]
          %v646 = vld [vmem:[#allocation2 + $0x40] sm:$0xff]
          %v647 = vld [vmem:[#allocation2 + $0x48] sm:$0xff]
          %v648 = vld [vmem:[#allocation2 + $0x50] sm:$0xff]
          %v649 = vld [vmem:[#allocation2 + $0x58] sm:$0xff]
          %v650 = vld [vmem:[#allocation2 + $0x60] sm:$0xff]
          %v651 = vld [vmem:[#allocation2 + $0x68] sm:$0xff]
          %v652 = vld [vmem:[#allocation2 + $0x70] sm:$0xff]
          %v653 = vld [vmem:[#allocation2 + $0x78] sm:$0xff]
          %v654 = vld [vmem:[%s2] sm:$0x1]
          %v656 = vlaneseq
          %v657 = vshrl.u32 %v656, 7
          %v658 = vsub.s32 0, %v657
          %v659 = vrot.slane %v654, %v658
          %v661 = vadd.f32 %v638, %v659
          %v662 = vadd.f32 %v639, %v659
          %v663 = vadd.f32 %v640, %v659
          %v664 = vadd.f32 %v641, %v659
          %v665 = vadd.f32 %v642, %v659
          %v666 = vadd.f32 %v643, %v659
          %v667 = vadd.f32 %v644, %v659
          %v668 = vadd.f32 %v645, %v659
          %v669 = vadd.f32 %v646, %v659
          %v670 = vadd.f32 %v647, %v659
          %v671 = vadd.f32 %v648, %v659
          %v672 = vadd.f32 %v649, %v659
          %v673 = vadd.f32 %v650, %v659
          %v674 = vadd.f32 %v651, %v659
          %v675 = vadd.f32 %v652, %v659
          %v676 = vadd.f32 %v653, %v659
          %vm677 = vcmp.ge.f32.partialorder %v661, 0.0
          %vm678 = vcmp.ge.f32.partialorder %v662, 0.0
          %vm679 = vcmp.ge.f32.partialorder %v663, 0.0
          %vm680 = vcmp.ge.f32.partialorder %v664, 0.0
          %vm681 = vcmp.ge.f32.partialorder %v665, 0.0
          %vm682 = vcmp.ge.f32.partialorder %v666, 0.0
          %vm683 = vcmp.ge.f32.partialorder %v667, 0.0
          %vm684 = vcmp.ge.f32.partialorder %v668, 0.0
          %vm685 = vcmp.ge.f32.partialorder %v669, 0.0
          %vm686 = vcmp.ge.f32.partialorder %v670, 0.0
          %vm687 = vcmp.ge.f32.partialorder %v671, 0.0
          %vm688 = vcmp.ge.f32.partialorder %v672, 0.0
          %vm689 = vcmp.ge.f32.partialorder %v673, 0.0
          %vm690 = vcmp.ge.f32.partialorder %v674, 0.0
          %vm691 = vcmp.ge.f32.partialorder %v675, 0.0
          %vm692 = vcmp.ge.f32.partialorder %v676, 0.0
          %v693 = vmul.f32 %v661, 0.01
          %v694 = vmul.f32 %v662, 0.01
          %v695 = vmul.f32 %v663, 0.01
          %v696 = vmul.f32 %v664, 0.01
          %v697 = vmul.f32 %v665, 0.01
          %v698 = vmul.f32 %v666, 0.01
          %v699 = vmul.f32 %v667, 0.01
          %v700 = vmul.f32 %v668, 0.01
          %v701 = vmul.f32 %v669, 0.01
          %v702 = vmul.f32 %v670, 0.01
          %v703 = vmul.f32 %v671, 0.01
          %v704 = vmul.f32 %v672, 0.01
          %v705 = vmul.f32 %v673, 0.01
          %v706 = vmul.f32 %v674, 0.01
          %v707 = vmul.f32 %v675, 0.01
          %v708 = vmul.f32 %v676, 0.01
          %v709 = vsel %vm677, %v661, %v693
          %v710 = vsel %vm678, %v662, %v694
          %v711 = vsel %vm679, %v663, %v695
          %v712 = vsel %vm680, %v664, %v696
          %v713 = vsel %vm681, %v665, %v697
          %v714 = vsel %vm682, %v666, %v698
          %v715 = vsel %vm683, %v667, %v699
          %v716 = vsel %vm684, %v668, %v700
          %v717 = vsel %vm685, %v669, %v701
          %v718 = vsel %vm686, %v670, %v702
          %v719 = vsel %vm687, %v671, %v703
          %v720 = vsel %vm688, %v672, %v704
          %v721 = vsel %vm689, %v673, %v705
          %v722 = vsel %vm690, %v674, %v706
          %v723 = vsel %vm691, %v675, %v707
          %v724 = vsel %vm692, %v676, %v708
          %v725 = vpack.c.bf16 %v710, %v709
          %v726 = vpack.c.bf16 %v712, %v711
          %v727 = vpack.c.bf16 %v714, %v713
          %v728 = vpack.c.bf16 %v716, %v715
          %v729 = vpack.c.bf16 %v718, %v717
          %v730 = vpack.c.bf16 %v720, %v719
          %v731 = vpack.c.bf16 %v722, %v721
          %v732 = vpack.c.bf16 %v724, %v723
          %v733 = vld [vmem:[%s3] sm:$0xf]
          %v734 = vld [vmem:[%s3 + $0x4] sm:$0xf]
          %v735 = vld [vmem:[%s3 + $0x8] sm:$0xf]
          %v736 = vld [vmem:[%s3 + $0xc] sm:$0xf]
          %v737 = vld [vmem:[%s3 + $0x10] sm:$0xf]
          %v738 = vld [vmem:[%s3 + $0x14] sm:$0xf]
          %v739 = vld [vmem:[%s3 + $0x18] sm:$0xf]
          %v740 = vld [vmem:[%s3 + $0x1c] sm:$0xf]
          %v741 = vld [vmem:[%s3 + $0x20] sm:$0xf]
          %v742 = vld [vmem:[%s3 + $0x24] sm:$0xf]
          %v743 = vld [vmem:[%s3 + $0x28] sm:$0xf]
          %v744 = vld [vmem:[%s3 + $0x2c] sm:$0xf]
          %v745 = vld [vmem:[%s3 + $0x30] sm:$0xf]
          %v746 = vld [vmem:[%s3 + $0x34] sm:$0xf]
          %v747 = vld [vmem:[%s3 + $0x38] sm:$0xf]
          %v748 = vld [vmem:[%s3 + $0x3c] sm:$0xf]
          %v765 = vunpack.c.l.b16 %v733
          %v766 = vunpack.c.l.b16 %v734
          %v767 = vunpack.c.l.b16 %v735
          %v768 = vunpack.c.l.b16 %v736
          %v769 = vunpack.c.l.b16 %v737
          %v770 = vunpack.c.l.b16 %v738
          %v771 = vunpack.c.l.b16 %v739
          %v772 = vunpack.c.l.b16 %v740
          %v773 = vunpack.c.l.b16 %v741
          %v774 = vunpack.c.l.b16 %v742
          %v775 = vunpack.c.l.b16 %v743
          %v776 = vunpack.c.l.b16 %v744
          %v777 = vunpack.c.l.b16 %v745
          %v778 = vunpack.c.l.b16 %v746
          %v779 = vunpack.c.l.b16 %v747
          %v780 = vunpack.c.l.b16 %v748
          %v781 = vpack.c.b16 %v766, %v765
          %v782 = vpack.c.b16 %v768, %v767
          %v783 = vpack.c.b16 %v770, %v769
          %v784 = vpack.c.b16 %v772, %v771
          %v785 = vpack.c.b16 %v774, %v773
          %v786 = vpack.c.b16 %v776, %v775
          %v787 = vpack.c.b16 %v778, %v777
          %v788 = vpack.c.b16 %v780, %v779
          %797 = vmatprep.subr.bf16.mxu0 0
          %798 = vmatpush1.bf16.msra.mxu0 %v781
          %799 = vmatprep.subr.bf16.mxu0 0
          %800 = vmatpush1.bf16.msra.mxu0 %v782
          %801 = vmatprep.subr.bf16.mxu0 0
          %802 = vmatpush1.bf16.msra.mxu0 %v783
          %803 = vmatprep.subr.bf16.mxu0 0
          %804 = vmatpush1.bf16.msra.mxu0 %v784
          %805 = vmatprep.subr.bf16.mxu0 0
          %806 = vmatpush1.bf16.msra.mxu0 %v785
          %807 = vmatprep.subr.bf16.mxu0 0
          %808 = vmatpush1.bf16.msra.mxu0 %v786
          %809 = vmatprep.subr.bf16.mxu0 0
          %810 = vmatpush1.bf16.msra.mxu0 %v787
          %811 = vmatprep.subr.bf16.mxu0 0
          %812 = vmatpush1.bf16.msra.mxu0 %v788
          %813 = vmatprep.subr.bf16.mxu0 0
          %814 = vmatpush1.bf16.msra.mxu0 0
          %815 = vmatprep.subr.bf16.mxu0 0
          %816 = vmatpush1.bf16.msra.mxu0 0
          %817 = vmatprep.subr.bf16.mxu0 0
          %818 = vmatpush1.bf16.msra.mxu0 0
          %819 = vmatprep.subr.bf16.mxu0 0
          %820 = vmatpush1.bf16.msra.mxu0 0
          %821 = vmatprep.subr.bf16.mxu0 0
          %822 = vmatpush1.bf16.msra.mxu0 0
          %823 = vmatprep.subr.bf16.mxu0 0
          %824 = vmatpush1.bf16.msra.mxu0 0
          %825 = vmatprep.subr.bf16.mxu0 0
          %826 = vmatpush1.bf16.msra.mxu0 0
          %827 = vmatprep.subr.bf16.mxu0 0
          %828 = vmatpush1.bf16.msra.mxu0 0
          %829 = vmatprep.mubr.bf16.mxu0 0
          %830 = vmatmul.mubr.bf16.gmra.mrb[0].mxu0 %v725
          %v831 = vpop.f32.mrb[0].mxu0
          %v832 = vadd.f32 0.0, %v831
          %v833 = vpop.f32.mrb[0].mxu0
          %v834 = vpop.f32.mrb[0].mxu0
          %v835 = vadd.f32 0.0, %v834
          %v836 = vpop.f32.mrb[0].mxu0
          %837 = vmatprep.mubr.bf16.mxu0 0
          %838 = vmatmul.mubr.bf16.gmra.mrb[0].mxu0 %v726
          %v839 = vpop.f32.mrb[0].mxu0
          %v840 = vadd.f32 0.0, %v839
          %v841 = vpop.f32.mrb[0].mxu0
          %v842 = vpop.f32.mrb[0].mxu0
          %v843 = vadd.f32 0.0, %v842
          %v844 = vpop.f32.mrb[0].mxu0
          %845 = vmatprep.mubr.bf16.mxu0 0
          %846 = vmatmul.mubr.bf16.gmra.mrb[0].mxu0 %v727
          %v847 = vpop.f32.mrb[0].mxu0
          %v848 = vadd.f32 0.0, %v847
          %v849 = vpop.f32.mrb[0].mxu0
          %v850 = vpop.f32.mrb[0].mxu0
          %v851 = vadd.f32 0.0, %v850
          %v852 = vpop.f32.mrb[0].mxu0
          %853 = vmatprep.mubr.bf16.mxu0 0
          %854 = vmatmul.mubr.bf16.gmra.mrb[0].mxu0 %v728
          %v855 = vpop.f32.mrb[0].mxu0
          %v856 = vadd.f32 0.0, %v855
          %v857 = vpop.f32.mrb[0].mxu0
          %v858 = vpop.f32.mrb[0].mxu0
          %v859 = vadd.f32 0.0, %v858
          %v860 = vpop.f32.mrb[0].mxu0
          %861 = vmatprep.mubr.bf16.mxu0 0
          %862 = vmatmul.mubr.bf16.gmra.mrb[0].mxu0 %v729
          %v863 = vpop.f32.mrb[0].mxu0
          %v864 = vadd.f32 0.0, %v863
          %v865 = vpop.f32.mrb[0].mxu0
          %v866 = vpop.f32.mrb[0].mxu0
          %v867 = vadd.f32 0.0, %v866
          %v868 = vpop.f32.mrb[0].mxu0
          %869 = vmatprep.mubr.bf16.mxu0 0
          %870 = vmatmul.mubr.bf16.gmra.mrb[0].mxu0 %v730
          %v871 = vpop.f32.mrb[0].mxu0
          %v872 = vadd.f32 0.0, %v871
          %v873 = vpop.f32.mrb[0].mxu0
          %v874 = vpop.f32.mrb[0].mxu0
          %v875 = vadd.f32 0.0, %v874
          %v876 = vpop.f32.mrb[0].mxu0
          %877 = vmatprep.mubr.bf16.mxu0 0
          %878 = vmatmul.mubr.bf16.gmra.mrb[0].mxu0 %v731
          %v879 = vpop.f32.mrb[0].mxu0
          %v880 = vadd.f32 0.0, %v879
          %v881 = vpop.f32.mrb[0].mxu0
          %v882 = vpop.f32.mrb[0].mxu0
          %v883 = vadd.f32 0.0, %v882
          %v884 = vpop.f32.mrb[0].mxu0
          %885 = vmatprep.mubr.bf16.mxu0 0
          %886 = vmatmul.mubr.bf16.gmra.mrb[0].mxu0 %v732
          %v887 = vpop.f32.mrb[0].mxu0
          %v888 = vadd.f32 0.0, %v887
          %v889 = vpop.f32.mrb[0].mxu0
          %v890 = vpop.f32.mrb[0].mxu0
          %v891 = vadd.f32 0.0, %v890
          %v892 = vpop.f32.mrb[0].mxu0
          %893 = vdwg.mxu0
          %v894 = vpack.c.bf16 %v835, %v832
          %v895 = vpack.c.bf16 %v843, %v840
          %v896 = vpack.c.bf16 %v851, %v848
          %v897 = vpack.c.bf16 %v859, %v856
          %v898 = vpack.c.bf16 %v867, %v864
          %v899 = vpack.c.bf16 %v875, %v872
          %v900 = vpack.c.bf16 %v883, %v880
          %v901 = vpack.c.bf16 %v891, %v888
          %v910 = vunpack.c.l.b16 %v894
          %v911 = vunpack.c.h.b16 %v894
          %v912 = vunpack.c.l.b16 %v895
          %v913 = vunpack.c.h.b16 %v895
          %v914 = vunpack.c.l.b16 %v896
          %v915 = vunpack.c.h.b16 %v896
          %v916 = vunpack.c.l.b16 %v897
          %v917 = vunpack.c.h.b16 %v897
          %v918 = vunpack.c.l.b16 %v898
          %v919 = vunpack.c.h.b16 %v898
          %v920 = vunpack.c.l.b16 %v899
          %v921 = vunpack.c.h.b16 %v899
          %v922 = vunpack.c.l.b16 %v900
          %v923 = vunpack.c.h.b16 %v900
          %v924 = vunpack.c.l.b16 %v901
          %v925 = vunpack.c.h.b16 %v901
          %v926 = vpack.c.b16 %v910, %v910
          %v927 = vpack.c.b16 %v911, %v911
          %v928 = vpack.c.b16 %v912, %v912
          %v929 = vpack.c.b16 %v913, %v913
          %v930 = vpack.c.b16 %v914, %v914
          %v931 = vpack.c.b16 %v915, %v915
          %v932 = vpack.c.b16 %v916, %v916
          %v933 = vpack.c.b16 %v917, %v917
          %v934 = vpack.c.b16 %v918, %v918
          %v935 = vpack.c.b16 %v919, %v919
          %v936 = vpack.c.b16 %v920, %v920
          %v937 = vpack.c.b16 %v921, %v921
          %v938 = vpack.c.b16 %v922, %v922
          %v939 = vpack.c.b16 %v923, %v923
          %v940 = vpack.c.b16 %v924, %v924
          %v941 = vpack.c.b16 %v925, %v925
          %958 = vst [vmem:[%s338] sm:$0xf] %v926
          %959 = vst [vmem:[%s338 + $0x4] sm:$0xf] %v927
          %960 = vst [vmem:[%s338 + $0x8] sm:$0xf] %v928
          %961 = vst [vmem:[%s338 + $0xc] sm:$0xf] %v929
          %962 = vst [vmem:[%s338 + $0x10] sm:$0xf] %v930
          %963 = vst [vmem:[%s338 + $0x14] sm:$0xf] %v931
          %964 = vst [vmem:[%s338 + $0x18] sm:$0xf] %v932
          %965 = vst [vmem:[%s338 + $0x1c] sm:$0xf] %v933
          %966 = vst [vmem:[%s338 + $0x20] sm:$0xf] %v934
          %967 = vst [vmem:[%s338 + $0x24] sm:$0xf] %v935
          %968 = vst [vmem:[%s338 + $0x28] sm:$0xf] %v936
          %969 = vst [vmem:[%s338 + $0x2c] sm:$0xf] %v937
          %970 = vst [vmem:[%s338 + $0x30] sm:$0xf] %v938
          %971 = vst [vmem:[%s338 + $0x34] sm:$0xf] %v939
          %972 = vst [vmem:[%s338 + $0x38] sm:$0xf] %v940
          %973 = vst [vmem:[%s338 + $0x3c] sm:$0xf] %v941
        $region85: #{gcn_forward.8} parent=72 // pred_fallthru
          _
        %s974 = smul.u32 16, %s19
        %p975 = scmp.lt.s32.totalorder %s974, 31
        %s976 = scalar_select %p975, %s974, 31
        %s977 = smul.addr %s976, 4
        %s978 = scalar_lea.vmem %s4, %s977
        // Predicated region
        $region86: #{gcn_forward.8} parent=72 // pred_check
          %p979 = pneg %p141
        $region87: #{gcn_forward.8} parent=72 // pred_check_branch
          %981 = sbr.rel (%p979) target = $region89
        $region88: #{gcn_forward.8} parent=72 // pred_region
          %s982 = smul.u32 16, %s19
        $region89: #{gcn_forward.8} parent=72 // pred_fallthru
          _
      $region73: #{gcn_forward.8} parent=5 // pred_fallthru
        _
      %p983 = scmp.le.s32.totalorder 2, %s10
      // Predicated region
      $region90: #{gcn_forward.8} parent=5 // pred_check
        %p984 = pneg %p983
      $region91: #{gcn_forward.8} parent=5 // pred_check_branch
        %986 = sbr.rel (%p984) target = $region93
      $region92: #{gcn_forward.8} parent=5 // pred_region
        %s987 = ssub.s32 %s10, 2
        // Predicated region
        $region94: #{gcn_forward.8} parent=92 // pred_check
          %p988 = pneg %p147
        $region95: #{gcn_forward.8} parent=92 // pred_check_branch
          %990 = sbr.rel (%p988) target = $region97
        $region96: #{gcn_forward.8} parent=92 // pred_region
          %s991 = smul.u32 16, %s21
          %p992 = scmp.lt.s32.totalorder %s991, 31
          %s993 = scalar_select %p992, %s991, 31
          %s994 = smul.addr %s993, 4
          %s995 = scalar_lea.vmem %s4, %s994
        $region97: #{gcn_forward.8} parent=92 // pred_fallthru
          _
      $region93: #{gcn_forward.8} parent=5 // pred_fallthru
        _
    $region6: #{gcn_forward.8} parent=1 // loop_footer
      %s14 = sadd.s32 1, %s10
    $region7: #{gcn_forward.8} parent=1 // loop_footer_branch
      %9 = sbr.rel target = $region3
    $region8: #{gcn_forward.8} parent=1 // loop_exit
      _

// kernel: gcn_forward.11
$region0: #{gcn_forward.11}
  #allocation0 [shape = 'u32[]', space=smem, size = 0x4, offset = 0x4, fixed_abs, tag = 'smem constant byte address 0x4 - core index']
  #allocation1 [shape = 'u32[144,128]{1,0:T(1,128)}', space=vmem, size = 0x12000, scoped, tag = 'internal scratch']
  #allocation2 [shape = 'f32[128,128]{1,0:T(8,128)}', space=vmem, size = 0x10000, scoped, tag = 'scratch operand']
  %s0 = inlined_call_operand.vmem [shape: bf16[256,256], index: 0, kind: input, shape index: {}]
  %s1 = inlined_call_operand.vmem [shape: bf16[256,128], index: 1, kind: input, shape index: {}]
  %s2 = inlined_call_operand.vmem [shape: f32[1,128], index: 2, kind: input, shape index: {}]
  %s3 = inlined_call_operand.vmem [shape: f32[256,128], index: 3, kind: output, shape index: {}]
  %s4 = sld [smem:[#allocation0]]
  $region94: #{gcn_forward.11} parent=0
    _
  %s6 = ssub.s32 1, %s4
  %s7 = scalar_select 0, %s6, %s4
  $region1: #{gcn_forward.11} parent=0
    #allocation3 [shape = 'u8[65536]{0}', space=vmem, size = 0x10000, scoped, tag = 'input window, operand 0']
    loop: start=0, step=1, limit=6
    $region2: #{gcn_forward.11} parent=1 // loop_pre_header
      _
    $region3: #{gcn_forward.11} parent=1 // loop_header
      %s9 = sphi 0, %s13
      %p10 = scmp.ge.s32.totalorder %s9, 6
      %s16 = sphi 0, %s28
      %s17 = sphi 0, %s24
      %s18 = sphi 0, %s16
      %s19 = sphi 0, %s17
      %s20 = sphi 0, %s18
      %s21 = sphi 0, %s19
      %s33 = sphi 0, %s35
      %s36 = sphi 0, %s33
      %s37 = sphi 0, %s36
      %s53 = sphi 0, %s37
      %s59 = sphi 0, %s61
      %s62 = sphi 0, %s59
      %s63 = sphi 0, %s62
      %s79 = sphi 0, %s63
      %s83 = sphi 0, %s83
      %s85 = sphi 0, %s83
      %s86 = sphi 0, %s85
      %s100 = sphi 0, %s86
      %s106 = sphi 0, %s108
      %s109 = sphi 0, %s106
      %s110 = sphi 0, %s109
      %s126 = sphi 0, %s110
    $region4: #{gcn_forward.11} parent=1 // loop_header_branch
      %12 = sbr.rel (%p10) target = $region8
    $region5: #{gcn_forward.11} parent=1 // loop_body
      %s14 = ssub.s32 %s9, 1
      %s15 = ssub.s32 %s9, 2
      %s22 = sadd.s32 1, %s17
      %p23 = scmp.ge.s32.totalorder %s22, 2
      %s24 = scalar_select %p23, 0, %s22
      %s25 = sadd.s32 1, %s16
      %s26 = scalar_select %p23, %s25, %s16
      %p27 = scmp.ge.s32.totalorder %s26, 2
      %s28 = scalar_select %p27, 0, %s26
      %s29 = ssub.s32 %s16, %s28
      %s30 = ssub.s32 %s17, %s24
      %s31 = sor.u32 %s29, %s30
      %p32 = scmp.eq.s32.totalorder %s31, 0
      %s34 = sadd.s32 %s33, 1
      %s35 = scalar_select %p32, %s33, %s34
      %p38 = pneg %p32
      %p39 = scmp.eq.s32.totalorder %s9, 3
      %p40 = por %p38, %p39
      %p41 = scmp.ne.s32.totalorder %s33, %s36
      %p42 = scmp.eq.s32.totalorder %s9, 0
      %p43 = por %p41, %p42
      %p44 = scmp.ne.s32.totalorder %s33, %s36
      %p45 = scmp.eq.s32.totalorder %s14, 3
      %p46 = por %p44, %p45
      %p47 = scmp.ne.s32.totalorder %s36, %s37
      %p48 = scmp.eq.s32.totalorder %s14, 0
      %p49 = por %p47, %p48
      %p50 = scmp.ne.s32.totalorder %s36, %s37
      %p51 = scmp.eq.s32.totalorder %s15, 3
      %p52 = por %p50, %p51
      %p54 = scmp.ne.s32.totalorder %s37, %s53
      %p55 = scmp.eq.s32.totalorder %s15, 0
      %p56 = por %p54, %p55
      %s57 = ssub.s32 %s17, %s24
      %p58 = scmp.eq.s32.totalorder %s57, 0
      %s60 = sadd.s32 %s59, 1
      %s61 = scalar_select %p58, %s59, %s60
      %p64 = pneg %p58
      %p65 = scmp.eq.s32.totalorder %s9, 3
      %p66 = por %p64, %p65
      %p67 = scmp.ne.s32.totalorder %s59, %s62
      %p68 = scmp.eq.s32.totalorder %s9, 0
      %p69 = por %p67, %p68
      %p70 = scmp.ne.s32.totalorder %s59, %s62
      %p71 = scmp.eq.s32.totalorder %s14, 3
      %p72 = por %p70, %p71
      %p73 = scmp.ne.s32.totalorder %s62, %s63
      %p74 = scmp.eq.s32.totalorder %s14, 0
      %p75 = por %p73, %p74
      %p76 = scmp.ne.s32.totalorder %s62, %s63
      %p77 = scmp.eq.s32.totalorder %s15, 3
      %p78 = por %p76, %p77
      %p80 = scmp.ne.s32.totalorder %s63, %s79
      %p81 = scmp.eq.s32.totalorder %s15, 0
      %p82 = por %p80, %p81
      %s84 = sadd.s32 %s83, 1
      %p87 = scmp.eq.s32.totalorder %s9, 3
      %p88 = scmp.ne.s32.totalorder %s83, %s85
      %p89 = scmp.eq.s32.totalorder %s9, 0
      %p90 = por %p88, %p89
      %p91 = scmp.ne.s32.totalorder %s83, %s85
      %p92 = scmp.eq.s32.totalorder %s14, 3
      %p93 = por %p91, %p92
      %p94 = scmp.ne.s32.totalorder %s85, %s86
      %p95 = scmp.eq.s32.totalorder %s14, 0
      %p96 = por %p94, %p95
      %p97 = scmp.ne.s32.totalorder %s85, %s86
      %p98 = scmp.eq.s32.totalorder %s15, 3
      %p99 = por %p97, %p98
      %p101 = scmp.ne.s32.totalorder %s86, %s100
      %p102 = scmp.eq.s32.totalorder %s15, 0
      %p103 = por %p101, %p102
      %s104 = ssub.s32 %s16, %s28
      %p105 = scmp.eq.s32.totalorder %s104, 0
      %s107 = sadd.s32 %s106, 1
      %s108 = scalar_select %p105, %s106, %s107
      %p111 = pneg %p105
      %p112 = scmp.eq.s32.totalorder %s9, 3
      %p113 = por %p111, %p112
      %p114 = scmp.ne.s32.totalorder %s106, %s109
      %p115 = scmp.eq.s32.totalorder %s9, 0
      %p116 = por %p114, %p115
      %p117 = scmp.ne.s32.totalorder %s106, %s109
      %p118 = scmp.eq.s32.totalorder %s14, 3
      %p119 = por %p117, %p118
      %p120 = scmp.ne.s32.totalorder %s109, %s110
      %p121 = scmp.eq.s32.totalorder %s14, 0
      %p122 = por %p120, %p121
      %p123 = scmp.ne.s32.totalorder %s109, %s110
      %p124 = scmp.eq.s32.totalorder %s15, 3
      %p125 = por %p123, %p124
      %p127 = scmp.ne.s32.totalorder %s110, %s126
      %p128 = scmp.eq.s32.totalorder %s15, 0
      %p129 = por %p127, %p128
      %p130 = scmp.le.s32.totalorder 1, %s9
      %p131 = scmp.lt.s32.totalorder %s9, 5
      %p132 = pnand %p130, %p131
      %p133 = pneg %p132
      // Predicated region
      $region9: #{gcn_forward.11} parent=5 // pred_check
        _
      $region10: #{gcn_forward.11} parent=5 // pred_check_branch
        %135 = sbr.rel (%p132) target = $region12
      $region11: #{gcn_forward.11} parent=5 // pred_region
        %s136 = ssub.s32 %s9, 1
        // Predicated region
        $region13: #{gcn_forward.11} parent=11 // pred_check
          %p137 = pneg %p96
        $region14: #{gcn_forward.11} parent=11 // pred_check_branch
          %139 = sbr.rel (%p137) target = $region16
        $region15: #{gcn_forward.11} parent=11 // pred_region
          _
        $region16: #{gcn_forward.11} parent=11 // pred_fallthru
          _
      $region12: #{gcn_forward.11} parent=5 // pred_fallthru
        _
      %p140 = scmp.lt.s32.totalorder %s9, 4
      // Predicated region
      $region17: #{gcn_forward.11} parent=5 // pred_check
        %p141 = pneg %p140
      $region18: #{gcn_forward.11} parent=5 // pred_check_branch
        %143 = sbr.rel (%p141) target = $region20
      $region19: #{gcn_forward.11} parent=5 // pred_region
        // Predicated region
        $region21: #{gcn_forward.11} parent=19 // pred_check
          %p144 = pneg %p43
        $region22: #{gcn_forward.11} parent=19 // pred_check_branch
          %146 = sbr.rel (%p144) target = $region24
        $region23: #{gcn_forward.11} parent=19 // pred_region
          %s147 = sand.u32 %s33, 1
          %s148 = sand.u32 %s33, 1
          %s149 = smul.addr %s148, 64
          %s150 = scalar_lea.vmem [#allocation3], %s149
          %s151 = smul.u32 16, %s16
          %s152 = smul.addr %s151, 2
          %s153 = sadd.s32 %s17, %s152
          %s154 = smul.addr %s153, 4
          %s155 = scalar_lea.vmem %s0, %s154
          // Predicated region
          $region25: #{gcn_forward.11} parent=23 // pred_check
            _
          $region26: #{gcn_forward.11} parent=23 // pred_check_branch
            %157 = sbr.rel (0) target = $region28
          $region27: #{gcn_forward.11} parent=23 // pred_region
            // Predicated region
            $region29: #{gcn_forward.11} parent=27 // pred_check
              _
            $region30: #{gcn_forward.11} parent=27 // pred_check_branch
              %159 = sbr.rel target = $region32
            $region31: #{gcn_forward.11} parent=27 // pred_region
              // Predicated region
              $region44: #{gcn_forward.11} parent=31 // pred_check
                _
              $region45: #{gcn_forward.11} parent=31 // pred_check_branch
                %204 = sbr.rel (0) target = $region47
              $region46: #{gcn_forward.11} parent=31 // pred_region
                loop: start=0, step=1, limit=1
                $region48: #{gcn_forward.11} parent=46 // loop_pre_header
                  _
                $region49: #{gcn_forward.11} parent=46 // loop_header
                  %s206 = sphi 0, %s210
                  %p207 = scmp.ge.s32.totalorder %s206, 1
                  %s211 = sphi %s155, %s155
                  %s212 = sphi %s150, %s150
                $region50: #{gcn_forward.11} parent=46 // loop_header_branch
                  %209 = sbr.rel (%p207) target = $region54
                $region51: #{gcn_forward.11} parent=46 // loop_body
                  _
                $region52: #{gcn_forward.11} parent=46 // loop_footer
                  %s210 = sadd.s32 1, %s206
                $region53: #{gcn_forward.11} parent=46 // loop_footer_branch
                  %205 = sbr.rel target = $region49
                $region54: #{gcn_forward.11} parent=46 // loop_exit
                  _
                loop: start=0, step=1, limit=1
                $region55: #{gcn_forward.11} parent=46 // loop_pre_header
                  _
                $region56: #{gcn_forward.11} parent=46 // loop_header
                  %s215 = sphi 0, %s219
                  %p216 = scmp.ge.s32.totalorder %s215, 1
                  %s220 = sphi %s155, %s155
                  %s221 = sphi %s150, %s150
                $region57: #{gcn_forward.11} parent=46 // loop_header_branch
                  %218 = sbr.rel (%p216) target = $region61
                $region58: #{gcn_forward.11} parent=46 // loop_body
                  %v222 = vld [vmem:[%s220] sm:$0xf]
                  %223 = vst [vmem:[%s221] sm:$0xf] %v222
                  %v224 = vld [vmem:[%s220 + $0x8] sm:$0xf]
                  %225 = vst [vmem:[%s221 + $0x4] sm:$0xf] %v224
                  %v226 = vld [vmem:[%s220 + $0x10] sm:$0xf]
                  %227 = vst [vmem:[%s221 + $0x8] sm:$0xf] %v226
                  %v228 = vld [vmem:[%s220 + $0x18] sm:$0xf]
                  %229 = vst [vmem:[%s221 + $0xc] sm:$0xf] %v228
                  %v230 = vld [vmem:[%s220 + $0x20] sm:$0xf]
                  %231 = vst [vmem:[%s221 + $0x10] sm:$0xf] %v230
                  %v232 = vld [vmem:[%s220 + $0x28] sm:$0xf]
                  %233 = vst [vmem:[%s221 + $0x14] sm:$0xf] %v232
                  %v234 = vld [vmem:[%s220 + $0x30] sm:$0xf]
                  %235 = vst [vmem:[%s221 + $0x18] sm:$0xf] %v234
                  %v236 = vld [vmem:[%s220 + $0x38] sm:$0xf]
                  %237 = vst [vmem:[%s221 + $0x1c] sm:$0xf] %v236
                  %v238 = vld [vmem:[%s220 + $0x40] sm:$0xf]
                  %239 = vst [vmem:[%s221 + $0x20] sm:$0xf] %v238
                  %v240 = vld [vmem:[%s220 + $0x48] sm:$0xf]
                  %241 = vst [vmem:[%s221 + $0x24] sm:$0xf] %v240
                  %v242 = vld [vmem:[%s220 + $0x50] sm:$0xf]
                  %243 = vst [vmem:[%s221 + $0x28] sm:$0xf] %v242
                  %v244 = vld [vmem:[%s220 + $0x58] sm:$0xf]
                  %245 = vst [vmem:[%s221 + $0x2c] sm:$0xf] %v244
                  %v246 = vld [vmem:[%s220 + $0x60] sm:$0xf]
                  %247 = vst [vmem:[%s221 + $0x30] sm:$0xf] %v246
                  %v248 = vld [vmem:[%s220 + $0x68] sm:$0xf]
                  %249 = vst [vmem:[%s221 + $0x34] sm:$0xf] %v248
                  %v250 = vld [vmem:[%s220 + $0x70] sm:$0xf]
                  %251 = vst [vmem:[%s221 + $0x38] sm:$0xf] %v250
                  %v252 = vld [vmem:[%s220 + $0x78] sm:$0xf]
                  %253 = vst [vmem:[%s221 + $0x3c] sm:$0xf] %v252
                $region59: #{gcn_forward.11} parent=46 // loop_footer
                  %s219 = sadd.s32 1, %s215
                $region60: #{gcn_forward.11} parent=46 // loop_footer_branch
                  %214 = sbr.rel target = $region56
                $region61: #{gcn_forward.11} parent=46 // loop_exit
                  _
              $region47: #{gcn_forward.11} parent=31 // pred_fallthru
                _
            $region32: #{gcn_forward.11} parent=27 // pred_fallthru
              _
            // Predicated region
            $region33: #{gcn_forward.11} parent=27 // pred_check
              _
            $region34: #{gcn_forward.11} parent=27 // pred_check_branch
              %161 = sbr.rel (0) target = $region36
            $region35: #{gcn_forward.11} parent=27 // pred_region
              loop: start=0, step=1, limit=1
              $region37: #{gcn_forward.11} parent=35 // loop_pre_header
                _
              $region38: #{gcn_forward.11} parent=35 // loop_header
                %s164 = sphi 0, %s168
                %p165 = scmp.ge.s32.totalorder %s164, 1
                %s169 = sphi %s155, %s155
                %s170 = sphi %s150, %s150
              $region39: #{gcn_forward.11} parent=35 // loop_header_branch
                %167 = sbr.rel (%p165) target = $region43
              $region40: #{gcn_forward.11} parent=35 // loop_body
                %v171 = vld [vmem:[%s169] sm:$0xf]
                %172 = vst [vmem:[%s170] sm:$0xf] %v171
                %v173 = vld [vmem:[%s169 + $0x8] sm:$0xf]
                %174 = vst [vmem:[%s170 + $0x4] sm:$0xf] %v173
                %v175 = vld [vmem:[%s169 + $0x10] sm:$0xf]
                %176 = vst [vmem:[%s170 + $0x8] sm:$0xf] %v175
                %v177 = vld [vmem:[%s169 + $0x18] sm:$0xf]
                %178 = vst [vmem:[%s170 + $0xc] sm:$0xf] %v177
                %v179 = vld [vmem:[%s169 + $0x20] sm:$0xf]
                %180 = vst [vmem:[%s170 + $0x10] sm:$0xf] %v179
                %v181 = vld [vmem:[%s169 + $0x28] sm:$0xf]
                %182 = vst [vmem:[%s170 + $0x14] sm:$0xf] %v181
                %v183 = vld [vmem:[%s169 + $0x30] sm:$0xf]
                %184 = vst [vmem:[%s170 + $0x18] sm:$0xf] %v183
                %v185 = vld [vmem:[%s169 + $0x38] sm:$0xf]
                %186 = vst [vmem:[%s170 + $0x1c] sm:$0xf] %v185
                %v187 = vld [vmem:[%s169 + $0x40] sm:$0xf]
                %188 = vst [vmem:[%s170 + $0x20] sm:$0xf] %v187
                %v189 = vld [vmem:[%s169 + $0x48] sm:$0xf]
                %190 = vst [vmem:[%s170 + $0x24] sm:$0xf] %v189
                %v191 = vld [vmem:[%s169 + $0x50] sm:$0xf]
                %192 = vst [vmem:[%s170 + $0x28] sm:$0xf] %v191
                %v193 = vld [vmem:[%s169 + $0x58] sm:$0xf]
                %194 = vst [vmem:[%s170 + $0x2c] sm:$0xf] %v193
                %v195 = vld [vmem:[%s169 + $0x60] sm:$0xf]
                %196 = vst [vmem:[%s170 + $0x30] sm:$0xf] %v195
                %v197 = vld [vmem:[%s169 + $0x68] sm:$0xf]
                %198 = vst [vmem:[%s170 + $0x34] sm:$0xf] %v197
                %v199 = vld [vmem:[%s169 + $0x70] sm:$0xf]
                %200 = vst [vmem:[%s170 + $0x38] sm:$0xf] %v199
                %v201 = vld [vmem:[%s169 + $0x78] sm:$0xf]
                %202 = vst [vmem:[%s170 + $0x3c] sm:$0xf] %v201
              $region41: #{gcn_forward.11} parent=35 // loop_footer
                %s168 = sadd.s32 1, %s164
              $region42: #{gcn_forward.11} parent=35 // loop_footer_branch
                %163 = sbr.rel target = $region38
              $region43: #{gcn_forward.11} parent=35 // loop_exit
                _
            $region36: #{gcn_forward.11} parent=27 // pred_fallthru
              _
          $region28: #{gcn_forward.11} parent=23 // pred_fallthru
            _
          %254 = vnop
        $region24: #{gcn_forward.11} parent=19 // pred_fallthru
          _
        // Predicated region
        $region62: #{gcn_forward.11} parent=19 // pred_check
          %p255 = pneg %p69
        $region63: #{gcn_forward.11} parent=19 // pred_check_branch
          %257 = sbr.rel (%p255) target = $region65
        $region64: #{gcn_forward.11} parent=19 // pred_region
          %s258 = smul.u32 16, %s17
          %p259 = scmp.lt.s32.totalorder %s258, 31
          %s260 = scalar_select %p259, %s258, 31
          %s261 = smul.addr %s260, 4
          %s262 = scalar_lea.vmem %s1, %s261
          %s263 = smul.u32 16, %s17
        $region65: #{gcn_forward.11} parent=19 // pred_fallthru
          _
      $region20: #{gcn_forward.11} parent=5 // pred_fallthru
        _
      %p264 = scmp.le.s32.totalorder 1, %s9
      %p265 = scmp.lt.s32.totalorder %s9, 5
      %p266 = pnand %p264, %p265
      %p267 = pneg %p266
      // Predicated region
      $region66: #{gcn_forward.11} parent=5 // pred_check
        _
      $region67: #{gcn_forward.11} parent=5 // pred_check_branch
        %269 = sbr.rel (%p266) target = $region69
      $region68: #{gcn_forward.11} parent=5 // pred_region
        %s270 = ssub.s32 %s9, 1
        %s271 = sand.u32 %s36, 1
        %s272 = sand.u32 %s36, 1
        %s273 = smul.addr %s272, 64
        %s274 = scalar_lea.vmem [#allocation3], %s273
        // Predicated region
        $region70: #{gcn_forward.11} parent=68 // pred_check
          %p275 = pneg %p49
        $region71: #{gcn_forward.11} parent=68 // pred_check_branch
          %277 = sbr.rel (%p275) target = $region73
        $region72: #{gcn_forward.11} parent=68 // pred_region
          _
        $region73: #{gcn_forward.11} parent=68 // pred_fallthru
          _
        %s278 = sand.u32 %s36, 1
        %s279 = sand.u32 %s36, 1
        %s280 = smul.addr %s279, 64
        %s281 = scalar_lea.vmem [#allocation3], %s280
        %p282 = pneg %p49
        %p283 = pneg %p46
        %s284 = smul.u32 16, %s19
        %p285 = scmp.lt.s32.totalorder %s284, 31
        %s286 = scalar_select %p285, %s284, 31
        %s287 = smul.addr %s286, 4
        %s288 = scalar_lea.vmem %s1, %s287
        %p289 = pneg %p75
        %p290 = pneg %p72
        %p291 = pneg %p96
        %p292 = pneg %p93
        %p293 = pneg %p122
        %p294 = pneg %p119
        %s295 = smul.u32 16, %s18
        %p296 = scmp.lt.s32.totalorder %s295, 31
        %s297 = scalar_select %p296, %s295, 31
        %s298 = smul.addr %s297, 8
        %s299 = scalar_lea.vmem %s3, %s298
        %s300 = smul.u32 16, %s18
        %s301 = smul.u32 16, %s19
        %p302 = scmp.lt.s32.totalorder %s301, 31
        %s303 = scalar_select %p302, %s301, 31
        %s304 = smul.addr %s303, 4
        %s305 = scalar_lea.vmem %s1, %s304
        %s306 = smul.u32 16, %s19
        %s307 = smul.u32 16, %s18
        %p308 = scmp.lt.s32.totalorder %s307, 31
        %s309 = scalar_select %p308, %s307, 31
        %s310 = smul.addr %s309, 8
        %s311 = scalar_lea.vmem %s3, %s310
        %s312 = smul.u32 16, %s18
        %p314 = scmp.eq.s32.totalorder %s19, 0
        // Predicated region
        $region74: #{gcn_forward.11} parent=68 // pred_check
          %p315 = pneg %p314
        $region75: #{gcn_forward.11} parent=68 // pred_check_branch
          %317 = sbr.rel (%p315) target = $region77
        $region76: #{gcn_forward.11} parent=68 // pred_region
          %318 = vst [vmem:[#allocation2] sm:$0xff] 0.0
          %319 = vst [vmem:[#allocation2 + $0x8] sm:$0xff] 0.0
          %320 = vst [vmem:[#allocation2 + $0x10] sm:$0xff] 0.0
          %321 = vst [vmem:[#allocation2 + $0x18] sm:$0xff] 0.0
          %322 = vst [vmem:[#allocation2 + $0x20] sm:$0xff] 0.0
          %323 = vst [vmem:[#allocation2 + $0x28] sm:$0xff] 0.0
          %324 = vst [vmem:[#allocation2 + $0x30] sm:$0xff] 0.0
          %325 = vst [vmem:[#allocation2 + $0x38] sm:$0xff] 0.0
          %326 = vst [vmem:[#allocation2 + $0x40] sm:$0xff] 0.0
          %327 = vst [vmem:[#allocation2 + $0x48] sm:$0xff] 0.0
          %328 = vst [vmem:[#allocation2 + $0x50] sm:$0xff] 0.0
          %329 = vst [vmem:[#allocation2 + $0x58] sm:$0xff] 0.0
          %330 = vst [vmem:[#allocation2 + $0x60] sm:$0xff] 0.0
          %331 = vst [vmem:[#allocation2 + $0x68] sm:$0xff] 0.0
          %332 = vst [vmem:[#allocation2 + $0x70] sm:$0xff] 0.0
          %333 = vst [vmem:[#allocation2 + $0x78] sm:$0xff] 0.0
        $region77: #{gcn_forward.11} parent=68 // pred_fallthru
          _
        %v334 = vld [vmem:[#allocation2] sm:$0xff]
        %v335 = vld [vmem:[#allocation2 + $0x8] sm:$0xff]
        %v336 = vld [vmem:[#allocation2 + $0x10] sm:$0xff]
        %v337 = vld [vmem:[#allocation2 + $0x18] sm:$0xff]
        %v338 = vld [vmem:[#allocation2 + $0x20] sm:$0xff]
        %v339 = vld [vmem:[#allocation2 + $0x28] sm:$0xff]
        %v340 = vld [vmem:[#allocation2 + $0x30] sm:$0xff]
        %v341 = vld [vmem:[#allocation2 + $0x38] sm:$0xff]
        %v342 = vld [vmem:[#allocation2 + $0x40] sm:$0xff]
        %v343 = vld [vmem:[#allocation2 + $0x48] sm:$0xff]
        %v344 = vld [vmem:[#allocation2 + $0x50] sm:$0xff]
        %v345 = vld [vmem:[#allocation2 + $0x58] sm:$0xff]
        %v346 = vld [vmem:[#allocation2 + $0x60] sm:$0xff]
        %v347 = vld [vmem:[#allocation2 + $0x68] sm:$0xff]
        %v348 = vld [vmem:[#allocation2 + $0x70] sm:$0xff]
        %v349 = vld [vmem:[#allocation2 + $0x78] sm:$0xff]
        %v350 = vld [vmem:[%s274] sm:$0xf]
        %v351 = vld [vmem:[%s274 + $0x4] sm:$0xf]
        %v352 = vld [vmem:[%s274 + $0x8] sm:$0xf]
        %v353 = vld [vmem:[%s274 + $0xc] sm:$0xf]
        %v354 = vld [vmem:[%s274 + $0x10] sm:$0xf]
        %v355 = vld [vmem:[%s274 + $0x14] sm:$0xf]
        %v356 = vld [vmem:[%s274 + $0x18] sm:$0xf]
        %v357 = vld [vmem:[%s274 + $0x1c] sm:$0xf]
        %v358 = vld [vmem:[%s274 + $0x20] sm:$0xf]
        %v359 = vld [vmem:[%s274 + $0x24] sm:$0xf]
        %v360 = vld [vmem:[%s274 + $0x28] sm:$0xf]
        %v361 = vld [vmem:[%s274 + $0x2c] sm:$0xf]
        %v362 = vld [vmem:[%s274 + $0x30] sm:$0xf]
        %v363 = vld [vmem:[%s274 + $0x34] sm:$0xf]
        %v364 = vld [vmem:[%s274 + $0x38] sm:$0xf]
        %v365 = vld [vmem:[%s274 + $0x3c] sm:$0xf]
        %v366 = vld [vmem:[%s305] sm:$0xf]
        %v367 = vld [vmem:[%s305 + $0x4] sm:$0xf]
        %v368 = vld [vmem:[%s305 + $0x8] sm:$0xf]
        %v369 = vld [vmem:[%s305 + $0xc] sm:$0xf]
        %v370 = vld [vmem:[%s305 + $0x10] sm:$0xf]
        %v371 = vld [vmem:[%s305 + $0x14] sm:$0xf]
        %v372 = vld [vmem:[%s305 + $0x18] sm:$0xf]
        %v373 = vld [vmem:[%s305 + $0x1c] sm:$0xf]
        %v374 = vld [vmem:[%s305 + $0x20] sm:$0xf]
        %v375 = vld [vmem:[%s305 + $0x24] sm:$0xf]
        %v376 = vld [vmem:[%s305 + $0x28] sm:$0xf]
        %v377 = vld [vmem:[%s305 + $0x2c] sm:$0xf]
        %v378 = vld [vmem:[%s305 + $0x30] sm:$0xf]
        %v379 = vld [vmem:[%s305 + $0x34] sm:$0xf]
        %v380 = vld [vmem:[%s305 + $0x38] sm:$0xf]
        %v381 = vld [vmem:[%s305 + $0x3c] sm:$0xf]
        %v398 = vunpack.c.l.b16 %v350
        %v399 = vunpack.c.l.b16 %v351
        %v400 = vunpack.c.l.b16 %v352
        %v401 = vunpack.c.l.b16 %v353
        %v402 = vunpack.c.l.b16 %v354
        %v403 = vunpack.c.l.b16 %v355
        %v404 = vunpack.c.l.b16 %v356
        %v405 = vunpack.c.l.b16 %v357
        %v406 = vunpack.c.l.b16 %v358
        %v407 = vunpack.c.l.b16 %v359
        %v408 = vunpack.c.l.b16 %v360
        %v409 = vunpack.c.l.b16 %v361
        %v410 = vunpack.c.l.b16 %v362
        %v411 = vunpack.c.l.b16 %v363
        %v412 = vunpack.c.l.b16 %v364
        %v413 = vunpack.c.l.b16 %v365
        %v414 = vpack.c.b16 %v399, %v398
        %v415 = vpack.c.b16 %v401, %v400
        %v416 = vpack.c.b16 %v403, %v402
        %v417 = vpack.c.b16 %v405, %v404
        %v418 = vpack.c.b16 %v407, %v406
        %v419 = vpack.c.b16 %v409, %v408
        %v420 = vpack.c.b16 %v411, %v410
        %v421 = vpack.c.b16 %v413, %v412
        %v446 = vunpack.c.l.b16 %v366
        %v447 = vunpack.c.l.b16 %v367
        %v448 = vunpack.c.l.b16 %v368
        %v449 = vunpack.c.l.b16 %v369
        %v450 = vunpack.c.l.b16 %v370
        %v451 = vunpack.c.l.b16 %v371
        %v452 = vunpack.c.l.b16 %v372
        %v453 = vunpack.c.l.b16 %v373
        %v454 = vunpack.c.l.b16 %v374
        %v455 = vunpack.c.l.b16 %v375
        %v456 = vunpack.c.l.b16 %v376
        %v457 = vunpack.c.l.b16 %v377
        %v458 = vunpack.c.l.b16 %v378
        %v459 = vunpack.c.l.b16 %v379
        %v460 = vunpack.c.l.b16 %v380
        %v461 = vunpack.c.l.b16 %v381
        %v462 = vpack.c.b16 %v447, %v446
        %v463 = vpack.c.b16 %v449, %v448
        %v464 = vpack.c.b16 %v451, %v450
        %v465 = vpack.c.b16 %v453, %v452
        %v466 = vpack.c.b16 %v455, %v454
        %v467 = vpack.c.b16 %v457, %v456
        %v468 = vpack.c.b16 %v459, %v458
        %v469 = vpack.c.b16 %v461, %v460
        %478 = vmatprep.subr.bf16.mxu0 0
        %479 = vmatpush1.bf16.msra.mxu0 %v462
        %480 = vmatprep.subr.bf16.mxu0 0
        %481 = vmatpush1.bf16.msra.mxu0 %v463
        %482 = vmatprep.subr.bf16.mxu0 0
        %483 = vmatpush1.bf16.msra.mxu0 %v464
        %484 = vmatprep.subr.bf16.mxu0 0
        %485 = vmatpush1.bf16.msra.mxu0 %v465
        %486 = vmatprep.subr.bf16.mxu0 0
        %487 = vmatpush1.bf16.msra.mxu0 %v466
        %488 = vmatprep.subr.bf16.mxu0 0
        %489 = vmatpush1.bf16.msra.mxu0 %v467
        %490 = vmatprep.subr.bf16.mxu0 0
        %491 = vmatpush1.bf16.msra.mxu0 %v468
        %492 = vmatprep.subr.bf16.mxu0 0
        %493 = vmatpush1.bf16.msra.mxu0 %v469
        %494 = vmatprep.subr.bf16.mxu0 0
        %495 = vmatpush1.bf16.msra.mxu0 0
        %496 = vmatprep.subr.bf16.mxu0 0
        %497 = vmatpush1.bf16.msra.mxu0 0
        %498 = vmatprep.subr.bf16.mxu0 0
        %499 = vmatpush1.bf16.msra.mxu0 0
        %500 = vmatprep.subr.bf16.mxu0 0
        %501 = vmatpush1.bf16.msra.mxu0 0
        %502 = vmatprep.subr.bf16.mxu0 0
        %503 = vmatpush1.bf16.msra.mxu0 0
        %504 = vmatprep.subr.bf16.mxu0 0
        %505 = vmatpush1.bf16.msra.mxu0 0
        %506 = vmatprep.subr.bf16.mxu0 0
        %507 = vmatpush1.bf16.msra.mxu0 0
        %508 = vmatprep.subr.bf16.mxu0 0
        %509 = vmatpush1.bf16.msra.mxu0 0
        %510 = vmatprep.mubr.bf16.mxu0 0
        %511 = vmatmul.mubr.bf16.gmra.mrb[0].mxu0 %v414
        %v512 = vpop.f32.mrb[0].mxu0
        %v513 = vadd.f32 0.0, %v512
        %v514 = vpop.f32.mrb[0].mxu0
        %v515 = vpop.f32.mrb[0].mxu0
        %v516 = vadd.f32 0.0, %v515
        %v517 = vpop.f32.mrb[0].mxu0
        %518 = vmatprep.mubr.bf16.mxu0 0
        %519 = vmatmul.mubr.bf16.gmra.mrb[0].mxu0 %v415
        %v520 = vpop.f32.mrb[0].mxu0
        %v521 = vadd.f32 0.0, %v520
        %v522 = vpop.f32.mrb[0].mxu0
        %v523 = vpop.f32.mrb[0].mxu0
        %v524 = vadd.f32 0.0, %v523
        %v525 = vpop.f32.mrb[0].mxu0
        %526 = vmatprep.mubr.bf16.mxu0 0
        %527 = vmatmul.mubr.bf16.gmra.mrb[0].mxu0 %v416
        %v528 = vpop.f32.mrb[0].mxu0
        %v529 = vadd.f32 0.0, %v528
        %v530 = vpop.f32.mrb[0].mxu0
        %v531 = vpop.f32.mrb[0].mxu0
        %v532 = vadd.f32 0.0, %v531
        %v533 = vpop.f32.mrb[0].mxu0
        %534 = vmatprep.mubr.bf16.mxu0 0
        %535 = vmatmul.mubr.bf16.gmra.mrb[0].mxu0 %v417
        %v536 = vpop.f32.mrb[0].mxu0
        %v537 = vadd.f32 0.0, %v536
        %v538 = vpop.f32.mrb[0].mxu0
        %v539 = vpop.f32.mrb[0].mxu0
        %v540 = vadd.f32 0.0, %v539
        %v541 = vpop.f32.mrb[0].mxu0
        %542 = vmatprep.mubr.bf16.mxu0 0
        %543 = vmatmul.mubr.bf16.gmra.mrb[0].mxu0 %v418
        %v544 = vpop.f32.mrb[0].mxu0
        %v545 = vadd.f32 0.0, %v544
        %v546 = vpop.f32.mrb[0].mxu0
        %v547 = vpop.f32.mrb[0].mxu0
        %v548 = vadd.f32 0.0, %v547
        %v549 = vpop.f32.mrb[0].mxu0
        %550 = vmatprep.mubr.bf16.mxu0 0
        %551 = vmatmul.mubr.bf16.gmra.mrb[0].mxu0 %v419
        %v552 = vpop.f32.mrb[0].mxu0
        %v553 = vadd.f32 0.0, %v552
        %v554 = vpop.f32.mrb[0].mxu0
        %v555 = vpop.f32.mrb[0].mxu0
        %v556 = vadd.f32 0.0, %v555
        %v557 = vpop.f32.mrb[0].mxu0
        %558 = vmatprep.mubr.bf16.mxu0 0
        %559 = vmatmul.mubr.bf16.gmra.mrb[0].mxu0 %v420
        %v560 = vpop.f32.mrb[0].mxu0
        %v561 = vadd.f32 0.0, %v560
        %v562 = vpop.f32.mrb[0].mxu0
        %v563 = vpop.f32.mrb[0].mxu0
        %v564 = vadd.f32 0.0, %v563
        %v565 = vpop.f32.mrb[0].mxu0
        %566 = vmatprep.mubr.bf16.mxu0 0
        %567 = vmatmul.mubr.bf16.gmra.mrb[0].mxu0 %v421
        %v568 = vpop.f32.mrb[0].mxu0
        %v569 = vadd.f32 0.0, %v568
        %v570 = vpop.f32.mrb[0].mxu0
        %v571 = vpop.f32.mrb[0].mxu0
        %v572 = vadd.f32 0.0, %v571
        %v573 = vpop.f32.mrb[0].mxu0
        %574 = vdwg.mxu0
        %v575 = vadd.f32 %v334, %v513
        %v576 = vadd.f32 %v335, %v516
        %v577 = vadd.f32 %v336, %v521
        %v578 = vadd.f32 %v337, %v524
        %v579 = vadd.f32 %v338, %v529
        %v580 = vadd.f32 %v339, %v532
        %v581 = vadd.f32 %v340, %v537
        %v582 = vadd.f32 %v341, %v540
        %v583 = vadd.f32 %v342, %v545
        %v584 = vadd.f32 %v343, %v548
        %v585 = vadd.f32 %v344, %v553
        %v586 = vadd.f32 %v345, %v556
        %v587 = vadd.f32 %v346, %v561
        %v588 = vadd.f32 %v347, %v564
        %v589 = vadd.f32 %v348, %v569
        %v590 = vadd.f32 %v349, %v572
        %591 = vst [vmem:[#allocation2] sm:$0xff] %v575
        %592 = vst [vmem:[#allocation2 + $0x8] sm:$0xff] %v576
        %593 = vst [vmem:[#allocation2 + $0x10] sm:$0xff] %v577
        %594 = vst [vmem:[#allocation2 + $0x18] sm:$0xff] %v578
        %595 = vst [vmem:[#allocation2 + $0x20] sm:$0xff] %v579
        %596 = vst [vmem:[#allocation2 + $0x28] sm:$0xff] %v580
        %597 = vst [vmem:[#allocation2 + $0x30] sm:$0xff] %v581
        %598 = vst [vmem:[#allocation2 + $0x38] sm:$0xff] %v582
        %599 = vst [vmem:[#allocation2 + $0x40] sm:$0xff] %v583
        %600 = vst [vmem:[#allocation2 + $0x48] sm:$0xff] %v584
        %601 = vst [vmem:[#allocation2 + $0x50] sm:$0xff] %v585
        %602 = vst [vmem:[#allocation2 + $0x58] sm:$0xff] %v586
        %603 = vst [vmem:[#allocation2 + $0x60] sm:$0xff] %v587
        %604 = vst [vmem:[#allocation2 + $0x68] sm:$0xff] %v588
        %605 = vst [vmem:[#allocation2 + $0x70] sm:$0xff] %v589
        %606 = vst [vmem:[#allocation2 + $0x78] sm:$0xff] %v590
        %p607 = scmp.eq.s32.totalorder %s19, 1
        // Predicated region
        $region78: #{gcn_forward.11} parent=68 // pred_check
          %p608 = pneg %p607
        $region79: #{gcn_forward.11} parent=68 // pred_check_branch
          %610 = sbr.rel (%p608) target = $region81
        $region80: #{gcn_forward.11} parent=68 // pred_region
          %v611 = vld [vmem:[#allocation2] sm:$0xff]
          %v612 = vld [vmem:[#allocation2 + $0x8] sm:$0xff]
          %v613 = vld [vmem:[#allocation2 + $0x10] sm:$0xff]
          %v614 = vld [vmem:[#allocation2 + $0x18] sm:$0xff]
          %v615 = vld [vmem:[#allocation2 + $0x20] sm:$0xff]
          %v616 = vld [vmem:[#allocation2 + $0x28] sm:$0xff]
          %v617 = vld [vmem:[#allocation2 + $0x30] sm:$0xff]
          %v618 = vld [vmem:[#allocation2 + $0x38] sm:$0xff]
          %v619 = vld [vmem:[#allocation2 + $0x40] sm:$0xff]
          %v620 = vld [vmem:[#allocation2 + $0x48] sm:$0xff]
          %v621 = vld [vmem:[#allocation2 + $0x50] sm:$0xff]
          %v622 = vld [vmem:[#allocation2 + $0x58] sm:$0xff]
          %v623 = vld [vmem:[#allocation2 + $0x60] sm:$0xff]
          %v624 = vld [vmem:[#allocation2 + $0x68] sm:$0xff]
          %v625 = vld [vmem:[#allocation2 + $0x70] sm:$0xff]
          %v626 = vld [vmem:[#allocation2 + $0x78] sm:$0xff]
          %v627 = vld [vmem:[%s2] sm:$0x1]
          %v629 = vlaneseq
          %v630 = vshrl.u32 %v629, 7
          %v631 = vsub.s32 0, %v630
          %v632 = vrot.slane %v627, %v631
          %v634 = vadd.f32 %v611, %v632
          %v635 = vadd.f32 %v612, %v632
          %v636 = vadd.f32 %v613, %v632
          %v637 = vadd.f32 %v614, %v632
          %v638 = vadd.f32 %v615, %v632
          %v639 = vadd.f32 %v616, %v632
          %v640 = vadd.f32 %v617, %v632
          %v641 = vadd.f32 %v618, %v632
          %v642 = vadd.f32 %v619, %v632
          %v643 = vadd.f32 %v620, %v632
          %v644 = vadd.f32 %v621, %v632
          %v645 = vadd.f32 %v622, %v632
          %v646 = vadd.f32 %v623, %v632
          %v647 = vadd.f32 %v624, %v632
          %v648 = vadd.f32 %v625, %v632
          %v649 = vadd.f32 %v626, %v632
          %vm650 = vcmp.ge.f32.partialorder %v634, 0.0
          %vm651 = vcmp.ge.f32.partialorder %v635, 0.0
          %vm652 = vcmp.ge.f32.partialorder %v636, 0.0
          %vm653 = vcmp.ge.f32.partialorder %v637, 0.0
          %vm654 = vcmp.ge.f32.partialorder %v638, 0.0
          %vm655 = vcmp.ge.f32.partialorder %v639, 0.0
          %vm656 = vcmp.ge.f32.partialorder %v640, 0.0
          %vm657 = vcmp.ge.f32.partialorder %v641, 0.0
          %vm658 = vcmp.ge.f32.partialorder %v642, 0.0
          %vm659 = vcmp.ge.f32.partialorder %v643, 0.0
          %vm660 = vcmp.ge.f32.partialorder %v644, 0.0
          %vm661 = vcmp.ge.f32.partialorder %v645, 0.0
          %vm662 = vcmp.ge.f32.partialorder %v646, 0.0
          %vm663 = vcmp.ge.f32.partialorder %v647, 0.0
          %vm664 = vcmp.ge.f32.partialorder %v648, 0.0
          %vm665 = vcmp.ge.f32.partialorder %v649, 0.0
          %v666 = vmul.f32 %v634, 0.01
          %v667 = vmul.f32 %v635, 0.01
          %v668 = vmul.f32 %v636, 0.01
          %v669 = vmul.f32 %v637, 0.01
          %v670 = vmul.f32 %v638, 0.01
          %v671 = vmul.f32 %v639, 0.01
          %v672 = vmul.f32 %v640, 0.01
          %v673 = vmul.f32 %v641, 0.01
          %v674 = vmul.f32 %v642, 0.01
          %v675 = vmul.f32 %v643, 0.01
          %v676 = vmul.f32 %v644, 0.01
          %v677 = vmul.f32 %v645, 0.01
          %v678 = vmul.f32 %v646, 0.01
          %v679 = vmul.f32 %v647, 0.01
          %v680 = vmul.f32 %v648, 0.01
          %v681 = vmul.f32 %v649, 0.01
          %v682 = vsel %vm650, %v634, %v666
          %v683 = vsel %vm651, %v635, %v667
          %v684 = vsel %vm652, %v636, %v668
          %v685 = vsel %vm653, %v637, %v669
          %v686 = vsel %vm654, %v638, %v670
          %v687 = vsel %vm655, %v639, %v671
          %v688 = vsel %vm656, %v640, %v672
          %v689 = vsel %vm657, %v641, %v673
          %v690 = vsel %vm658, %v642, %v674
          %v691 = vsel %vm659, %v643, %v675
          %v692 = vsel %vm660, %v644, %v676
          %v693 = vsel %vm661, %v645, %v677
          %v694 = vsel %vm662, %v646, %v678
          %v695 = vsel %vm663, %v647, %v679
          %v696 = vsel %vm664, %v648, %v680
          %v697 = vsel %vm665, %v649, %v681
          %v698 = vlaneseq
          %v699 = vand.u32 %v698, 127
          %vm700 = vcmp.lt.s32.totalorder %v699, 32
          %v701 = vsel %vm700, %v682, -1e+30
          %v702 = vsel %vm700, %v683, -1e+30
          %v703 = vsel %vm700, %v684, -1e+30
          %v704 = vsel %vm700, %v685, -1e+30
          %v705 = vsel %vm700, %v686, -1e+30
          %v706 = vsel %vm700, %v687, -1e+30
          %v707 = vsel %vm700, %v688, -1e+30
          %v708 = vsel %vm700, %v689, -1e+30
          %v709 = vsel %vm700, %v690, -1e+30
          %v710 = vsel %vm700, %v691, -1e+30
          %v711 = vsel %vm700, %v692, -1e+30
          %v712 = vsel %vm700, %v693, -1e+30
          %v713 = vsel %vm700, %v694, -1e+30
          %v714 = vsel %vm700, %v695, -1e+30
          %v715 = vsel %vm700, %v696, -1e+30
          %v716 = vsel %vm700, %v697, -1e+30
          %717 = vmax.xlane.f32.xlu0 %v701
          %v718 = vpop.xlane.xlu0 %717
          %719 = vmax.xlane.f32.xlu0 %v702
          %v720 = vpop.xlane.xlu0 %719
          %721 = vmax.xlane.f32.xlu0 %v703
          %v722 = vpop.xlane.xlu0 %721
          %723 = vmax.xlane.f32.xlu0 %v704
          %v724 = vpop.xlane.xlu0 %723
          %725 = vmax.xlane.f32.xlu0 %v705
          %v726 = vpop.xlane.xlu0 %725
          %727 = vmax.xlane.f32.xlu0 %v706
          %v728 = vpop.xlane.xlu0 %727
          %729 = vmax.xlane.f32.xlu0 %v707
          %v730 = vpop.xlane.xlu0 %729
          %731 = vmax.xlane.f32.xlu0 %v708
          %v732 = vpop.xlane.xlu0 %731
          %733 = vmax.xlane.f32.xlu0 %v709
          %v734 = vpop.xlane.xlu0 %733
          %735 = vmax.xlane.f32.xlu0 %v710
          %v736 = vpop.xlane.xlu0 %735
          %737 = vmax.xlane.f32.xlu0 %v711
          %v738 = vpop.xlane.xlu0 %737
          %739 = vmax.xlane.f32.xlu0 %v712
          %v740 = vpop.xlane.xlu0 %739
          %741 = vmax.xlane.f32.xlu0 %v713
          %v742 = vpop.xlane.xlu0 %741
          %743 = vmax.xlane.f32.xlu0 %v714
          %v744 = vpop.xlane.xlu0 %743
          %745 = vmax.xlane.f32.xlu0 %v715
          %v746 = vpop.xlane.xlu0 %745
          %747 = vmax.xlane.f32.xlu0 %v716
          %v748 = vpop.xlane.xlu0 %747
          %v749 = vsub.f32 %v701, %v718
          %v750 = vsub.f32 %v702, %v720
          %v751 = vsub.f32 %v703, %v722
          %v752 = vsub.f32 %v704, %v724
          %v753 = vsub.f32 %v705, %v726
          %v754 = vsub.f32 %v706, %v728
          %v755 = vsub.f32 %v707, %v730
          %v756 = vsub.f32 %v708, %v732
          %v757 = vsub.f32 %v709, %v734
          %v758 = vsub.f32 %v710, %v736
          %v759 = vsub.f32 %v711, %v738
          %v760 = vsub.f32 %v712, %v740
          %v761 = vsub.f32 %v713, %v742
          %v762 = vsub.f32 %v714, %v744
          %v763 = vsub.f32 %v715, %v746
          %v764 = vsub.f32 %v716, %v748
          %v765 = vmul.f32 %v749, 1.442695
          %v766 = vpow.pop %v765
          %v767 = vmul.f32 %v750, 1.442695
          %v768 = vpow.pop %v767
          %v769 = vmul.f32 %v751, 1.442695
          %v770 = vpow.pop %v769
          %v771 = vmul.f32 %v752, 1.442695
          %v772 = vpow.pop %v771
          %v773 = vmul.f32 %v753, 1.442695
          %v774 = vpow.pop %v773
          %v775 = vmul.f32 %v754, 1.442695
          %v776 = vpow.pop %v775
          %v777 = vmul.f32 %v755, 1.442695
          %v778 = vpow.pop %v777
          %v779 = vmul.f32 %v756, 1.442695
          %v780 = vpow.pop %v779
          %v781 = vmul.f32 %v757, 1.442695
          %v782 = vpow.pop %v781
          %v783 = vmul.f32 %v758, 1.442695
          %v784 = vpow.pop %v783
          %v785 = vmul.f32 %v759, 1.442695
          %v786 = vpow.pop %v785
          %v787 = vmul.f32 %v760, 1.442695
          %v788 = vpow.pop %v787
          %v789 = vmul.f32 %v761, 1.442695
          %v790 = vpow.pop %v789
          %v791 = vmul.f32 %v762, 1.442695
          %v792 = vpow.pop %v791
          %v793 = vmul.f32 %v763, 1.442695
          %v794 = vpow.pop %v793
          %v795 = vmul.f32 %v764, 1.442695
          %v796 = vpow.pop %v795
          %v797 = vsel %vm700, %v766, 0.0
          %v798 = vsel %vm700, %v768, 0.0
          %v799 = vsel %vm700, %v770, 0.0
          %v800 = vsel %vm700, %v772, 0.0
          %v801 = vsel %vm700, %v774, 0.0
          %v802 = vsel %vm700, %v776, 0.0
          %v803 = vsel %vm700, %v778, 0.0
          %v804 = vsel %vm700, %v780, 0.0
          %v805 = vsel %vm700, %v782, 0.0
          %v806 = vsel %vm700, %v784, 0.0
          %v807 = vsel %vm700, %v786, 0.0
          %v808 = vsel %vm700, %v788, 0.0
          %v809 = vsel %vm700, %v790, 0.0
          %v810 = vsel %vm700, %v792, 0.0
          %v811 = vsel %vm700, %v794, 0.0
          %v812 = vsel %vm700, %v796, 0.0
          %813 = vadd.xlane.f32.xlu0 %v797
          %v814 = vpop.xlane.xlu0 %813
          %815 = vadd.xlane.f32.xlu0 %v798
          %v816 = vpop.xlane.xlu0 %815
          %817 = vadd.xlane.f32.xlu0 %v799
          %v818 = vpop.xlane.xlu0 %817
          %819 = vadd.xlane.f32.xlu0 %v800
          %v820 = vpop.xlane.xlu0 %819
          %821 = vadd.xlane.f32.xlu0 %v801
          %v822 = vpop.xlane.xlu0 %821
          %823 = vadd.xlane.f32.xlu0 %v802
          %v824 = vpop.xlane.xlu0 %823
          %825 = vadd.xlane.f32.xlu0 %v803
          %v826 = vpop.xlane.xlu0 %825
          %827 = vadd.xlane.f32.xlu0 %v804
          %v828 = vpop.xlane.xlu0 %827
          %829 = vadd.xlane.f32.xlu0 %v805
          %v830 = vpop.xlane.xlu0 %829
          %831 = vadd.xlane.f32.xlu0 %v806
          %v832 = vpop.xlane.xlu0 %831
          %833 = vadd.xlane.f32.xlu0 %v807
          %v834 = vpop.xlane.xlu0 %833
          %835 = vadd.xlane.f32.xlu0 %v808
          %v836 = vpop.xlane.xlu0 %835
          %837 = vadd.xlane.f32.xlu0 %v809
          %v838 = vpop.xlane.xlu0 %837
          %839 = vadd.xlane.f32.xlu0 %v810
          %v840 = vpop.xlane.xlu0 %839
          %841 = vadd.xlane.f32.xlu0 %v811
          %v842 = vpop.xlane.xlu0 %841
          %843 = vadd.xlane.f32.xlu0 %v812
          %v844 = vpop.xlane.xlu0 %843
          %v845 = vrcp.pop %v814
          %v846 = vmul.f32 %v797, %v845
          %v847 = vrcp.pop %v816
          %v848 = vmul.f32 %v798, %v847
          %v849 = vrcp.pop %v818
          %v850 = vmul.f32 %v799, %v849
          %v851 = vrcp.pop %v820
          %v852 = vmul.f32 %v800, %v851
          %v853 = vrcp.pop %v822
          %v854 = vmul.f32 %v801, %v853
          %v855 = vrcp.pop %v824
          %v856 = vmul.f32 %v802, %v855
          %v857 = vrcp.pop %v826
          %v858 = vmul.f32 %v803, %v857
          %v859 = vrcp.pop %v828
          %v860 = vmul.f32 %v804, %v859
          %v861 = vrcp.pop %v830
          %v862 = vmul.f32 %v805, %v861
          %v863 = vrcp.pop %v832
          %v864 = vmul.f32 %v806, %v863
          %v865 = vrcp.pop %v834
          %v866 = vmul.f32 %v807, %v865
          %v867 = vrcp.pop %v836
          %v868 = vmul.f32 %v808, %v867
          %v869 = vrcp.pop %v838
          %v870 = vmul.f32 %v809, %v869
          %v871 = vrcp.pop %v840
          %v872 = vmul.f32 %v810, %v871
          %v873 = vrcp.pop %v842
          %v874 = vmul.f32 %v811, %v873
          %v875 = vrcp.pop %v844
          %v876 = vmul.f32 %v812, %v875
          %877 = vmax.xlane.f32.xlu0 %v846
          %v878 = vpop.xlane.xlu0 %877
          %879 = vmax.xlane.f32.xlu0 %v848
          %v880 = vpop.xlane.xlu0 %879
          %881 = vmax.xlane.f32.xlu0 %v850
          %v882 = vpop.xlane.xlu0 %881
          %883 = vmax.xlane.f32.xlu0 %v852
          %v884 = vpop.xlane.xlu0 %883
          %885 = vmax.xlane.f32.xlu0 %v854
          %v886 = vpop.xlane.xlu0 %885
          %887 = vmax.xlane.f32.xlu0 %v856
          %v888 = vpop.xlane.xlu0 %887
          %889 = vmax.xlane.f32.xlu0 %v858
          %v890 = vpop.xlane.xlu0 %889
          %891 = vmax.xlane.f32.xlu0 %v860
          %v892 = vpop.xlane.xlu0 %891
          %893 = vmax.xlane.f32.xlu0 %v862
          %v894 = vpop.xlane.xlu0 %893
          %895 = vmax.xlane.f32.xlu0 %v864
          %v896 = vpop.xlane.xlu0 %895
          %897 = vmax.xlane.f32.xlu0 %v866
          %v898 = vpop.xlane.xlu0 %897
          %899 = vmax.xlane.f32.xlu0 %v868
          %v900 = vpop.xlane.xlu0 %899
          %901 = vmax.xlane.f32.xlu0 %v870
          %v902 = vpop.xlane.xlu0 %901
          %903 = vmax.xlane.f32.xlu0 %v872
          %v904 = vpop.xlane.xlu0 %903
          %905 = vmax.xlane.f32.xlu0 %v874
          %v906 = vpop.xlane.xlu0 %905
          %907 = vmax.xlane.f32.xlu0 %v876
          %v908 = vpop.xlane.xlu0 %907
          %v909 = vrcp.pop %v878
          %v910 = vmul.f32 %v846, %v909
          %v911 = vrcp.pop %v880
          %v912 = vmul.f32 %v848, %v911
          %v913 = vrcp.pop %v882
          %v914 = vmul.f32 %v850, %v913
          %v915 = vrcp.pop %v884
          %v916 = vmul.f32 %v852, %v915
          %v917 = vrcp.pop %v886
          %v918 = vmul.f32 %v854, %v917
          %v919 = vrcp.pop %v888
          %v920 = vmul.f32 %v856, %v919
          %v921 = vrcp.pop %v890
          %v922 = vmul.f32 %v858, %v921
          %v923 = vrcp.pop %v892
          %v924 = vmul.f32 %v860, %v923
          %v925 = vrcp.pop %v894
          %v926 = vmul.f32 %v862, %v925
          %v927 = vrcp.pop %v896
          %v928 = vmul.f32 %v864, %v927
          %v929 = vrcp.pop %v898
          %v930 = vmul.f32 %v866, %v929
          %v931 = vrcp.pop %v900
          %v932 = vmul.f32 %v868, %v931
          %v933 = vrcp.pop %v902
          %v934 = vmul.f32 %v870, %v933
          %v935 = vrcp.pop %v904
          %v936 = vmul.f32 %v872, %v935
          %v937 = vrcp.pop %v906
          %v938 = vmul.f32 %v874, %v937
          %v939 = vrcp.pop %v908
          %v940 = vmul.f32 %v876, %v939
          %941 = vst [vmem:[%s311] sm:$0xff] %v910
          %942 = vst [vmem:[%s311 + $0x8] sm:$0xff] %v912
          %943 = vst [vmem:[%s311 + $0x10] sm:$0xff] %v914
          %944 = vst [vmem:[%s311 + $0x18] sm:$0xff] %v916
          %945 = vst [vmem:[%s311 + $0x20] sm:$0xff] %v918
          %946 = vst [vmem:[%s311 + $0x28] sm:$0xff] %v920
          %947 = vst [vmem:[%s311 + $0x30] sm:$0xff] %v922
          %948 = vst [vmem:[%s311 + $0x38] sm:$0xff] %v924
          %949 = vst [vmem:[%s311 + $0x40] sm:$0xff] %v926
          %950 = vst [vmem:[%s311 + $0x48] sm:$0xff] %v928
          %951 = vst [vmem:[%s311 + $0x50] sm:$0xff] %v930
          %952 = vst [vmem:[%s311 + $0x58] sm:$0xff] %v932
          %953 = vst [vmem:[%s311 + $0x60] sm:$0xff] %v934
          %954 = vst [vmem:[%s311 + $0x68] sm:$0xff] %v936
          %955 = vst [vmem:[%s311 + $0x70] sm:$0xff] %v938
          %956 = vst [vmem:[%s311 + $0x78] sm:$0xff] %v940
        $region81: #{gcn_forward.11} parent=68 // pred_fallthru
          _
        %s957 = smul.u32 16, %s18
        %p958 = scmp.lt.s32.totalorder %s957, 31
        %s959 = scalar_select %p958, %s957, 31
        %s960 = smul.addr %s959, 8
        %s961 = scalar_lea.vmem %s3, %s960
        // Predicated region
        $region82: #{gcn_forward.11} parent=68 // pred_check
          %p962 = pneg %p119
        $region83: #{gcn_forward.11} parent=68 // pred_check_branch
          %964 = sbr.rel (%p962) target = $region85
        $region84: #{gcn_forward.11} parent=68 // pred_region
          %s965 = smul.u32 16, %s18
        $region85: #{gcn_forward.11} parent=68 // pred_fallthru
          _
      $region69: #{gcn_forward.11} parent=5 // pred_fallthru
        _
      %p966 = scmp.le.s32.totalorder 2, %s9
      // Predicated region
      $region86: #{gcn_forward.11} parent=5 // pred_check
        %p967 = pneg %p966
      $region87: #{gcn_forward.11} parent=5 // pred_check_branch
        %969 = sbr.rel (%p967) target = $region89
      $region88: #{gcn_forward.11} parent=5 // pred_region
        %s970 = ssub.s32 %s9, 2
        // Predicated region
        $region90: #{gcn_forward.11} parent=88 // pred_check
          %p971 = pneg %p125
        $region91: #{gcn_forward.11} parent=88 // pred_check_branch
          %973 = sbr.rel (%p971) target = $region93
        $region92: #{gcn_forward.11} parent=88 // pred_region
          %s974 = smul.u32 16, %s20
          %p975 = scmp.lt.s32.totalorder %s974, 31
          %s976 = scalar_select %p975, %s974, 31
          %s977 = smul.addr %s976, 8
          %s978 = scalar_lea.vmem %s3, %s977
        $region93: #{gcn_forward.11} parent=88 // pred_fallthru
          _
      $region89: #{gcn_forward.11} parent=5 // pred_fallthru
        _
    $region6: #{gcn_forward.11} parent=1 // loop_footer
      %s13 = sadd.s32 1, %s9
    $region7: #{gcn_forward.11} parent=1 // loop_footer_branch
      %8 = sbr.rel target = $region3
    $region8: #{gcn_forward.11} parent=1 // loop_exit
      _

// kernel: gcn_forward.13
$region0: #{gcn_forward.13}
  #allocation0 [shape = 'u32[]', space=smem, size = 0x4, offset = 0x4, fixed_abs, tag = 'smem constant byte address 0x4 - core index']
  #allocation1 [shape = 'u32[144,128]{1,0:T(1,128)}', space=vmem, size = 0x12000, scoped, tag = 'internal scratch']
  %s0 = inlined_call_operand.vmem [shape: f32[256,128], index: 0, kind: input, shape index: {}]
  %s1 = inlined_call_operand.vmem [shape: f32[1,128], index: 1, kind: input, shape index: {}]
  %s2 = inlined_call_operand.vmem [shape: f32[256,128], index: 2, kind: output, shape index: {}]
  %s3 = sld [smem:[#allocation0]]
  $region41: #{gcn_forward.13} parent=0
    _
  %s5 = ssub.s32 1, %s3
  %s6 = scalar_select 0, %s5, %s3
  loop: start=0, step=1, limit=4
  $region2: #{gcn_forward.13} parent=0 // loop_pre_header
    _
  $region3: #{gcn_forward.13} parent=0 // loop_header
    %s8 = sphi 0, %s12
    %p9 = scmp.ge.s32.totalorder %s8, 4
    %s18 = sphi 0, %s20
    %s21 = sphi 0, %s18
    %s22 = sphi 0, %s21
    %s38 = sphi 0, %s22
    %s42 = sphi 0, %s42
    %s44 = sphi 0, %s42
    %s45 = sphi 0, %s44
    %s59 = sphi 0, %s45
    %s65 = sphi 0, %s67
    %s68 = sphi 0, %s65
    %s69 = sphi 0, %s68
    %s85 = sphi 0, %s69
  $region4: #{gcn_forward.13} parent=0 // loop_header_branch
    %11 = sbr.rel (%p9) target = $region8
  $region5: #{gcn_forward.13} parent=0 // loop_body
    %s13 = ssub.s32 %s8, 1
    %s14 = ssub.s32 %s8, 2
    %s15 = sadd.s32 %s8, 1
    %s16 = ssub.s32 %s8, %s15
    %p17 = scmp.eq.s32.totalorder %s16, 0
    %s19 = sadd.s32 %s18, 1
    %s20 = scalar_select %p17, %s18, %s19
    %p23 = pneg %p17
    %p24 = scmp.eq.s32.totalorder %s8, 1
    %p25 = por %p23, %p24
    %p26 = scmp.ne.s32.totalorder %s18, %s21
    %p27 = scmp.eq.s32.totalorder %s8, 0
    %p28 = por %p26, %p27
    %p29 = scmp.ne.s32.totalorder %s18, %s21
    %p30 = scmp.eq.s32.totalorder %s13, 1
    %p31 = por %p29, %p30
    %p32 = scmp.ne.s32.totalorder %s21, %s22
    %p33 = scmp.eq.s32.totalorder %s13, 0
    %p34 = por %p32, %p33
    %p35 = scmp.ne.s32.totalorder %s21, %s22
    %p36 = scmp.eq.s32.totalorder %s14, 1
    %p37 = por %p35, %p36
    %p39 = scmp.ne.s32.totalorder %s22, %s38
    %p40 = scmp.eq.s32.totalorder %s14, 0
    %p41 = por %p39, %p40
    %s43 = sadd.s32 %s42, 1
    %p46 = scmp.eq.s32.totalorder %s8, 1
    %p47 = scmp.ne.s32.totalorder %s42, %s44
    %p48 = scmp.eq.s32.totalorder %s8, 0
    %p49 = por %p47, %p48
    %p50 = scmp.ne.s32.totalorder %s42, %s44
    %p51 = scmp.eq.s32.totalorder %s13, 1
    %p52 = por %p50, %p51
    %p53 = scmp.ne.s32.totalorder %s44, %s45
    %p54 = scmp.eq.s32.totalorder %s13, 0
    %p55 = por %p53, %p54
    %p56 = scmp.ne.s32.totalorder %s44, %s45
    %p57 = scmp.eq.s32.totalorder %s14, 1
    %p58 = por %p56, %p57
    %p60 = scmp.ne.s32.totalorder %s45, %s59
    %p61 = scmp.eq.s32.totalorder %s14, 0
    %p62 = por %p60, %p61
    %s63 = ssub.s32 %s8, %s15
    %p64 = scmp.eq.s32.totalorder %s63, 0
    %s66 = sadd.s32 %s65, 1
    %s67 = scalar_select %p64, %s65, %s66
    %p70 = pneg %p64
    %p71 = scmp.eq.s32.totalorder %s8, 1
    %p72 = por %p70, %p71
    %p73 = scmp.ne.s32.totalorder %s65, %s68
    %p74 = scmp.eq.s32.totalorder %s8, 0
    %p75 = por %p73, %p74
    %p76 = scmp.ne.s32.totalorder %s65, %s68
    %p77 = scmp.eq.s32.totalorder %s13, 1
    %p78 = por %p76, %p77
    %p79 = scmp.ne.s32.totalorder %s68, %s69
    %p80 = scmp.eq.s32.totalorder %s13, 0
    %p81 = por %p79, %p80
    %p82 = scmp.ne.s32.totalorder %s68, %s69
    %p83 = scmp.eq.s32.totalorder %s14, 1
    %p84 = por %p82, %p83
    %p86 = scmp.ne.s32.totalorder %s69, %s85
    %p87 = scmp.eq.s32.totalorder %s14, 0
    %p88 = por %p86, %p87
    %p89 = scmp.le.s32.totalorder 1, %s8
    %p90 = scmp.lt.s32.totalorder %s8, 3
    %p91 = pnand %p89, %p90
    %p92 = pneg %p91
    // Predicated region
    $region9: #{gcn_forward.13} parent=5 // pred_check
      _
    $region10: #{gcn_forward.13} parent=5 // pred_check_branch
      %94 = sbr.rel (%p91) target = $region12
    $region11: #{gcn_forward.13} parent=5 // pred_region
      %s95 = ssub.s32 %s8, 1
      // Predicated region
      $region13: #{gcn_forward.13} parent=11 // pred_check
        %p96 = pneg %p55
      $region14: #{gcn_forward.13} parent=11 // pred_check_branch
        %98 = sbr.rel (%p96) target = $region16
      $region15: #{gcn_forward.13} parent=11 // pred_region
        _
      $region16: #{gcn_forward.13} parent=11 // pred_fallthru
        _
    $region12: #{gcn_forward.13} parent=5 // pred_fallthru
      _
    %p99 = scmp.lt.s32.totalorder %s8, 2
    // Predicated region
    $region17: #{gcn_forward.13} parent=5 // pred_check
      %p100 = pneg %p99
    $region18: #{gcn_forward.13} parent=5 // pred_check_branch
      %102 = sbr.rel (%p100) target = $region20
    $region19: #{gcn_forward.13} parent=5 // pred_region
      // Predicated region
      $region21: #{gcn_forward.13} parent=19 // pred_check
        %p103 = pneg %p28
      $region22: #{gcn_forward.13} parent=19 // pred_check_branch
        %105 = sbr.rel (%p103) target = $region24
      $region23: #{gcn_forward.13} parent=19 // pred_region
        %s106 = smul.u32 16, %s8
        %p107 = scmp.lt.s32.totalorder %s106, 31
        %s108 = scalar_select %p107, %s106, 31
        %s109 = smul.addr %s108, 8
        %s110 = scalar_lea.vmem %s0, %s109
        %s111 = smul.u32 16, %s8
      $region24: #{gcn_forward.13} parent=19 // pred_fallthru
        _
    $region20: #{gcn_forward.13} parent=5 // pred_fallthru
      _
    %p112 = scmp.le.s32.totalorder 1, %s8
    %p113 = scmp.lt.s32.totalorder %s8, 3
    %p114 = pnand %p112, %p113
    %p115 = pneg %p114
    // Predicated region
    $region25: #{gcn_forward.13} parent=5 // pred_check
      _
    $region26: #{gcn_forward.13} parent=5 // pred_check_branch
      %117 = sbr.rel (%p114) target = $region28
    $region27: #{gcn_forward.13} parent=5 // pred_region
      %s118 = ssub.s32 %s8, 1
      %s119 = smul.u32 16, %s13
      %p120 = scmp.lt.s32.totalorder %s119, 31
      %s121 = scalar_select %p120, %s119, 31
      %s122 = smul.addr %s121, 8
      %s123 = scalar_lea.vmem %s0, %s122
      %p124 = pneg %p34
      %p125 = pneg %p31
      %p126 = pneg %p55
      %p127 = pneg %p52
      %p128 = pneg %p81
      %p129 = pneg %p78
      %s130 = smul.u32 16, %s13
      %p131 = scmp.lt.s32.totalorder %s130, 31
      %s132 = scalar_select %p131, %s130, 31
      %s133 = smul.addr %s132, 8
      %s134 = scalar_lea.vmem %s2, %s133
      %s135 = smul.u32 16, %s13
      %p136 = scmp.lt.s32.totalorder %s135, 31
      %s137 = scalar_select %p136, %s135, 31
      %s138 = smul.addr %s137, 8
      %s139 = scalar_lea.vmem %s0, %s138
      %s140 = smul.u32 16, %s13
      %s141 = smul.u32 16, %s13
      %p142 = scmp.lt.s32.totalorder %s141, 31
      %s143 = scalar_select %p142, %s141, 31
      %s144 = smul.addr %s143, 8
      %s145 = scalar_lea.vmem %s2, %s144
      %s146 = smul.u32 16, %s13
      %v147 = vld [vmem:[%s139] sm:$0xff]
      %v148 = vld [vmem:[%s139 + $0x8] sm:$0xff]
      %v149 = vld [vmem:[%s139 + $0x10] sm:$0xff]
      %v150 = vld [vmem:[%s139 + $0x18] sm:$0xff]
      %v151 = vld [vmem:[%s139 + $0x20] sm:$0xff]
      %v152 = vld [vmem:[%s139 + $0x28] sm:$0xff]
      %v153 = vld [vmem:[%s139 + $0x30] sm:$0xff]
      %v154 = vld [vmem:[%s139 + $0x38] sm:$0xff]
      %v155 = vld [vmem:[%s139 + $0x40] sm:$0xff]
      %v156 = vld [vmem:[%s139 + $0x48] sm:$0xff]
      %v157 = vld [vmem:[%s139 + $0x50] sm:$0xff]
      %v158 = vld [vmem:[%s139 + $0x58] sm:$0xff]
      %v159 = vld [vmem:[%s139 + $0x60] sm:$0xff]
      %v160 = vld [vmem:[%s139 + $0x68] sm:$0xff]
      %v161 = vld [vmem:[%s139 + $0x70] sm:$0xff]
      %v162 = vld [vmem:[%s139 + $0x78] sm:$0xff]
      %v163 = vld [vmem:[%s1] sm:$0x1]
      %v165 = vlaneseq
      %v166 = vshrl.u32 %v165, 7
      %v167 = vsub.s32 0, %v166
      %v168 = vrot.slane %v163, %v167
      %v170 = vsub.f32 %v147, %v168
      %v171 = vsub.f32 %v148, %v168
      %v172 = vsub.f32 %v149, %v168
      %v173 = vsub.f32 %v150, %v168
      %v174 = vsub.f32 %v151, %v168
      %v175 = vsub.f32 %v152, %v168
      %v176 = vsub.f32 %v153, %v168
      %v177 = vsub.f32 %v154, %v168
      %v178 = vsub.f32 %v155, %v168
      %v179 = vsub.f32 %v156, %v168
      %v180 = vsub.f32 %v157, %v168
      %v181 = vsub.f32 %v158, %v168
      %v182 = vsub.f32 %v159, %v168
      %v183 = vsub.f32 %v160, %v168
      %v184 = vsub.f32 %v161, %v168
      %v185 = vsub.f32 %v162, %v168
      %186 = vst [vmem:[%s145] sm:$0xff] %v170
      %187 = vst [vmem:[%s145 + $0x8] sm:$0xff] %v171
      %188 = vst [vmem:[%s145 + $0x10] sm:$0xff] %v172
      %189 = vst [vmem:[%s145 + $0x18] sm:$0xff] %v173
      %190 = vst [vmem:[%s145 + $0x20] sm:$0xff] %v174
      %191 = vst [vmem:[%s145 + $0x28] sm:$0xff] %v175
      %192 = vst [vmem:[%s145 + $0x30] sm:$0xff] %v176
      %193 = vst [vmem:[%s145 + $0x38] sm:$0xff] %v177
      %194 = vst [vmem:[%s145 + $0x40] sm:$0xff] %v178
      %195 = vst [vmem:[%s145 + $0x48] sm:$0xff] %v179
      %196 = vst [vmem:[%s145 + $0x50] sm:$0xff] %v180
      %197 = vst [vmem:[%s145 + $0x58] sm:$0xff] %v181
      %198 = vst [vmem:[%s145 + $0x60] sm:$0xff] %v182
      %199 = vst [vmem:[%s145 + $0x68] sm:$0xff] %v183
      %200 = vst [vmem:[%s145 + $0x70] sm:$0xff] %v184
      %201 = vst [vmem:[%s145 + $0x78] sm:$0xff] %v185
      %s202 = smul.u32 16, %s13
      %p203 = scmp.lt.s32.totalorder %s202, 31
      %s204 = scalar_select %p203, %s202, 31
      %s205 = smul.addr %s204, 8
      %s206 = scalar_lea.vmem %s2, %s205
      // Predicated region
      $region29: #{gcn_forward.13} parent=27 // pred_check
        %p207 = pneg %p78
      $region30: #{gcn_forward.13} parent=27 // pred_check_branch
        %209 = sbr.rel (%p207) target = $region32
      $region31: #{gcn_forward.13} parent=27 // pred_region
        %s210 = smul.u32 16, %s13
      $region32: #{gcn_forward.13} parent=27 // pred_fallthru
        _
    $region28: #{gcn_forward.13} parent=5 // pred_fallthru
      _
    %p211 = scmp.le.s32.totalorder 2, %s8
    // Predicated region
    $region33: #{gcn_forward.13} parent=5 // pred_check
      %p212 = pneg %p211
    $region34: #{gcn_forward.13} parent=5 // pred_check_branch
      %214 = sbr.rel (%p212) target = $region36
    $region35: #{gcn_forward.13} parent=5 // pred_region
      %s215 = ssub.s32 %s8, 2
      // Predicated region
      $region37: #{gcn_forward.13} parent=35 // pred_check
        %p216 = pneg %p84
      $region38: #{gcn_forward.13} parent=35 // pred_check_branch
        %218 = sbr.rel (%p216) target = $region40
      $region39: #{gcn_forward.13} parent=35 // pred_region
        %s219 = smul.u32 16, %s14
        %p220 = scmp.lt.s32.totalorder %s219, 31
        %s221 = scalar_select %p220, %s219, 31
        %s222 = smul.addr %s221, 8
        %s223 = scalar_lea.vmem %s2, %s222
      $region40: #{gcn_forward.13} parent=35 // pred_fallthru
        _
    $region36: #{gcn_forward.13} parent=5 // pred_fallthru
      _
  $region6: #{gcn_forward.13} parent=0 // loop_footer
    %s12 = sadd.s32 1, %s8
  $region7: #{gcn_forward.13} parent=0 // loop_footer_branch
    %7 = sbr.rel target = $region3
  $region8: #{gcn_forward.13} parent=0 // loop_exit
    _

// kernel: gcn_forward.12
$region0: #{gcn_forward.12}
  #allocation0 [shape = 'u32[]', space=smem, size = 0x4, offset = 0x4, fixed_abs, tag = 'smem constant byte address 0x4 - core index']
  #allocation1 [shape = 'u32[144,128]{1,0:T(1,128)}', space=vmem, size = 0x12000, scoped, tag = 'internal scratch']
  #allocation2 [shape = 'f32[128,128]{1,0:T(8,128)}', space=vmem, size = 0x10000, scoped, tag = 'scratch operand']
  #allocation3 [shape = 'f32[1,128]{1,0:T(1,128)}', space=vmem, size = 0x200, scoped, tag = 'scratch operand']
  #allocation4 [shape = 'f32[1,128]{1,0:T(1,128)}', space=vmem, size = 0x200, scoped, tag = 'scratch operand']
  %s0 = inlined_call_operand.vmem [shape: f32[256,128], index: 0, kind: input, shape index: {}]
  %s1 = inlined_call_operand.vmem [shape: f32[128,128], index: 1, kind: input, shape index: {}]
  %s2 = inlined_call_operand.vmem [shape: f32[1,128], index: 2, kind: input, shape index: {}]
  %s3 = inlined_call_operand.vmem [shape: f32[256,128], index: 3, kind: output, shape index: {0}]
  %s4 = inlined_call_operand.vmem [shape: f32[1,128], index: 4, kind: output, shape index: {1}]
  %5 = xla_tuple %s3, %s4
  %s6 = sld [smem:[#allocation0]]
  $region61: #{gcn_forward.12} parent=0
    _
  %s8 = ssub.s32 1, %s6
  %s9 = scalar_select 0, %s8, %s6
  loop: start=0, step=1, limit=4
  $region2: #{gcn_forward.12} parent=0 // loop_pre_header
    _
  $region3: #{gcn_forward.12} parent=0 // loop_header
    %s11 = sphi 0, %s15
    %p12 = scmp.ge.s32.totalorder %s11, 4
    %s21 = sphi 0, %s23
    %s24 = sphi 0, %s21
    %s25 = sphi 0, %s24
    %s41 = sphi 0, %s25
    %s45 = sphi 0, %s45
    %s47 = sphi 0, %s45
    %s48 = sphi 0, %s47
    %s62 = sphi 0, %s48
    %s66 = sphi 0, %s66
    %s68 = sphi 0, %s66
    %s69 = sphi 0, %s68
    %s83 = sphi 0, %s69
    %s89 = sphi 0, %s91
    %s92 = sphi 0, %s89
    %s93 = sphi 0, %s92
    %s109 = sphi 0, %s93
    %s113 = sphi 0, %s113
    %s115 = sphi 0, %s113
    %s116 = sphi 0, %s115
    %s130 = sphi 0, %s116
  $region4: #{gcn_forward.12} parent=0 // loop_header_branch
    %14 = sbr.rel (%p12) target = $region8
  $region5: #{gcn_forward.12} parent=0 // loop_body
    %s16 = ssub.s32 %s11, 1
    %s17 = ssub.s32 %s11, 2
    %s18 = sadd.s32 %s11, 1
    %s19 = ssub.s32 %s11, %s18
    %p20 = scmp.eq.s32.totalorder %s19, 0
    %s22 = sadd.s32 %s21, 1
    %s23 = scalar_select %p20, %s21, %s22
    %p26 = pneg %p20
    %p27 = scmp.eq.s32.totalorder %s11, 1
    %p28 = por %p26, %p27
    %p29 = scmp.ne.s32.totalorder %s21, %s24
    %p30 = scmp.eq.s32.totalorder %s11, 0
    %p31 = por %p29, %p30
    %p32 = scmp.ne.s32.totalorder %s21, %s24
    %p33 = scmp.eq.s32.totalorder %s16, 1
    %p34 = por %p32, %p33
    %p35 = scmp.ne.s32.totalorder %s24, %s25
    %p36 = scmp.eq.s32.totalorder %s16, 0
    %p37 = por %p35, %p36
    %p38 = scmp.ne.s32.totalorder %s24, %s25
    %p39 = scmp.eq.s32.totalorder %s17, 1
    %p40 = por %p38, %p39
    %p42 = scmp.ne.s32.totalorder %s25, %s41
    %p43 = scmp.eq.s32.totalorder %s17, 0
    %p44 = por %p42, %p43
    %s46 = sadd.s32 %s45, 1
    %p49 = scmp.eq.s32.totalorder %s11, 1
    %p50 = scmp.ne.s32.totalorder %s45, %s47
    %p51 = scmp.eq.s32.totalorder %s11, 0
    %p52 = por %p50, %p51
    %p53 = scmp.ne.s32.totalorder %s45, %s47
    %p54 = scmp.eq.s32.totalorder %s16, 1
    %p55 = por %p53, %p54
    %p56 = scmp.ne.s32.totalorder %s47, %s48
    %p57 = scmp.eq.s32.totalorder %s16, 0
    %p58 = por %p56, %p57
    %p59 = scmp.ne.s32.totalorder %s47, %s48
    %p60 = scmp.eq.s32.totalorder %s17, 1
    %p61 = por %p59, %p60
    %p63 = scmp.ne.s32.totalorder %s48, %s62
    %p64 = scmp.eq.s32.totalorder %s17, 0
    %p65 = por %p63, %p64
    %s67 = sadd.s32 %s66, 1
    %p70 = scmp.eq.s32.totalorder %s11, 1
    %p71 = scmp.ne.s32.totalorder %s66, %s68
    %p72 = scmp.eq.s32.totalorder %s11, 0
    %p73 = por %p71, %p72
    %p74 = scmp.ne.s32.totalorder %s66, %s68
    %p75 = scmp.eq.s32.totalorder %s16, 1
    %p76 = por %p74, %p75
    %p77 = scmp.ne.s32.totalorder %s68, %s69
    %p78 = scmp.eq.s32.totalorder %s16, 0
    %p79 = por %p77, %p78
    %p80 = scmp.ne.s32.totalorder %s68, %s69
    %p81 = scmp.eq.s32.totalorder %s17, 1
    %p82 = por %p80, %p81
    %p84 = scmp.ne.s32.totalorder %s69, %s83
    %p85 = scmp.eq.s32.totalorder %s17, 0
    %p86 = por %p84, %p85
    %s87 = ssub.s32 %s11, %s18
    %p88 = scmp.eq.s32.totalorder %s87, 0
    %s90 = sadd.s32 %s89, 1
    %s91 = scalar_select %p88, %s89, %s90
    %p94 = pneg %p88
    %p95 = scmp.eq.s32.totalorder %s11, 1
    %p96 = por %p94, %p95
    %p97 = scmp.ne.s32.totalorder %s89, %s92
    %p98 = scmp.eq.s32.totalorder %s11, 0
    %p99 = por %p97, %p98
    %p100 = scmp.ne.s32.totalorder %s89, %s92
    %p101 = scmp.eq.s32.totalorder %s16, 1
    %p102 = por %p100, %p101
    %p103 = scmp.ne.s32.totalorder %s92, %s93
    %p104 = scmp.eq.s32.totalorder %s16, 0
    %p105 = por %p103, %p104
    %p106 = scmp.ne.s32.totalorder %s92, %s93
    %p107 = scmp.eq.s32.totalorder %s17, 1
    %p108 = por %p106, %p107
    %p110 = scmp.ne.s32.totalorder %s93, %s109
    %p111 = scmp.eq.s32.totalorder %s17, 0
    %p112 = por %p110, %p111
    %s114 = sadd.s32 %s113, 1
    %p117 = scmp.eq.s32.totalorder %s11, 1
    %p118 = scmp.ne.s32.totalorder %s113, %s115
    %p119 = scmp.eq.s32.totalorder %s11, 0
    %p120 = por %p118, %p119
    %p121 = scmp.ne.s32.totalorder %s113, %s115
    %p122 = scmp.eq.s32.totalorder %s16, 1
    %p123 = por %p121, %p122
    %p124 = scmp.ne.s32.totalorder %s115, %s116
    %p125 = scmp.eq.s32.totalorder %s16, 0
    %p126 = por %p124, %p125
    %p127 = scmp.ne.s32.totalorder %s115, %s116
    %p128 = scmp.eq.s32.totalorder %s17, 1
    %p129 = por %p127, %p128
    %p131 = scmp.ne.s32.totalorder %s116, %s130
    %p132 = scmp.eq.s32.totalorder %s17, 0
    %p133 = por %p131, %p132
    %p134 = scmp.le.s32.totalorder 1, %s11
    %p135 = scmp.lt.s32.totalorder %s11, 3
    %p136 = pnand %p134, %p135
    %p137 = pneg %p136
    // Predicated region
    $region9: #{gcn_forward.12} parent=5 // pred_check
      _
    $region10: #{gcn_forward.12} parent=5 // pred_check_branch
      %139 = sbr.rel (%p136) target = $region12
    $region11: #{gcn_forward.12} parent=5 // pred_region
      %s140 = ssub.s32 %s11, 1
      // Predicated region
      $region13: #{gcn_forward.12} parent=11 // pred_check
        %p141 = pneg %p58
      $region14: #{gcn_forward.12} parent=11 // pred_check_branch
        %143 = sbr.rel (%p141) target = $region16
      $region15: #{gcn_forward.12} parent=11 // pred_region
        _
      $region16: #{gcn_forward.12} parent=11 // pred_fallthru
        _
      // Predicated region
      $region17: #{gcn_forward.12} parent=11 // pred_check
        %p144 = pneg %p79
      $region18: #{gcn_forward.12} parent=11 // pred_check_branch
        %146 = sbr.rel (%p144) target = $region20
      $region19: #{gcn_forward.12} parent=11 // pred_region
        _
      $region20: #{gcn_forward.12} parent=11 // pred_fallthru
        _
    $region12: #{gcn_forward.12} parent=5 // pred_fallthru
      _
    %p147 = scmp.lt.s32.totalorder %s11, 2
    // Predicated region
    $region21: #{gcn_forward.12} parent=5 // pred_check
      %p148 = pneg %p147
    $region22: #{gcn_forward.12} parent=5 // pred_check_branch
      %150 = sbr.rel (%p148) target = $region24
    $region23: #{gcn_forward.12} parent=5 // pred_region
      // Predicated region
      $region25: #{gcn_forward.12} parent=23 // pred_check
        %p151 = pneg %p31
      $region26: #{gcn_forward.12} parent=23 // pred_check_branch
        %153 = sbr.rel (%p151) target = $region28
      $region27: #{gcn_forward.12} parent=23 // pred_region
        %s154 = smul.u32 16, %s11
        %p155 = scmp.lt.s32.totalorder %s154, 31
        %s156 = scalar_select %p155, %s154, 31
        %s157 = smul.addr %s156, 8
        %s158 = scalar_lea.vmem %s0, %s157
        %s159 = smul.u32 16, %s11
      $region28: #{gcn_forward.12} parent=23 // pred_fallthru
        _
    $region24: #{gcn_forward.12} parent=5 // pred_fallthru
      _
    %p160 = scmp.le.s32.totalorder 1, %s11
    %p161 = scmp.lt.s32.totalorder %s11, 3
    %p162 = pnand %p160, %p161
    %p163 = pneg %p162
    // Predicated region
    $region29: #{gcn_forward.12} parent=5 // pred_check
      _
    $region30: #{gcn_forward.12} parent=5 // pred_check_branch
      %165 = sbr.rel (%p162) target = $region32
    $region31: #{gcn_forward.12} parent=5 // pred_region
      %s166 = ssub.s32 %s11, 1
      %s167 = smul.u32 16, %s16
      %p168 = scmp.lt.s32.totalorder %s167, 31
      %s169 = scalar_select %p168, %s167, 31
      %s170 = smul.addr %s169, 8
      %s171 = scalar_lea.vmem %s0, %s170
      %p172 = pneg %p37
      %p173 = pneg %p34
      %p174 = pneg %p58
      %p175 = pneg %p55
      %p176 = pneg %p79
      %p177 = pneg %p76
      %p178 = pneg %p105
      %p179 = pneg %p102
      %s180 = smul.u32 16, %s16
      %p181 = scmp.lt.s32.totalorder %s180, 31
      %s182 = scalar_select %p181, %s180, 31
      %s183 = smul.addr %s182, 8
      %s184 = scalar_lea.vmem %s3, %s183
      %p185 = pneg %p126
      %p186 = pneg %p123
      %s187 = smul.u32 16, %s16
      %p188 = scmp.lt.s32.totalorder %s187, 31
      %s189 = scalar_select %p188, %s187, 31
      %s190 = smul.addr %s189, 8
      %s191 = scalar_lea.vmem %s0, %s190
      %s192 = smul.u32 16, %s16
      %s193 = smul.u32 16, %s16
      %p194 = scmp.lt.s32.totalorder %s193, 31
      %s195 = scalar_select %p194, %s193, 31
      %s196 = smul.addr %s195, 8
      %s197 = scalar_lea.vmem %s3, %s196
      %s198 = smul.u32 16, %s16
      %p199 = scmp.eq.s32.totalorder %s16, 0
      // Predicated region
      $region33: #{gcn_forward.12} parent=31 // pred_check
        %p200 = pneg %p199
      $region34: #{gcn_forward.12} parent=31 // pred_check_branch
        %202 = sbr.rel (%p200) target = $region36
      $region35: #{gcn_forward.12} parent=31 // pred_region
        %v203 = vld [vmem:[%s1] sm:$0xff]
        %v204 = vld [vmem:[%s1 + $0x8] sm:$0xff]
        %v205 = vld [vmem:[%s1 + $0x10] sm:$0xff]
        %v206 = vld [vmem:[%s1 + $0x18] sm:$0xff]
        %v207 = vld [vmem:[%s1 + $0x20] sm:$0xff]
        %v208 = vld [vmem:[%s1 + $0x28] sm:$0xff]
        %v209 = vld [vmem:[%s1 + $0x30] sm:$0xff]
        %v210 = vld [vmem:[%s1 + $0x38] sm:$0xff]
        %v211 = vld [vmem:[%s1 + $0x40] sm:$0xff]
        %v212 = vld [vmem:[%s1 + $0x48] sm:$0xff]
        %v213 = vld [vmem:[%s1 + $0x50] sm:$0xff]
        %v214 = vld [vmem:[%s1 + $0x58] sm:$0xff]
        %v215 = vld [vmem:[%s1 + $0x60] sm:$0xff]
        %v216 = vld [vmem:[%s1 + $0x68] sm:$0xff]
        %v217 = vld [vmem:[%s1 + $0x70] sm:$0xff]
        %v218 = vld [vmem:[%s1 + $0x78] sm:$0xff]
        %v219 = vlaneseq
        %v220 = vand.u32 %v219, 127
        %vm221 = vcmp.lt.s32.totalorder %v220, 32
        %v222 = vand.u32 2147483647, %v203
        %v223 = vand.u32 2147483647, %v204
        %v224 = vand.u32 2147483647, %v205
        %v225 = vand.u32 2147483647, %v206
        %v226 = vand.u32 2147483647, %v207
        %v227 = vand.u32 2147483647, %v208
        %v228 = vand.u32 2147483647, %v209
        %v229 = vand.u32 2147483647, %v210
        %v230 = vand.u32 2147483647, %v211
        %v231 = vand.u32 2147483647, %v212
        %v232 = vand.u32 2147483647, %v213
        %v233 = vand.u32 2147483647, %v214
        %v234 = vand.u32 2147483647, %v215
        %v235 = vand.u32 2147483647, %v216
        %v236 = vand.u32 2147483647, %v217
        %v237 = vand.u32 2147483647, %v218
        %v238 = vrcp.pop 0.6
        %v239 = vmul.f32 %v222, %v238
        %v240 = vmul.f32 %v223, %v238
        %v241 = vmul.f32 %v224, %v238
        %v242 = vmul.f32 %v225, %v238
        %v243 = vmul.f32 %v226, %v238
        %v244 = vmul.f32 %v227, %v238
        %v245 = vmul.f32 %v228, %v238
        %v246 = vmul.f32 %v229, %v238
        %v247 = vmul.f32 %v230, %v238
        %v248 = vmul.f32 %v231, %v238
        %v249 = vmul.f32 %v232, %v238
        %v250 = vmul.f32 %v233, %v238
        %v251 = vmul.f32 %v234, %v238
        %v252 = vmul.f32 %v235, %v238
        %v253 = vmul.f32 %v236, %v238
        %v254 = vmul.f32 %v237, %v238
        %v255 = vsel %vm221, %v239, -1e+30
        %v256 = vsel %vm221, %v240, -1e+30
        %v257 = vsel %vm221, %v241, -1e+30
        %v258 = vsel %vm221, %v242, -1e+30
        %v259 = vsel %vm221, %v243, -1e+30
        %v260 = vsel %vm221, %v244, -1e+30
        %v261 = vsel %vm221, %v245, -1e+30
        %v262 = vsel %vm221, %v246, -1e+30
        %v263 = vsel %vm221, %v247, -1e+30
        %v264 = vsel %vm221, %v248, -1e+30
        %v265 = vsel %vm221, %v249, -1e+30
        %v266 = vsel %vm221, %v250, -1e+30
        %v267 = vsel %vm221, %v251, -1e+30
        %v268 = vsel %vm221, %v252, -1e+30
        %v269 = vsel %vm221, %v253, -1e+30
        %v270 = vsel %vm221, %v254, -1e+30
        %271 = vmax.xlane.f32.xlu0 %v255
        %v272 = vpop.xlane.xlu0 %271
        %273 = vmax.xlane.f32.xlu0 %v256
        %v274 = vpop.xlane.xlu0 %273
        %275 = vmax.xlane.f32.xlu0 %v257
        %v276 = vpop.xlane.xlu0 %275
        %277 = vmax.xlane.f32.xlu0 %v258
        %v278 = vpop.xlane.xlu0 %277
        %279 = vmax.xlane.f32.xlu0 %v259
        %v280 = vpop.xlane.xlu0 %279
        %281 = vmax.xlane.f32.xlu0 %v260
        %v282 = vpop.xlane.xlu0 %281
        %283 = vmax.xlane.f32.xlu0 %v261
        %v284 = vpop.xlane.xlu0 %283
        %285 = vmax.xlane.f32.xlu0 %v262
        %v286 = vpop.xlane.xlu0 %285
        %287 = vmax.xlane.f32.xlu0 %v263
        %v288 = vpop.xlane.xlu0 %287
        %289 = vmax.xlane.f32.xlu0 %v264
        %v290 = vpop.xlane.xlu0 %289
        %291 = vmax.xlane.f32.xlu0 %v265
        %v292 = vpop.xlane.xlu0 %291
        %293 = vmax.xlane.f32.xlu0 %v266
        %v294 = vpop.xlane.xlu0 %293
        %295 = vmax.xlane.f32.xlu0 %v267
        %v296 = vpop.xlane.xlu0 %295
        %297 = vmax.xlane.f32.xlu0 %v268
        %v298 = vpop.xlane.xlu0 %297
        %299 = vmax.xlane.f32.xlu0 %v269
        %v300 = vpop.xlane.xlu0 %299
        %301 = vmax.xlane.f32.xlu0 %v270
        %v302 = vpop.xlane.xlu0 %301
        %v303 = vsub.f32 %v255, %v272
        %v304 = vsub.f32 %v256, %v274
        %v305 = vsub.f32 %v257, %v276
        %v306 = vsub.f32 %v258, %v278
        %v307 = vsub.f32 %v259, %v280
        %v308 = vsub.f32 %v260, %v282
        %v309 = vsub.f32 %v261, %v284
        %v310 = vsub.f32 %v262, %v286
        %v311 = vsub.f32 %v263, %v288
        %v312 = vsub.f32 %v264, %v290
        %v313 = vsub.f32 %v265, %v292
        %v314 = vsub.f32 %v266, %v294
        %v315 = vsub.f32 %v267, %v296
        %v316 = vsub.f32 %v268, %v298
        %v317 = vsub.f32 %v269, %v300
        %v318 = vsub.f32 %v270, %v302
        %v319 = vmul.f32 %v303, 1.442695
        %v320 = vpow.pop %v319
        %v321 = vmul.f32 %v304, 1.442695
        %v322 = vpow.pop %v321
        %v323 = vmul.f32 %v305, 1.442695
        %v324 = vpow.pop %v323
        %v325 = vmul.f32 %v306, 1.442695
        %v326 = vpow.pop %v325
        %v327 = vmul.f32 %v307, 1.442695
        %v328 = vpow.pop %v327
        %v329 = vmul.f32 %v308, 1.442695
        %v330 = vpow.pop %v329
        %v331 = vmul.f32 %v309, 1.442695
        %v332 = vpow.pop %v331
        %v333 = vmul.f32 %v310, 1.442695
        %v334 = vpow.pop %v333
        %v335 = vmul.f32 %v311, 1.442695
        %v336 = vpow.pop %v335
        %v337 = vmul.f32 %v312, 1.442695
        %v338 = vpow.pop %v337
        %v339 = vmul.f32 %v313, 1.442695
        %v340 = vpow.pop %v339
        %v341 = vmul.f32 %v314, 1.442695
        %v342 = vpow.pop %v341
        %v343 = vmul.f32 %v315, 1.442695
        %v344 = vpow.pop %v343
        %v345 = vmul.f32 %v316, 1.442695
        %v346 = vpow.pop %v345
        %v347 = vmul.f32 %v317, 1.442695
        %v348 = vpow.pop %v347
        %v349 = vmul.f32 %v318, 1.442695
        %v350 = vpow.pop %v349
        %v351 = vsel %vm221, %v320, 0.0
        %v352 = vsel %vm221, %v322, 0.0
        %v353 = vsel %vm221, %v324, 0.0
        %v354 = vsel %vm221, %v326, 0.0
        %v355 = vsel %vm221, %v328, 0.0
        %v356 = vsel %vm221, %v330, 0.0
        %v357 = vsel %vm221, %v332, 0.0
        %v358 = vsel %vm221, %v334, 0.0
        %v359 = vsel %vm221, %v336, 0.0
        %v360 = vsel %vm221, %v338, 0.0
        %v361 = vsel %vm221, %v340, 0.0
        %v362 = vsel %vm221, %v342, 0.0
        %v363 = vsel %vm221, %v344, 0.0
        %v364 = vsel %vm221, %v346, 0.0
        %v365 = vsel %vm221, %v348, 0.0
        %v366 = vsel %vm221, %v350, 0.0
        %367 = vadd.xlane.f32.xlu0 %v351
        %v368 = vpop.xlane.xlu0 %367
        %369 = vadd.xlane.f32.xlu0 %v352
        %v370 = vpop.xlane.xlu0 %369
        %371 = vadd.xlane.f32.xlu0 %v353
        %v372 = vpop.xlane.xlu0 %371
        %373 = vadd.xlane.f32.xlu0 %v354
        %v374 = vpop.xlane.xlu0 %373
        %375 = vadd.xlane.f32.xlu0 %v355
        %v376 = vpop.xlane.xlu0 %375
        %377 = vadd.xlane.f32.xlu0 %v356
        %v378 = vpop.xlane.xlu0 %377
        %379 = vadd.xlane.f32.xlu0 %v357
        %v380 = vpop.xlane.xlu0 %379
        %381 = vadd.xlane.f32.xlu0 %v358
        %v382 = vpop.xlane.xlu0 %381
        %383 = vadd.xlane.f32.xlu0 %v359
        %v384 = vpop.xlane.xlu0 %383
        %385 = vadd.xlane.f32.xlu0 %v360
        %v386 = vpop.xlane.xlu0 %385
        %387 = vadd.xlane.f32.xlu0 %v361
        %v388 = vpop.xlane.xlu0 %387
        %389 = vadd.xlane.f32.xlu0 %v362
        %v390 = vpop.xlane.xlu0 %389
        %391 = vadd.xlane.f32.xlu0 %v363
        %v392 = vpop.xlane.xlu0 %391
        %393 = vadd.xlane.f32.xlu0 %v364
        %v394 = vpop.xlane.xlu0 %393
        %395 = vadd.xlane.f32.xlu0 %v365
        %v396 = vpop.xlane.xlu0 %395
        %397 = vadd.xlane.f32.xlu0 %v366
        %v398 = vpop.xlane.xlu0 %397
        %v399 = vrcp.pop %v368
        %v400 = vmul.f32 %v351, %v399
        %v401 = vrcp.pop %v370
        %v402 = vmul.f32 %v352, %v401
        %v403 = vrcp.pop %v372
        %v404 = vmul.f32 %v353, %v403
        %v405 = vrcp.pop %v374
        %v406 = vmul.f32 %v354, %v405
        %v407 = vrcp.pop %v376
        %v408 = vmul.f32 %v355, %v407
        %v409 = vrcp.pop %v378
        %v410 = vmul.f32 %v356, %v409
        %v411 = vrcp.pop %v380
        %v412 = vmul.f32 %v357, %v411
        %v413 = vrcp.pop %v382
        %v414 = vmul.f32 %v358, %v413
        %v415 = vrcp.pop %v384
        %v416 = vmul.f32 %v359, %v415
        %v417 = vrcp.pop %v386
        %v418 = vmul.f32 %v360, %v417
        %v419 = vrcp.pop %v388
        %v420 = vmul.f32 %v361, %v419
        %v421 = vrcp.pop %v390
        %v422 = vmul.f32 %v362, %v421
        %v423 = vrcp.pop %v392
        %v424 = vmul.f32 %v363, %v423
        %v425 = vrcp.pop %v394
        %v426 = vmul.f32 %v364, %v425
        %v427 = vrcp.pop %v396
        %v428 = vmul.f32 %v365, %v427
        %v429 = vrcp.pop %v398
        %v430 = vmul.f32 %v366, %v429
        %431 = vmax.xlane.f32.xlu0 %v400
        %v432 = vpop.xlane.xlu0 %431
        %433 = vmax.xlane.f32.xlu0 %v402
        %v434 = vpop.xlane.xlu0 %433
        %435 = vmax.xlane.f32.xlu0 %v404
        %v436 = vpop.xlane.xlu0 %435
        %437 = vmax.xlane.f32.xlu0 %v406
        %v438 = vpop.xlane.xlu0 %437
        %439 = vmax.xlane.f32.xlu0 %v408
        %v440 = vpop.xlane.xlu0 %439
        %441 = vmax.xlane.f32.xlu0 %v410
        %v442 = vpop.xlane.xlu0 %441
        %443 = vmax.xlane.f32.xlu0 %v412
        %v444 = vpop.xlane.xlu0 %443
        %445 = vmax.xlane.f32.xlu0 %v414
        %v446 = vpop.xlane.xlu0 %445
        %447 = vmax.xlane.f32.xlu0 %v416
        %v448 = vpop.xlane.xlu0 %447
        %449 = vmax.xlane.f32.xlu0 %v418
        %v450 = vpop.xlane.xlu0 %449
        %451 = vmax.xlane.f32.xlu0 %v420
        %v452 = vpop.xlane.xlu0 %451
        %453 = vmax.xlane.f32.xlu0 %v422
        %v454 = vpop.xlane.xlu0 %453
        %455 = vmax.xlane.f32.xlu0 %v424
        %v456 = vpop.xlane.xlu0 %455
        %457 = vmax.xlane.f32.xlu0 %v426
        %v458 = vpop.xlane.xlu0 %457
        %459 = vmax.xlane.f32.xlu0 %v428
        %v460 = vpop.xlane.xlu0 %459
        %461 = vmax.xlane.f32.xlu0 %v430
        %v462 = vpop.xlane.xlu0 %461
        %v463 = vrcp.pop %v432
        %v464 = vmul.f32 %v400, %v463
        %v465 = vrcp.pop %v434
        %v466 = vmul.f32 %v402, %v465
        %v467 = vrcp.pop %v436
        %v468 = vmul.f32 %v404, %v467
        %v469 = vrcp.pop %v438
        %v470 = vmul.f32 %v406, %v469
        %v471 = vrcp.pop %v440
        %v472 = vmul.f32 %v408, %v471
        %v473 = vrcp.pop %v442
        %v474 = vmul.f32 %v410, %v473
        %v475 = vrcp.pop %v444
        %v476 = vmul.f32 %v412, %v475
        %v477 = vrcp.pop %v446
        %v478 = vmul.f32 %v414, %v477
        %v479 = vrcp.pop %v448
        %v480 = vmul.f32 %v416, %v479
        %v481 = vrcp.pop %v450
        %v482 = vmul.f32 %v418, %v481
        %v483 = vrcp.pop %v452
        %v484 = vmul.f32 %v420, %v483
        %v485 = vrcp.pop %v454
        %v486 = vmul.f32 %v422, %v485
        %v487 = vrcp.pop %v456
        %v488 = vmul.f32 %v424, %v487
        %v489 = vrcp.pop %v458
        %v490 = vmul.f32 %v426, %v489
        %v491 = vrcp.pop %v460
        %v492 = vmul.f32 %v428, %v491
        %v493 = vrcp.pop %v462
        %v494 = vmul.f32 %v430, %v493
        %v495 = vmul.f32 %v464, %v203
        %v496 = vmul.f32 %v466, %v204
        %v497 = vmul.f32 %v468, %v205
        %v498 = vmul.f32 %v470, %v206
        %v499 = vmul.f32 %v472, %v207
        %v500 = vmul.f32 %v474, %v208
        %v501 = vmul.f32 %v476, %v209
        %v502 = vmul.f32 %v478, %v210
        %v503 = vmul.f32 %v480, %v211
        %v504 = vmul.f32 %v482, %v212
        %v505 = vmul.f32 %v484, %v213
        %v506 = vmul.f32 %v486, %v214
        %v507 = vmul.f32 %v488, %v215
        %v508 = vmul.f32 %v490, %v216
        %v509 = vmul.f32 %v492, %v217
        %v510 = vmul.f32 %v494, %v218
        %511 = vst [vmem:[#allocation2] sm:$0xff] %v495
        %512 = vst [vmem:[#allocation2 + $0x8] sm:$0xff] %v496
        %513 = vst [vmem:[#allocation2 + $0x10] sm:$0xff] %v497
        %514 = vst [vmem:[#allocation2 + $0x18] sm:$0xff] %v498
        %515 = vst [vmem:[#allocation2 + $0x20] sm:$0xff] %v499
        %516 = vst [vmem:[#allocation2 + $0x28] sm:$0xff] %v500
        %517 = vst [vmem:[#allocation2 + $0x30] sm:$0xff] %v501
        %518 = vst [vmem:[#allocation2 + $0x38] sm:$0xff] %v502
        %519 = vst [vmem:[#allocation2 + $0x40] sm:$0xff] %v503
        %520 = vst [vmem:[#allocation2 + $0x48] sm:$0xff] %v504
        %521 = vst [vmem:[#allocation2 + $0x50] sm:$0xff] %v505
        %522 = vst [vmem:[#allocation2 + $0x58] sm:$0xff] %v506
        %523 = vst [vmem:[#allocation2 + $0x60] sm:$0xff] %v507
        %524 = vst [vmem:[#allocation2 + $0x68] sm:$0xff] %v508
        %525 = vst [vmem:[#allocation2 + $0x70] sm:$0xff] %v509
        %526 = vst [vmem:[#allocation2 + $0x78] sm:$0xff] %v510
        %527 = vst [vmem:[#allocation3] sm:$0x1] -1e+30
        %528 = vst [vmem:[#allocation4] sm:$0x1] 0.0
      $region36: #{gcn_forward.12} parent=31 // pred_fallthru
        _
      %v529 = vld [vmem:[%s191] sm:$0xff]
      %v530 = vld [vmem:[%s191 + $0x8] sm:$0xff]
      %v531 = vld [vmem:[%s191 + $0x10] sm:$0xff]
      %v532 = vld [vmem:[%s191 + $0x18] sm:$0xff]
      %v533 = vld [vmem:[%s191 + $0x20] sm:$0xff]
      %v534 = vld [vmem:[%s191 + $0x28] sm:$0xff]
      %v535 = vld [vmem:[%s191 + $0x30] sm:$0xff]
      %v536 = vld [vmem:[%s191 + $0x38] sm:$0xff]
      %v537 = vld [vmem:[%s191 + $0x40] sm:$0xff]
      %v538 = vld [vmem:[%s191 + $0x48] sm:$0xff]
      %v539 = vld [vmem:[%s191 + $0x50] sm:$0xff]
      %v540 = vld [vmem:[%s191 + $0x58] sm:$0xff]
      %v541 = vld [vmem:[%s191 + $0x60] sm:$0xff]
      %v542 = vld [vmem:[%s191 + $0x68] sm:$0xff]
      %v543 = vld [vmem:[%s191 + $0x70] sm:$0xff]
      %v544 = vld [vmem:[%s191 + $0x78] sm:$0xff]
      %v545 = vld [vmem:[#allocation2] sm:$0xff]
      %v546 = vld [vmem:[#allocation2 + $0x8] sm:$0xff]
      %v547 = vld [vmem:[#allocation2 + $0x10] sm:$0xff]
      %v548 = vld [vmem:[#allocation2 + $0x18] sm:$0xff]
      %v549 = vld [vmem:[#allocation2 + $0x20] sm:$0xff]
      %v550 = vld [vmem:[#allocation2 + $0x28] sm:$0xff]
      %v551 = vld [vmem:[#allocation2 + $0x30] sm:$0xff]
      %v552 = vld [vmem:[#allocation2 + $0x38] sm:$0xff]
      %v553 = vld [vmem:[#allocation2 + $0x40] sm:$0xff]
      %v554 = vld [vmem:[#allocation2 + $0x48] sm:$0xff]
      %v555 = vld [vmem:[#allocation2 + $0x50] sm:$0xff]
      %v556 = vld [vmem:[#allocation2 + $0x58] sm:$0xff]
      %v557 = vld [vmem:[#allocation2 + $0x60] sm:$0xff]
      %v558 = vld [vmem:[#allocation2 + $0x68] sm:$0xff]
      %v559 = vld [vmem:[#allocation2 + $0x70] sm:$0xff]
      %v560 = vld [vmem:[#allocation2 + $0x78] sm:$0xff]
      %v561 = vld [vmem:[%s2] sm:$0x1]
      %v563 = vlaneseq
      %v564 = vshrl.u32 %v563, 7
      %v565 = vsub.s32 0, %v564
      %v566 = vrot.slane %v561, %v565
      %568 = vmatprep.subr.mxu0 0.0
      %569 = vmatpush1.xpose.msra.mxu0 %v545
      %570 = vmatprep.subr.mxu0 0.0
      %571 = vmatpush1.xpose.msra.mxu0 %v546
      %572 = vmatprep.subr.mxu0 0.0
      %573 = vmatpush1.xpose.msra.mxu0 %v547
      %574 = vmatprep.subr.mxu0 0.0
      %575 = vmatpush1.xpose.msra.mxu0 %v548
      %576 = vmatprep.subr.mxu0 0.0
      %577 = vmatpush1.xpose.msra.mxu0 %v549
      %578 = vmatprep.subr.mxu0 0.0
      %579 = vmatpush1.xpose.msra.mxu0 %v550
      %580 = vmatprep.subr.mxu0 0.0
      %581 = vmatpush1.xpose.msra.mxu0 %v551
      %582 = vmatprep.subr.mxu0 0.0
      %583 = vmatpush1.xpose.msra.mxu0 %v552
      %584 = vmatprep.subr.mxu0 0.0
      %585 = vmatpush1.xpose.msra.mxu0 %v553
      %586 = vmatprep.subr.mxu0 0.0
      %587 = vmatpush1.xpose.msra.mxu0 %v554
      %588 = vmatprep.subr.mxu0 0.0
      %589 = vmatpush1.xpose.msra.mxu0 %v555
      %590 = vmatprep.subr.mxu0 0.0
      %591 = vmatpush1.xpose.msra.mxu0 %v556
      %592 = vmatprep.subr.mxu0 0.0
      %593 = vmatpush1.xpose.msra.mxu0 %v557
      %594 = vmatprep.subr.mxu0 0.0
      %595 = vmatpush1.xpose.msra.mxu0 %v558
      %596 = vmatprep.subr.mxu0 0.0
      %597 = vmatpush1.xpose.msra.mxu0 %v559
      %598 = vmatprep.subr.mxu0 0.0
      %599 = vmatpush1.xpose.msra.mxu0 %v560
      %600 = vmatprep.subr.mxu0 0.0
      %601 = vmatpush1.xpose.msra.mxu0 0.0
      %602 = vmatprep.subr.mxu0 0.0
      %603 = vmatpush1.xpose.msra.mxu0 0.0
      %604 = vmatprep.subr.mxu0 0.0
      %605 = vmatpush1.xpose.msra.mxu0 0.0
      %606 = vmatprep.subr.mxu0 0.0
      %607 = vmatpush1.xpose.msra.mxu0 0.0
      %608 = vmatprep.subr.mxu0 0.0
      %609 = vmatpush1.xpose.msra.mxu0 0.0
      %610 = vmatprep.subr.mxu0 0.0
      %611 = vmatpush1.xpose.msra.mxu0 0.0
      %612 = vmatprep.subr.mxu0 0.0
      %613 = vmatpush1.xpose.msra.mxu0 0.0
      %614 = vmatprep.subr.mxu0 0.0
      %615 = vmatpush1.xpose.msra.mxu0 0.0
      %616 = vmatprep.subr.mxu0 0.0
      %617 = vmatpush1.xpose.msra.mxu0 0.0
      %618 = vmatprep.subr.mxu0 0.0
      %619 = vmatpush1.xpose.msra.mxu0 0.0
      %620 = vmatprep.subr.mxu0 0.0
      %621 = vmatpush1.xpose.msra.mxu0 0.0
      %622 = vmatprep.subr.mxu0 0.0
      %623 = vmatpush1.xpose.msra.mxu0 0.0
      %624 = vmatprep.subr.mxu0 0.0
      %625 = vmatpush1.xpose.msra.mxu0 0.0
      %626 = vmatprep.subr.mxu0 0.0
      %627 = vmatpush1.xpose.msra.mxu0 0.0
      %628 = vmatprep.subr.mxu0 0.0
      %629 = vmatpush1.xpose.msra.mxu0 0.0
      %630 = vmatprep.subr.mxu0 0.0
      %631 = vmatpush1.xpose.msra.mxu0 0.0
      %632 = vmatprep.mubr.f32.mxu0 0.0
      %633 = vmatmul.mubr.f32.gmra.mrb[0].mxu0 %v529
      %v634 = vpop.f32.mrb[0].mxu0
      %v635 = vadd.f32 %v566, %v634
      %v636 = vpop.f32.mrb[0].mxu0
      %637 = vmatprep.mubr.f32.mxu0 0.0
      %638 = vmatmul.mubr.f32.gmra.mrb[0].mxu0 %v530
      %v639 = vpop.f32.mrb[0].mxu0
      %v640 = vadd.f32 %v566, %v639
      %v641 = vpop.f32.mrb[0].mxu0
      %642 = vmatprep.mubr.f32.mxu0 0.0
      %643 = vmatmul.mubr.f32.gmra.mrb[0].mxu0 %v531
      %v644 = vpop.f32.mrb[0].mxu0
      %v645 = vadd.f32 %v566, %v644
      %v646 = vpop.f32.mrb[0].mxu0
      %647 = vmatprep.mubr.f32.mxu0 0.0
      %648 = vmatmul.mubr.f32.gmra.mrb[0].mxu0 %v532
      %v649 = vpop.f32.mrb[0].mxu0
      %v650 = vadd.f32 %v566, %v649
      %v651 = vpop.f32.mrb[0].mxu0
      %652 = vmatprep.mubr.f32.mxu0 0.0
      %653 = vmatmul.mubr.f32.gmra.mrb[0].mxu0 %v533
      %v654 = vpop.f32.mrb[0].mxu0
      %v655 = vadd.f32 %v566, %v654
      %v656 = vpop.f32.mrb[0].mxu0
      %657 = vmatprep.mubr.f32.mxu0 0.0
      %658 = vmatmul.mubr.f32.gmra.mrb[0].mxu0 %v534
      %v659 = vpop.f32.mrb[0].mxu0
      %v660 = vadd.f32 %v566, %v659
      %v661 = vpop.f32.mrb[0].mxu0
      %662 = vmatprep.mubr.f32.mxu0 0.0
      %663 = vmatmul.mubr.f32.gmra.mrb[0].mxu0 %v535
      %v664 = vpop.f32.mrb[0].mxu0
      %v665 = vadd.f32 %v566, %v664
      %v666 = vpop.f32.mrb[0].mxu0
      %667 = vmatprep.mubr.f32.mxu0 0.0
      %668 = vmatmul.mubr.f32.gmra.mrb[0].mxu0 %v536
      %v669 = vpop.f32.mrb[0].mxu0
      %v670 = vadd.f32 %v566, %v669
      %v671 = vpop.f32.mrb[0].mxu0
      %672 = vmatprep.mubr.f32.mxu0 0.0
      %673 = vmatmul.mubr.f32.gmra.mrb[0].mxu0 %v537
      %v674 = vpop.f32.mrb[0].mxu0
      %v675 = vadd.f32 %v566, %v674
      %v676 = vpop.f32.mrb[0].mxu0
      %677 = vmatprep.mubr.f32.mxu0 0.0
      %678 = vmatmul.mubr.f32.gmra.mrb[0].mxu0 %v538
      %v679 = vpop.f32.mrb[0].mxu0
      %v680 = vadd.f32 %v566, %v679
      %v681 = vpop.f32.mrb[0].mxu0
      %682 = vmatprep.mubr.f32.mxu0 0.0
      %683 = vmatmul.mubr.f32.gmra.mrb[0].mxu0 %v539
      %v684 = vpop.f32.mrb[0].mxu0
      %v685 = vadd.f32 %v566, %v684
      %v686 = vpop.f32.mrb[0].mxu0
      %687 = vmatprep.mubr.f32.mxu0 0.0
      %688 = vmatmul.mubr.f32.gmra.mrb[0].mxu0 %v540
      %v689 = vpop.f32.mrb[0].mxu0
      %v690 = vadd.f32 %v566, %v689
      %v691 = vpop.f32.mrb[0].mxu0
      %692 = vmatprep.mubr.f32.mxu0 0.0
      %693 = vmatmul.mubr.f32.gmra.mrb[0].mxu0 %v541
      %v694 = vpop.f32.mrb[0].mxu0
      %v695 = vadd.f32 %v566, %v694
      %v696 = vpop.f32.mrb[0].mxu0
      %697 = vmatprep.mubr.f32.mxu0 0.0
      %698 = vmatmul.mubr.f32.gmra.mrb[0].mxu0 %v542
      %v699 = vpop.f32.mrb[0].mxu0
      %v700 = vadd.f32 %v566, %v699
      %v701 = vpop.f32.mrb[0].mxu0
      %702 = vmatprep.mubr.f32.mxu0 0.0
      %703 = vmatmul.mubr.f32.gmra.mrb[0].mxu0 %v543
      %v704 = vpop.f32.mrb[0].mxu0
      %v705 = vadd.f32 %v566, %v704
      %v706 = vpop.f32.mrb[0].mxu0
      %707 = vmatprep.mubr.f32.mxu0 0.0
      %708 = vmatmul.mubr.f32.gmra.mrb[0].mxu0 %v544
      %v709 = vpop.f32.mrb[0].mxu0
      %v710 = vadd.f32 %v566, %v709
      %v711 = vpop.f32.mrb[0].mxu0
      %712 = vdwg.mxu0
      %s713 = smul.u32 %s16, 128
      %v714 = vlaneseq
      %v715 = vshrl.u32 %v714, 7
      %v716 = vadd.s32 %v715, 8
      %v717 = vadd.s32 %v715, 16
      %v718 = vadd.s32 %v715, 24
      %v719 = vadd.s32 %v715, 32
      %v720 = vadd.s32 %v715, 40
      %v721 = vadd.s32 %v715, 48
      %v722 = vadd.s32 %v715, 56
      %v723 = vadd.s32 %v715, 64
      %v724 = vadd.s32 %v715, 72
      %v725 = vadd.s32 %v715, 80
      %v726 = vadd.s32 %v715, 88
      %v727 = vadd.s32 %v715, 96
      %v728 = vadd.s32 %v715, 104
      %v729 = vadd.s32 %v715, 112
      %v730 = vadd.s32 %v715, 120
      %v731 = vstv %s713
      %v732 = vadd.s32 %v731, %v715
      %v733 = vadd.s32 %v731, %v716
      %v734 = vadd.s32 %v731, %v717
      %v735 = vadd.s32 %v731, %v718
      %v736 = vadd.s32 %v731, %v719
      %v737 = vadd.s32 %v731, %v720
      %v738 = vadd.s32 %v731, %v721
      %v739 = vadd.s32 %v731, %v722
      %v740 = vadd.s32 %v731, %v723
      %v741 = vadd.s32 %v731, %v724
      %v742 = vadd.s32 %v731, %v725
      %v743 = vadd.s32 %v731, %v726
      %v744 = vadd.s32 %v731, %v727
      %v745 = vadd.s32 %v731, %v728
      %v746 = vadd.s32 %v731, %v729
      %v747 = vadd.s32 %v731, %v730
      %vm748 = vcmp.lt.s32.totalorder %v732, 200
      %vm749 = vcmp.lt.s32.totalorder %v733, 200
      %vm750 = vcmp.lt.s32.totalorder %v734, 200
      %vm751 = vcmp.lt.s32.totalorder %v735, 200
      %vm752 = vcmp.lt.s32.totalorder %v736, 200
      %vm753 = vcmp.lt.s32.totalorder %v737, 200
      %vm754 = vcmp.lt.s32.totalorder %v738, 200
      %vm755 = vcmp.lt.s32.totalorder %v739, 200
      %vm756 = vcmp.lt.s32.totalorder %v740, 200
      %vm757 = vcmp.lt.s32.totalorder %v741, 200
      %vm758 = vcmp.lt.s32.totalorder %v742, 200
      %vm759 = vcmp.lt.s32.totalorder %v743, 200
      %vm760 = vcmp.lt.s32.totalorder %v744, 200
      %vm761 = vcmp.lt.s32.totalorder %v745, 200
      %vm762 = vcmp.lt.s32.totalorder %v746, 200
      %vm763 = vcmp.lt.s32.totalorder %v747, 200
      %v764 = vsel %vm748, %v635, -1e+30
      %v765 = vsel %vm749, %v640, -1e+30
      %v766 = vsel %vm750, %v645, -1e+30
      %v767 = vsel %vm751, %v650, -1e+30
      %v768 = vsel %vm752, %v655, -1e+30
      %v769 = vsel %vm753, %v660, -1e+30
      %v770 = vsel %vm754, %v665, -1e+30
      %v771 = vsel %vm755, %v670, -1e+30
      %v772 = vsel %vm756, %v675, -1e+30
      %v773 = vsel %vm757, %v680, -1e+30
      %v774 = vsel %vm758, %v685, -1e+30
      %v775 = vsel %vm759, %v690, -1e+30
      %v776 = vsel %vm760, %v695, -1e+30
      %v777 = vsel %vm761, %v700, -1e+30
      %v778 = vsel %vm762, %v705, -1e+30
      %v779 = vsel %vm763, %v710, -1e+30
      %780 = vst [vmem:[%s197] sm:$0xff] %v764
      %781 = vst [vmem:[%s197 + $0x8] sm:$0xff] %v765
      %782 = vst [vmem:[%s197 + $0x10] sm:$0xff] %v766
      %783 = vst [vmem:[%s197 + $0x18] sm:$0xff] %v767
      %784 = vst [vmem:[%s197 + $0x20] sm:$0xff] %v768
      %785 = vst [vmem:[%s197 + $0x28] sm:$0xff] %v769
      %786 = vst [vmem:[%s197 + $0x30] sm:$0xff] %v770
      %787 = vst [vmem:[%s197 + $0x38] sm:$0xff] %v771
      %788 = vst [vmem:[%s197 + $0x40] sm:$0xff] %v772
      %789 = vst [vmem:[%s197 + $0x48] sm:$0xff] %v773
      %790 = vst [vmem:[%s197 + $0x50] sm:$0xff] %v774
      %791 = vst [vmem:[%s197 + $0x58] sm:$0xff] %v775
      %792 = vst [vmem:[%s197 + $0x60] sm:$0xff] %v776
      %793 = vst [vmem:[%s197 + $0x68] sm:$0xff] %v777
      %794 = vst [vmem:[%s197 + $0x70] sm:$0xff] %v778
      %795 = vst [vmem:[%s197 + $0x78] sm:$0xff] %v779
      %v796 = vmax.f32 %v764, %v768
      %v797 = vmax.f32 %v765, %v769
      %v798 = vmax.f32 %v766, %v770
      %v799 = vmax.f32 %v767, %v771
      %v800 = vmax.f32 %v796, %v772
      %v801 = vmax.f32 %v797, %v773
      %v802 = vmax.f32 %v798, %v774
      %v803 = vmax.f32 %v799, %v775
      %v804 = vmax.f32 %v800, %v776
      %v805 = vmax.f32 %v801, %v777
      %v806 = vmax.f32 %v802, %v778
      %v807 = vmax.f32 %v803, %v779
      %v808 = vmax.f32 %v804, %v805
      %v809 = vmax.f32 %v806, %v807
      %v810 = vmax.f32 %v808, %v809
      %v811 = vrot.slane %v810, 4
      %v812 = vmax.f32 %v810, %v811
      %v813 = vrot.slane %v812, 2
      %v814 = vmax.f32 %v812, %v813
      %v815 = vrot.slane %v814, 1
      %v816 = vmax.f32 %v814, %v815
      %v817 = vld [vmem:[#allocation3] sm:$0x1]
      %v818 = vmax.f32 %v817, %v816
      %v819 = vld [vmem:[#allocation4] sm:$0x1]
      %v820 = vsub.f32 %v817, %v818
      %v821 = vmul.f32 %v820, 1.442695
      %v822 = vpow.pop %v821
      %v823 = vmul.f32 %v819, %v822
      %v825 = vlaneseq
      %v826 = vshrl.u32 %v825, 7
      %v827 = vsub.s32 0, %v826
      %v828 = vrot.slane %v818, %v827
      %v830 = vsub.f32 %v764, %v828
      %v831 = vsub.f32 %v765, %v828
      %v832 = vsub.f32 %v766, %v828
      %v833 = vsub.f32 %v767, %v828
      %v834 = vsub.f32 %v768, %v828
      %v835 = vsub.f32 %v769, %v828
      %v836 = vsub.f32 %v770, %v828
      %v837 = vsub.f32 %v771, %v828
      %v838 = vsub.f32 %v772, %v828
      %v839 = vsub.f32 %v773, %v828
      %v840 = vsub.f32 %v774, %v828
      %v841 = vsub.f32 %v775, %v828
      %v842 = vsub.f32 %v776, %v828
      %v843 = vsub.f32 %v777, %v828
      %v844 = vsub.f32 %v778, %v828
      %v845 = vsub.f32 %v779, %v828
      %v846 = vmul.f32 %v830, 1.442695
      %v847 = vpow.pop %v846
      %v848 = vmul.f32 %v831, 1.442695
      %v849 = vpow.pop %v848
      %v850 = vmul.f32 %v832, 1.442695
      %v851 = vpow.pop %v850
      %v852 = vmul.f32 %v833, 1.442695
      %v853 = vpow.pop %v852
      %v854 = vmul.f32 %v834, 1.442695
      %v855 = vpow.pop %v854
      %v856 = vmul.f32 %v835, 1.442695
      %v857 = vpow.pop %v856
      %v858 = vmul.f32 %v836, 1.442695
      %v859 = vpow.pop %v858
      %v860 = vmul.f32 %v837, 1.442695
      %v861 = vpow.pop %v860
      %v862 = vmul.f32 %v838, 1.442695
      %v863 = vpow.pop %v862
      %v864 = vmul.f32 %v839, 1.442695
      %v865 = vpow.pop %v864
      %v866 = vmul.f32 %v840, 1.442695
      %v867 = vpow.pop %v866
      %v868 = vmul.f32 %v841, 1.442695
      %v869 = vpow.pop %v868
      %v870 = vmul.f32 %v842, 1.442695
      %v871 = vpow.pop %v870
      %v872 = vmul.f32 %v843, 1.442695
      %v873 = vpow.pop %v872
      %v874 = vmul.f32 %v844, 1.442695
      %v875 = vpow.pop %v874
      %v876 = vmul.f32 %v845, 1.442695
      %v877 = vpow.pop %v876
      %v878 = vadd.f32 %v847, %v849
      %v879 = vadd.f32 %v878, %v851
      %v880 = vadd.f32 %v879, %v853
      %v881 = vadd.f32 %v880, %v855
      %v882 = vadd.f32 %v881, %v857
      %v883 = vadd.f32 %v882, %v859
      %v884 = vadd.f32 %v883, %v861
      %v885 = vadd.f32 %v884, %v863
      %v886 = vadd.f32 %v885, %v865
      %v887 = vadd.f32 %v886, %v867
      %v888 = vadd.f32 %v887, %v869
      %v889 = vadd.f32 %v888, %v871
      %v890 = vadd.f32 %v889, %v873
      %v891 = vadd.f32 %v890, %v875
      %v892 = vadd.f32 %v891, %v877
      %v893 = vrot.slane %v892, 4
      %v894 = vadd.f32 %v892, %v893
      %v895 = vrot.slane %v894, 2
      %v896 = vadd.f32 %v894, %v895
      %v897 = vrot.slane %v896, 1
      %v898 = vadd.f32 %v896, %v897
      %v899 = vadd.f32 %v823, %v898
      %900 = vst [vmem:[#allocation4] sm:$0x1] %v899
      %901 = vst [vmem:[#allocation3] sm:$0x1] %v818
      %p902 = scmp.eq.s32.totalorder %s16, 1
      // Predicated region
      $region37: #{gcn_forward.12} parent=31 // pred_check
        %p903 = pneg %p902
      $region38: #{gcn_forward.12} parent=31 // pred_check_branch
        %905 = sbr.rel (%p903) target = $region40
      $region39: #{gcn_forward.12} parent=31 // pred_region
        %v906 = vld [vmem:[#allocation3] sm:$0x1]
        %v907 = vld [vmem:[#allocation4] sm:$0x1]
        %v908 = vlog2.pop %v907
        %v909 = vmul.f32 %v908, 0.6931472
        %v910 = vadd.f32 %v906, %v909
        %911 = vst [vmem:[%s4] sm:$0x1] %v910
      $region40: #{gcn_forward.12} parent=31 // pred_fallthru
        _
      %s912 = smul.u32 16, %s16
      %p913 = scmp.lt.s32.totalorder %s912, 31
      %s914 = scalar_select %p913, %s912, 31
      %s915 = smul.addr %s914, 8
      %s916 = scalar_lea.vmem %s3, %s915
      // Predicated region
      $region41: #{gcn_forward.12} parent=31 // pred_check
        %p917 = pneg %p102
      $region42: #{gcn_forward.12} parent=31 // pred_check_branch
        %919 = sbr.rel (%p917) target = $region44
      $region43: #{gcn_forward.12} parent=31 // pred_region
        %s920 = smul.u32 16, %s16
      $region44: #{gcn_forward.12} parent=31 // pred_fallthru
        _
      // Predicated region
      $region45: #{gcn_forward.12} parent=31 // pred_check
        %p921 = pneg %p123
      $region46: #{gcn_forward.12} parent=31 // pred_check_branch
        %923 = sbr.rel (%p921) target = $region48
      $region47: #{gcn_forward.12} parent=31 // pred_region
        _
      $region48: #{gcn_forward.12} parent=31 // pred_fallthru
        _
      // Predicated region
      $region49: #{gcn_forward.12} parent=31 // pred_check
        %p924 = pneg %p123
      $region50: #{gcn_forward.12} parent=31 // pred_check_branch
        %926 = sbr.rel (%p924) target = $region52
      $region51: #{gcn_forward.12} parent=31 // pred_region
        _
      $region52: #{gcn_forward.12} parent=31 // pred_fallthru
        _
    $region32: #{gcn_forward.12} parent=5 // pred_fallthru
      _
    %p927 = scmp.le.s32.totalorder 2, %s11
    // Predicated region
    $region53: #{gcn_forward.12} parent=5 // pred_check
      %p928 = pneg %p927
    $region54: #{gcn_forward.12} parent=5 // pred_check_branch
      %930 = sbr.rel (%p928) target = $region56
    $region55: #{gcn_forward.12} parent=5 // pred_region
      %s931 = ssub.s32 %s11, 2
      // Predicated region
      $region57: #{gcn_forward.12} parent=55 // pred_check
        %p932 = pneg %p108
      $region58: #{gcn_forward.12} parent=55 // pred_check_branch
        %934 = sbr.rel (%p932) target = $region60
      $region59: #{gcn_forward.12} parent=55 // pred_region
        %s935 = smul.u32 16, %s17
        %p936 = scmp.lt.s32.totalorder %s935, 31
        %s937 = scalar_select %p936, %s935, 31
        %s938 = smul.addr %s937, 8
        %s939 = scalar_lea.vmem %s3, %s938
      $region60: #{gcn_forward.12} parent=55 // pred_fallthru
        _
    $region56: #{gcn_forward.12} parent=5 // pred_fallthru
      _
  $region6: #{gcn_forward.12} parent=0 // loop_footer
    %s15 = sadd.s32 1, %s11
  $region7: #{gcn_forward.12} parent=0 // loop_footer_branch
    %10 = sbr.rel target = $region3
  $region8: #{gcn_forward.12} parent=0 // loop_exit
    _

</llo_original>
